<compile_context>
chip_gen: v7x
topology: tpu7x:2x2x1
jax: 0.10.0
libtpu: 0.0.40
codegen_flags: <defaults>
</compile_context>

<pallas_src>
import functools

import jax
import jax.numpy as jnp
from jax.experimental import pallas as pl
from jax.experimental.pallas import tpu as pltpu


def _round_up(x, m):
    return -(-x // m) * m


def _elementwise_dtype():
    """bf16 elementwise on bf16-VPU chips (v6e/v7x), f32 on v5e (no bf16 VPU)."""
    try:
        kind = jax.devices()[0].device_kind.lower()
    except Exception:
        return jnp.float32
    if "v5" in kind:
        return jnp.float32
    return jnp.bfloat16


def _padded_bytes(shape, dtype):
    """VMEM footprint of a block: last dim padded to 128 lanes, second-to-last
    to the sublane tile (8 for 32-bit, 16 for 16-bit)."""
    itemsize = jnp.dtype(dtype).itemsize
    shape = tuple(shape)
    if len(shape) == 1:
        shape = (1,) + shape
    lead = 1
    for d in shape[:-2]:
        lead *= d
    sub, lane = shape[-2], shape[-1]
    packing = max(1, 4 // itemsize)
    sub_p = _round_up(max(sub, 1), 8 * packing)
    lane_p = _round_up(max(lane, 1), 128)
    return lead * sub_p * lane_p * itemsize


def _vmem_estimate_bytes(bt, tn, params):
    f32, bf16 = jnp.float32, jnp.bfloat16
    est = 0
    # Input block: (., 3) pads to 128 lanes -> ~42x logical size; double-buffered.
    est += 2 * _padded_bytes((bt, tn, 3), f32)
    # Output block (double-buffered) + running-max scratch.
    est += 2 * _padded_bytes((bt, 128), f32)
    est += _padded_bytes((bt, 256), f32)
    # Resident weights / biases (constant index_map still double-buffers).
    est += sum(2 * _padded_bytes(p.shape, p.dtype) for p in params)
    # Live per-step activations (conv1/conv2/conv3 outputs, f32 accumulators).
    est += _padded_bytes((bt * tn, 64), bf16)
    est += _padded_bytes((bt * tn, 128), f32)
    est += _padded_bytes((bt * tn, 128), bf16)
    est += _padded_bytes((bt * tn, 256), f32)
    return est


def stn3d_kernel(x_ref,
                 w1_ref, b1_ref, w2_ref, b2_ref, w3_ref, b3_ref,
                 fw1_ref, fb1_ref, fw2_ref, fb2_ref, fw3_ref, fb3_ref,
                 out_ref, acc_ref, *, bt, tn, elem_dtype):
    f32 = jnp.float32
    bf16 = jnp.bfloat16
    nj = pl.program_id(1)

    @pl.when(nj == 0)
    def _():
        acc_ref[...] = jnp.full((bt, 256), -jnp.inf, f32)

    x = x_ref[...].reshape(bt * tn, 3)          # (bt*tn, 3) f32, channels-last
    w1 = w1_ref[...]                            # (3, 64) f32

    # conv1 + folded BN1 + ReLU: K=3 -> three VPU FMAs (outer products), f32.
    h = (x[:, 0:1] * w1[0:1, :]
         + x[:, 1:2] * w1[1:2, :]
         + x[:, 2:3] * w1[2:3, :]
         + b1_ref[...])
    h = jnp.maximum(h, 0.0).astype(bf16)                             # (bt*tn, 64)

    # conv2 + folded BN2 + ReLU (bf16 MXU matmul, f32 accumulate; elementwise in
    # elem_dtype: bf16 on v6e/v7x, f32 on v5e).
    d = jnp.dot(h, w2_ref[...], preferred_element_type=f32)
    h = jnp.maximum(d.astype(elem_dtype) + b2_ref[...].astype(elem_dtype),
                    0).astype(bf16)                                  # (bt*tn, 128)

    # conv3: bias + ReLU deferred until after the max-pool (exact transform).
    d3 = jnp.dot(h, w3_ref[...], preferred_element_type=f32)         # (bt*tn, 256)

    # Running max over the point (N) axis.
    acc_ref[...] = jnp.maximum(acc_ref[...],
                               jnp.max(d3.reshape(bt, tn, 256), axis=1))

    @pl.when(nj == pl.num_programs(1) - 1)
    def _():
        # Deferred conv3 bias (folded BN3) + ReLU on the pooled (bt, 256) only.
        g = jnp.maximum(acc_ref[...] + b3_ref[...], 0.0).astype(bf16)
        # fc1 + folded BN4 + ReLU.
        f = jnp.dot(g, fw1_ref[...], preferred_element_type=f32) + fb1_ref[...]
        f = jnp.maximum(f, 0.0).astype(bf16)                         # (bt, 128)
        # fc2 + folded BN5 + ReLU.
        f = jnp.dot(f, fw2_ref[...], preferred_element_type=f32) + fb2_ref[...]
        f = jnp.maximum(f, 0.0).astype(bf16)                         # (bt, 64)
        # fc3 (zero-padded to 128 cols) + bias with the 3x3 identity folded in.
        f = jnp.dot(f, fw3_ref[...], preferred_element_type=f32) + fb3_ref[...]
        out_ref[...] = f                                             # (bt, 128) lane-dense


def stn3d_forward(x_ncw, params, block_b=None, tile_n=None,
                  vmem_target_bytes=24 * 1024 * 1024):
    """x_ncw: (B, 3, N) float32 (PyTorch layout). Returns (B, 3, 3) float32."""
    B, C, N = x_ncw.shape
    assert C == 3
    elem_dtype = _elementwise_dtype()

    # ---- tile selection (VMEM-budget aware, incl. the 42x lane-padded input) ----
    n8 = _round_up(N, 8)
    tn = min(_round_up(tile_n if tile_n is not None else 512, 8), n8)
    bb = block_b if block_b is not None else 32
    bt = B if B <= bb else _round_up(bb, 8)
    while _vmem_estimate_bytes(bt, tn, params) > vmem_target_bytes:
        if tn > 128:
            tn //= 2
        elif bt > 8 and bt % 8 == 0:
            bt = bt // 2 if (bt // 2) % 8 == 0 else 8
        else:
            break

    bp = _round_up(B, bt)
    n_pad = _round_up(N, tn)
    grid = (bp // bt, n_pad // tn)

    # Channels-last (B, N, 3) — one small host-side HBM pass; keeps channels on
    # the lane axis in-kernel so no in-kernel transposes are needed.
    x = jnp.transpose(x_ncw, (0, 2, 1))
    if bp != B:  # zero-pad extra batch rows (sliced off at the end)
        x = jnp.concatenate([x, jnp.zeros((bp - B, N, 3), x.dtype)], axis=0)
    if n_pad != N:  # edge-replicate points so the max over N is unchanged
        last = jnp.broadcast_to(x[:, N - 1:N, :], (bp, n_pad - N, 3))
        x = jnp.concatenate([x, last], axis=1)

    def wspec(p):
        return pl.BlockSpec(p.shape, lambda i, j: (0, 0))  # resident across grid

    est = _vmem_estimate_bytes(bt, tn, params)
    vmem_limit = int(min(max(int(est * 1.5), 32 * 1024 * 1024), 48 * 1024 * 1024))

    out = pl.pallas_call(
        functools.partial(stn3d_kernel, bt=bt, tn=tn, elem_dtype=elem_dtype),
        out_shape=jax.ShapeDtypeStruct((bp, 128), jnp.float32),
        grid_spec=pltpu.PrefetchScalarGridSpec(
            num_scalar_prefetch=0,
            grid=grid,
            in_specs=[pl.BlockSpec((bt, tn, 3), lambda i, j: (i, j, 0))]
                     + [wspec(p) for p in params],
            out_specs=pl.BlockSpec((bt, 128), lambda i, j: (i, 0)),
            scratch_shapes=[pltpu.VMEM((bt, 256), jnp.float32)],
        ),
        compiler_params=pltpu.CompilerParams(
            dimension_semantics=("parallel", "arbitrary"),
            vmem_limit_bytes=vmem_limit),
    )(x, *params)

    return out[:B, :9].reshape(B, 3, 3)


def make_params(key):
    """Deterministic parameter init + eval-mode BN folding + identity/padding fold.

    Shapes follow the module __init__:
      conv1: 3->64, conv2: 64->128, conv3: 128->256
      fc1: 256->128, fc2: 128->64, fc3: 64->9 (padded to 64->128)
      bn1..bn5 over 64, 128, 256, 128, 64 channels.
    """
    ks = jax.random.split(key, 11)

    def lin(k, cin, cout):
        kw, kb = jax.random.split(k)
        w = jax.random.normal(kw, (cin, cout), jnp.float32) * 0.1
        b = jax.random.normal(kb, (1, cout), jnp.float32) * 0.1
        return w, b

    def bn(k, c, eps=1e-5):
        kg, kb, km, kv = jax.random.split(k, 4)
        gamma = 1.0 + 0.1 * jax.random.normal(kg, (c,), jnp.float32)
        beta = 0.1 * jax.random.normal(kb, (c,), jnp.float32)
        mean = 0.1 * jax.random.normal(km, (c,), jnp.float32)
        var = 1.0 + 0.1 * jax.random.uniform(kv, (c,), jnp.float32)
        scale = gamma / jnp.sqrt(var + eps)
        shift = beta - mean * scale
        return scale, shift

    def fold(w, b, scale, shift):
        return w * scale[None, :], b * scale[None, :] + shift[None, :]

    w1, b1 = fold(*lin(ks[0], 3, 64), *bn(ks[1], 64))       # conv1 stays f32 (VPU path)
    w2, b2 = fold(*lin(ks[2], 64, 128), *bn(ks[3], 128))
    w3, b3 = fold(*lin(ks[4], 128, 256), *bn(ks[5], 256))
    fw1, fb1 = fold(*lin(ks[6], 256, 128), *bn(ks[7], 128))
    fw2, fb2 = fold(*lin(ks[8], 128, 64), *bn(ks[9], 64))
    fw3, fb3 = lin(ks[10], 64, 9)

    # fc3: zero-pad to 128 output columns (lane-dense matmul + lane-dense store)
    # and fold the flattened 3x3 identity (ones at columns 0, 4, 8) into the bias.
    fw3p = jnp.zeros((64, 128), jnp.float32).at[:, :9].set(fw3)
    fb3p = jnp.zeros((1, 128), jnp.float32).at[:, :9].set(fb3)
    fb3p = fb3p.at[0, jnp.array([0, 4, 8])].add(1.0)

    bf16 = jnp.bfloat16
    return (w1, b1,                          # conv1 (f32, computed on VPU)
            w2.astype(bf16), b2,             # conv2
            w3.astype(bf16), b3,             # conv3
            fw1.astype(bf16), fb1,           # fc1
            fw2.astype(bf16), fb2,           # fc2
            fw3p.astype(bf16), fb3p)         # fc3 (padded, identity folded)


def stn3d_reference(x_ncw, params, elem_dtype=jnp.float32):
    """Plain-JAX reference of the same (BN-folded, bf16-matmul) forward pass."""
    (w1, b1, w2, b2, w3, b3, fw1, fb1, fw2, fb2, fw3, fb3) = params
    B, _, N = x_ncw.shape
    bf16, f32 = jnp.bfloat16, jnp.float32
    x = jnp.transpose(x_ncw, (0, 2, 1)).reshape(B * N, 3)
    h = (x[:, 0:1] * w1[0:1, :] + x[:, 1:2] * w1[1:2, :]
         + x[:, 2:3] * w1[2:3, :] + b1)
    h = jnp.maximum(h, 0.0).astype(bf16)
    d = jnp.dot(h, w2, preferred_element_type=f32)
    h = jnp.maximum(d.astype(elem_dtype) + b2.astype(elem_dtype), 0).astype(bf16)
    d3 = jnp.dot(h, w3, preferred_element_type=f32)
    g = jnp.max(d3.reshape(B, N, 256), axis=1)
    g = jnp.maximum(g + b3, 0.0).astype(bf16)
    f = jnp.maximum(jnp.dot(g, fw1, preferred_element_type=f32) + fb1, 0.0).astype(bf16)
    f = jnp.maximum(jnp.dot(f, fw2, preferred_element_type=f32) + fb2, 0.0).astype(bf16)
    f = jnp.dot(f, fw3, preferred_element_type=f32) + fb3
    return f[:, :9].reshape(B, 3, 3)


if __name__ == "__main__":
    # Small-but-representative shapes: 16 point clouds x 256 points x 3 coords,
    # tiled as (batch_block=8, tile_n=128) -> a 2x2 grid exercising both the
    # parallel batch axis and the running-max N accumulator.
    B, N = 16, 256
    key = jax.random.PRNGKey(0)
    kx, kp = jax.random.split(key)
    x = jax.random.normal(kx, (B, 3, N), jnp.float32)    # PyTorch NCW layout
    params = make_params(kp)

    out = jax.block_until_ready(stn3d_forward(x, params, block_b=8, tile_n=128))
    assert out.shape == (B, 3, 3), out.shape

    ref = stn3d_reference(x, params, elem_dtype=_elementwise_dtype())
    max_err = float(jnp.max(jnp.abs(out - ref)))
    assert jnp.allclose(out, ref, atol=2e-2, rtol=2e-2), max_err

    print("KERNEL_OK")
</pallas_src>

<mosaic_0001>
module attributes {stable_mosaic.version = 11 : i64} {
  func.func @stn3d_kernel(%arg0: i32, %arg1: i32, %arg2: memref<8x128x3xf32, #tpu.memory_space<vmem>>, %arg3: memref<3x64xf32, #tpu.memory_space<vmem>>, %arg4: memref<1x64xf32, #tpu.memory_space<vmem>>, %arg5: memref<64x128xbf16, #tpu.memory_space<vmem>>, %arg6: memref<1x128xf32, #tpu.memory_space<vmem>>, %arg7: memref<128x256xbf16, #tpu.memory_space<vmem>>, %arg8: memref<1x256xf32, #tpu.memory_space<vmem>>, %arg9: memref<256x128xbf16, #tpu.memory_space<vmem>>, %arg10: memref<1x128xf32, #tpu.memory_space<vmem>>, %arg11: memref<128x64xbf16, #tpu.memory_space<vmem>>, %arg12: memref<1x64xf32, #tpu.memory_space<vmem>>, %arg13: memref<64x128xbf16, #tpu.memory_space<vmem>>, %arg14: memref<1x128xf32, #tpu.memory_space<vmem>>, %arg15: memref<8x128xf32, #tpu.memory_space<vmem>>, %arg16: memref<8x256xf32, #tpu.memory_space<vmem>>) attributes {dimension_semantics = [#tpu.dimension_semantics<parallel>, #tpu.dimension_semantics<arbitrary>], iteration_bounds = array<i64: 2, 2>, scalar_prefetch = 0 : i64, scratch_operands = 1 : i64, tpu.core_type = #tpu.core_type<tc>, window_params = [{transform_indices = @transform_0, window_bounds = array<i64: 8, 128, 3>}, {pipeline_mode = #tpu.pipeline_mode<synchronous>, transform_indices = @transform_1, window_bounds = array<i64: 3, 64>}, {pipeline_mode = #tpu.pipeline_mode<synchronous>, transform_indices = @transform_2, window_bounds = array<i64: 1, 64>}, {pipeline_mode = #tpu.pipeline_mode<synchronous>, transform_indices = @transform_3, window_bounds = array<i64: 64, 128>}, {pipeline_mode = #tpu.pipeline_mode<synchronous>, transform_indices = @transform_4, window_bounds = array<i64: 1, 128>}, {pipeline_mode = #tpu.pipeline_mode<synchronous>, transform_indices = @transform_5, window_bounds = array<i64: 128, 256>}, {pipeline_mode = #tpu.pipeline_mode<synchronous>, transform_indices = @transform_6, window_bounds = array<i64: 1, 256>}, {pipeline_mode = #tpu.pipeline_mode<synchronous>, transform_indices = @transform_7, window_bounds = array<i64: 256, 128>}, {pipeline_mode = #tpu.pipeline_mode<synchronous>, transform_indices = @transform_8, window_bounds = array<i64: 1, 128>}, {pipeline_mode = #tpu.pipeline_mode<synchronous>, transform_indices = @transform_9, window_bounds = array<i64: 128, 64>}, {pipeline_mode = #tpu.pipeline_mode<synchronous>, transform_indices = @transform_10, window_bounds = array<i64: 1, 64>}, {pipeline_mode = #tpu.pipeline_mode<synchronous>, transform_indices = @transform_11, window_bounds = array<i64: 64, 128>}, {pipeline_mode = #tpu.pipeline_mode<synchronous>, transform_indices = @transform_12, window_bounds = array<i64: 1, 128>}, {transform_indices = @transform_13, window_bounds = array<i64: 8, 128>}]} {
    %c0_i32 = arith.constant 0 : i32
    %0 = arith.cmpi eq, %arg1, %c0_i32 : i32
    %1 = arith.extui %0 : i1 to i32
    %c0_i32_0 = arith.constant 0 : i32
    %2 = arith.cmpi ne, %1, %c0_i32_0 : i32
    scf.if %2 {
      %cst_22 = arith.constant 0xFF800000 : f32
      %48 = vector.broadcast %cst_22 : f32 to vector<8x256xf32>
      %c0_23 = arith.constant 0 : index
      %c0_24 = arith.constant 0 : index
      %49 = vector.load %arg16[%c0_23, %c0_24] : memref<8x256xf32, #tpu.memory_space<vmem>>, vector<8x256xf32>
      tpu.vector_store %arg16[%c0_23, %c0_24], %48 {strides = array<i32>} : memref<8x256xf32, #tpu.memory_space<vmem>>, vector<8x256xf32>,
    } else {
    }
    %c0 = arith.constant 0 : index
    %c0_1 = arith.constant 0 : index
    %c0_2 = arith.constant 0 : index
    %3 = vector.load %arg2[%c0, %c0_1, %c0_2] : memref<8x128x3xf32, #tpu.memory_space<vmem>>, vector<8x128x3xf32>
    %4 = vector.shape_cast %3 : vector<8x128x3xf32> to vector<1024x3xf32>
    %c0_3 = arith.constant 0 : index
    %c0_4 = arith.constant 0 : index
    %5 = vector.load %arg3[%c0_3, %c0_4] : memref<3x64xf32, #tpu.memory_space<vmem>>, vector<3x64xf32>
    %6 = vector.extract_strided_slice %4 {offsets = [0, 0], sizes = [1024, 1], strides = [1, 1]} : vector<1024x3xf32> to vector<1024x1xf32>
    %7 = vector.extract_strided_slice %5 {offsets = [0, 0], sizes = [1, 64], strides = [1, 1]} : vector<3x64xf32> to vector<1x64xf32>
    %8 = vector.broadcast %6 : vector<1024x1xf32> to vector<1024x64xf32>
    %9 = vector.broadcast %7 : vector<1x64xf32> to vector<1024x64xf32>
    %10 = arith.mulf %8, %9 : vector<1024x64xf32>
    %11 = vector.extract_strided_slice %4 {offsets = [0, 1], sizes = [1024, 1], strides = [1, 1]} : vector<1024x3xf32> to vector<1024x1xf32>
    %12 = vector.extract_strided_slice %5 {offsets = [1, 0], sizes = [1, 64], strides = [1, 1]} : vector<3x64xf32> to vector<1x64xf32>
    %13 = vector.broadcast %11 : vector<1024x1xf32> to vector<1024x64xf32>
    %14 = vector.broadcast %12 : vector<1x64xf32> to vector<1024x64xf32>
    %15 = arith.mulf %13, %14 : vector<1024x64xf32>
    %16 = arith.addf %10, %15 : vector<1024x64xf32>
    %17 = vector.extract_strided_slice %4 {offsets = [0, 2], sizes = [1024, 1], strides = [1, 1]} : vector<1024x3xf32> to vector<1024x1xf32>
    %18 = vector.extract_strided_slice %5 {offsets = [2, 0], sizes = [1, 64], strides = [1, 1]} : vector<3x64xf32> to vector<1x64xf32>
    %19 = vector.broadcast %17 : vector<1024x1xf32> to vector<1024x64xf32>
    %20 = vector.broadcast %18 : vector<1x64xf32> to vector<1024x64xf32>
    %21 = arith.mulf %19, %20 : vector<1024x64xf32>
    %22 = arith.addf %16, %21 : vector<1024x64xf32>
    %c0_5 = arith.constant 0 : index
    %c0_6 = arith.constant 0 : index
    %23 = vector.load %arg4[%c0_5, %c0_6] : memref<1x64xf32, #tpu.memory_space<vmem>>, vector<1x64xf32>
    %24 = vector.broadcast %23 : vector<1x64xf32> to vector<1024x64xf32>
    %25 = arith.addf %22, %24 : vector<1024x64xf32>
    %cst = arith.constant 0.000000e+00 : f32
    %26 = vector.broadcast %cst : f32 to vector<1024x64xf32>
    %27 = arith.maximumf %25, %26 : vector<1024x64xf32>
    %28 = arith.truncf %27 : vector<1024x64xf32> to vector<1024x64xbf16>
    %c0_7 = arith.constant 0 : index
    %c0_8 = arith.constant 0 : index
    %29 = vector.load %arg5[%c0_7, %c0_8] : memref<64x128xbf16, #tpu.memory_space<vmem>>, vector<64x128xbf16>
    %cst_9 = arith.constant dense<0.000000e+00> : vector<1024x128xf32>
    %30 = tpu.matmul %28, %29, %cst_9 {dimension_numbers = #tpu.dot_dimension_numbers<[1], [0], [0], [1], [0, 0, 1, 1], [], []>} : vector<1024x64xbf16>, vector<64x128xbf16>, vector<1024x128xf32> -> vector<1024x128xf32>
    %31 = arith.truncf %30 : vector<1024x128xf32> to vector<1024x128xbf16>
    %c0_10 = arith.constant 0 : index
    %c0_11 = arith.constant 0 : index
    %32 = vector.load %arg6[%c0_10, %c0_11] : memref<1x128xf32, #tpu.memory_space<vmem>>, vector<1x128xf32>
    %33 = arith.truncf %32 : vector<1x128xf32> to vector<1x128xbf16>
    %34 = vector.broadcast %33 : vector<1x128xbf16> to vector<1024x128xbf16>
    %35 = arith.addf %31, %34 : vector<1024x128xbf16>
    %cst_12 = arith.constant 0.000000e+00 : bf16
    %36 = vector.broadcast %cst_12 : bf16 to vector<1024x128xbf16>
    %37 = arith.maximumf %35, %36 : vector<1024x128xbf16>
    %c0_13 = arith.constant 0 : index
    %c0_14 = arith.constant 0 : index
    %38 = vector.load %arg7[%c0_13, %c0_14] : memref<128x256xbf16, #tpu.memory_space<vmem>>, vector<128x256xbf16>
    %cst_15 = arith.constant dense<0.000000e+00> : vector<1024x256xf32>
    %39 = tpu.matmul %37, %38, %cst_15 {dimension_numbers = #tpu.dot_dimension_numbers<[1], [0], [0], [1], [0, 0, 1, 1], [], []>} : vector<1024x128xbf16>, vector<128x256xbf16>, vector<1024x256xf32> -> vector<1024x256xf32>
    %c0_16 = arith.constant 0 : index
    %c0_17 = arith.constant 0 : index
    %40 = vector.load %arg16[%c0_16, %c0_17] : memref<8x256xf32, #tpu.memory_space<vmem>>, vector<8x256xf32>
    %41 = vector.shape_cast %39 : vector<1024x256xf32> to vector<8x128x256xf32>
    %cst_18 = arith.constant dense<0xFF800000> : vector<8x256xf32>
    %42 = vector.multi_reduction <maximumf>, %41, %cst_18 [1] : vector<8x128x256xf32> to vector<8x256xf32>
    %43 = arith.maximumf %40, %42 : vector<8x256xf32>
    %c0_19 = arith.constant 0 : index
    %c0_20 = arith.constant 0 : index
    %44 = vector.load %arg16[%c0_19, %c0_20] : memref<8x256xf32, #tpu.memory_space<vmem>>, vector<8x256xf32>
    tpu.vector_store %arg16[%c0_19, %c0_20], %43 {strides = array<i32>} : memref<8x256xf32, #tpu.memory_space<vmem>>, vector<8x256xf32>,
    %c1_i32 = arith.constant 1 : i32
    %45 = arith.cmpi eq, %arg1, %c1_i32 : i32
    %46 = arith.extui %45 : i1 to i32
    %c0_i32_21 = arith.constant 0 : i32
    %47 = arith.cmpi ne, %46, %c0_i32_21 : i32
    scf.if %47 {
      %c0_22 = arith.constant 0 : index
      %c0_23 = arith.constant 0 : index
      %48 = vector.load %arg16[%c0_22, %c0_23] : memref<8x256xf32, #tpu.memory_space<vmem>>, vector<8x256xf32>
      %c0_24 = arith.constant 0 : index
      %c0_25 = arith.constant 0 : index
      %49 = vector.load %arg8[%c0_24, %c0_25] : memref<1x256xf32, #tpu.memory_space<vmem>>, vector<1x256xf32>
      %50 = vector.broadcast %49 : vector<1x256xf32> to vector<8x256xf32>
      %51 = arith.addf %48, %50 : vector<8x256xf32>
      %cst_26 = arith.constant 0.000000e+00 : f32
      %52 = vector.broadcast %cst_26 : f32 to vector<8x256xf32>
      %53 = arith.maximumf %51, %52 : vector<8x256xf32>
      %54 = arith.truncf %53 : vector<8x256xf32> to vector<8x256xbf16>
      %c0_27 = arith.constant 0 : index
      %c0_28 = arith.constant 0 : index
      %55 = vector.load %arg9[%c0_27, %c0_28] : memref<256x128xbf16, #tpu.memory_space<vmem>>, vector<256x128xbf16>
      %cst_29 = arith.constant dense<0.000000e+00> : vector<8x128xf32>
      %56 = tpu.matmul %54, %55, %cst_29 {dimension_numbers = #tpu.dot_dimension_numbers<[1], [0], [0], [1], [0, 0, 1, 1], [], []>} : vector<8x256xbf16>, vector<256x128xbf16>, vector<8x128xf32> -> vector<8x128xf32>
      %c0_30 = arith.constant 0 : index
      %c0_31 = arith.constant 0 : index
      %57 = vector.load %arg10[%c0_30, %c0_31] : memref<1x128xf32, #tpu.memory_space<vmem>>, vector<1x128xf32>
      %58 = vector.broadcast %57 : vector<1x128xf32> to vector<8x128xf32>
      %59 = arith.addf %56, %58 : vector<8x128xf32>
      %cst_32 = arith.constant 0.000000e+00 : f32
      %60 = vector.broadcast %cst_32 : f32 to vector<8x128xf32>
      %61 = arith.maximumf %59, %60 : vector<8x128xf32>
      %62 = arith.truncf %61 : vector<8x128xf32> to vector<8x128xbf16>
      %c0_33 = arith.constant 0 : index
      %c0_34 = arith.constant 0 : index
      %63 = vector.load %arg11[%c0_33, %c0_34] : memref<128x64xbf16, #tpu.memory_space<vmem>>, vector<128x64xbf16>
      %cst_35 = arith.constant dense<0.000000e+00> : vector<8x64xf32>
      %64 = tpu.matmul %62, %63, %cst_35 {dimension_numbers = #tpu.dot_dimension_numbers<[1], [0], [0], [1], [0, 0, 1, 1], [], []>} : vector<8x128xbf16>, vector<128x64xbf16>, vector<8x64xf32> -> vector<8x64xf32>
      %c0_36 = arith.constant 0 : index
      %c0_37 = arith.constant 0 : index
      %65 = vector.load %arg12[%c0_36, %c0_37] : memref<1x64xf32, #tpu.memory_space<vmem>>, vector<1x64xf32>
      %66 = vector.broadcast %65 : vector<1x64xf32> to vector<8x64xf32>
      %67 = arith.addf %64, %66 : vector<8x64xf32>
      %cst_38 = arith.constant 0.000000e+00 : f32
      %68 = vector.broadcast %cst_38 : f32 to vector<8x64xf32>
      %69 = arith.maximumf %67, %68 : vector<8x64xf32>
      %70 = arith.truncf %69 : vector<8x64xf32> to vector<8x64xbf16>
      %c0_39 = arith.constant 0 : index
      %c0_40 = arith.constant 0 : index
      %71 = vector.load %arg13[%c0_39, %c0_40] : memref<64x128xbf16, #tpu.memory_space<vmem>>, vector<64x128xbf16>
      %cst_41 = arith.constant dense<0.000000e+00> : vector<8x128xf32>
      %72 = tpu.matmul %70, %71, %cst_41 {dimension_numbers = #tpu.dot_dimension_numbers<[1], [0], [0], [1], [0, 0, 1, 1], [], []>} : vector<8x64xbf16>, vector<64x128xbf16>, vector<8x128xf32> -> vector<8x128xf32>
      %c0_42 = arith.constant 0 : index
      %c0_43 = arith.constant 0 : index
      %73 = vector.load %arg14[%c0_42, %c0_43] : memref<1x128xf32, #tpu.memory_space<vmem>>, vector<1x128xf32>
      %74 = vector.broadcast %73 : vector<1x128xf32> to vector<8x128xf32>
      %75 = arith.addf %72, %74 : vector<8x128xf32>
      %c0_44 = arith.constant 0 : index
      %c0_45 = arith.constant 0 : index
      %76 = vector.load %arg15[%c0_44, %c0_45] : memref<8x128xf32, #tpu.memory_space<vmem>>, vector<8x128xf32>
      tpu.vector_store %arg15[%c0_44, %c0_45], %75 {strides = array<i32>} : memref<8x128xf32, #tpu.memory_space<vmem>>, vector<8x128xf32>,
    } else {
    }
    return
  }
  func.func @transform_0(%arg0: i32, %arg1: i32) -> (i32, i32, i32) {
    %c0_i32 = arith.constant 0 : i32
    %c0_i32_0 = arith.constant 0 : i32
    return %arg0, %arg1, %c0_i32 : i32, i32, i32
  }
  func.func @transform_1(%arg0: i32, %arg1: i32) -> (i32, i32) {
    %c0_i32 = arith.constant 0 : i32
    %c0_i32_0 = arith.constant 0 : i32
    %c0_i32_1 = arith.constant 0 : i32
    return %c0_i32, %c0_i32_0 : i32, i32
  }
  func.func @transform_2(%arg0: i32, %arg1: i32) -> (i32, i32) {
    %c0_i32 = arith.constant 0 : i32
    %c0_i32_0 = arith.constant 0 : i32
    %c0_i32_1 = arith.constant 0 : i32
    return %c0_i32, %c0_i32_0 : i32, i32
  }
  func.func @transform_3(%arg0: i32, %arg1: i32) -> (i32, i32) {
    %c0_i32 = arith.constant 0 : i32
    %c0_i32_0 = arith.constant 0 : i32
    %c0_i32_1 = arith.constant 0 : i32
    return %c0_i32, %c0_i32_0 : i32, i32
  }
  func.func @transform_4(%arg0: i32, %arg1: i32) -> (i32, i32) {
    %c0_i32 = arith.constant 0 : i32
    %c0_i32_0 = arith.constant 0 : i32
    %c0_i32_1 = arith.constant 0 : i32
    return %c0_i32, %c0_i32_0 : i32, i32
  }
  func.func @transform_5(%arg0: i32, %arg1: i32) -> (i32, i32) {
    %c0_i32 = arith.constant 0 : i32
    %c0_i32_0 = arith.constant 0 : i32
    %c0_i32_1 = arith.constant 0 : i32
    return %c0_i32, %c0_i32_0 : i32, i32
  }
  func.func @transform_6(%arg0: i32, %arg1: i32) -> (i32, i32) {
    %c0_i32 = arith.constant 0 : i32
    %c0_i32_0 = arith.constant 0 : i32
    %c0_i32_1 = arith.constant 0 : i32
    return %c0_i32, %c0_i32_0 : i32, i32
  }
  func.func @transform_7(%arg0: i32, %arg1: i32) -> (i32, i32) {
    %c0_i32 = arith.constant 0 : i32
    %c0_i32_0 = arith.constant 0 : i32
    %c0_i32_1 = arith.constant 0 : i32
    return %c0_i32, %c0_i32_0 : i32, i32
  }
  func.func @transform_8(%arg0: i32, %arg1: i32) -> (i32, i32) {
    %c0_i32 = arith.constant 0 : i32
    %c0_i32_0 = arith.constant 0 : i32
    %c0_i32_1 = arith.constant 0 : i32
    return %c0_i32, %c0_i32_0 : i32, i32
  }
  func.func @transform_9(%arg0: i32, %arg1: i32) -> (i32, i32) {
    %c0_i32 = arith.constant 0 : i32
    %c0_i32_0 = arith.constant 0 : i32
    %c0_i32_1 = arith.constant 0 : i32
    return %c0_i32, %c0_i32_0 : i32, i32
  }
  func.func @transform_10(%arg0: i32, %arg1: i32) -> (i32, i32) {
    %c0_i32 = arith.constant 0 : i32
    %c0_i32_0 = arith.constant 0 : i32
    %c0_i32_1 = arith.constant 0 : i32
    return %c0_i32, %c0_i32_0 : i32, i32
  }
  func.func @transform_11(%arg0: i32, %arg1: i32) -> (i32, i32) {
    %c0_i32 = arith.constant 0 : i32
    %c0_i32_0 = arith.constant 0 : i32
    %c0_i32_1 = arith.constant 0 : i32
    return %c0_i32, %c0_i32_0 : i32, i32
  }
  func.func @transform_12(%arg0: i32, %arg1: i32) -> (i32, i32) {
    %c0_i32 = arith.constant 0 : i32
    %c0_i32_0 = arith.constant 0 : i32
    %c0_i32_1 = arith.constant 0 : i32
    return %c0_i32, %c0_i32_0 : i32, i32
  }
  func.func @transform_13(%arg0: i32, %arg1: i32) -> (i32, i32) {
    %c0_i32 = arith.constant 0 : i32
    %c0_i32_0 = arith.constant 0 : i32
    return %arg0, %c0_i32 : i32, i32
  }
}

</mosaic_0001>

<llo_original>
// kernel: tpu_custom_call.1
$region0: #{tpu_custom_call.1}
  #allocation0 [shape = 'u32[]', space=smem, size = 0x4, offset = 0x4, fixed_abs, tag = 'smem constant byte address 0x4 - core index']
  #allocation1 [shape = 'u32[144,128]{1,0:T(1,128)}', space=vmem, size = 0x12000, scoped, tag = 'internal scratch']
  #allocation2 [shape = 'f32[8,256]{1,0:T(8,128)}', space=vmem, size = 0x2000, scoped, tag = 'scratch operand']
  %s0 = inlined_call_operand.vmem [shape: f32[16,256,3], index: 0, kind: input, shape index: {}]
  %s1 = inlined_call_operand.vmem [shape: f32[3,64], index: 1, kind: input, shape index: {}]
  %s2 = inlined_call_operand.vmem [shape: f32[1,64], index: 2, kind: input, shape index: {}]
  %s3 = inlined_call_operand.vmem [shape: bf16[64,128], index: 3, kind: input, shape index: {}]
  %s4 = inlined_call_operand.vmem [shape: f32[1,128], index: 4, kind: input, shape index: {}]
  %s5 = inlined_call_operand.vmem [shape: bf16[128,256], index: 5, kind: input, shape index: {}]
  %s6 = inlined_call_operand.vmem [shape: f32[1,256], index: 6, kind: input, shape index: {}]
  %s7 = inlined_call_operand.vmem [shape: bf16[256,128], index: 7, kind: input, shape index: {}]
  %s8 = inlined_call_operand.vmem [shape: f32[1,128], index: 8, kind: input, shape index: {}]
  %s9 = inlined_call_operand.vmem [shape: bf16[128,64], index: 9, kind: input, shape index: {}]
  %s10 = inlined_call_operand.vmem [shape: f32[1,64], index: 10, kind: input, shape index: {}]
  %s11 = inlined_call_operand.vmem [shape: bf16[64,128], index: 11, kind: input, shape index: {}]
  %s12 = inlined_call_operand.vmem [shape: f32[1,128], index: 12, kind: input, shape index: {}]
  %s13 = inlined_call_operand.hbm [shape: f32[16,128], index: 13, kind: output, shape index: {}]
  %s14 = sld [smem:[#allocation0]]
  $region131: #{tpu_custom_call.1} parent=0
    _
  %s16 = ssub.s32 1, %s14
  %s17 = scalar_select 0, %s16, %s14
  $region1: #{tpu_custom_call.1} parent=0
    #allocation3 [shape = 'u8[1048576]{0}', space=vmem, size = 0x100000, scoped, tag = 'input window, operand 0']
    #allocation4 [shape = 'u8[8192]{0}', space=vmem, size = 0x2000, scoped, tag = 'output window, operand 0']
    #allocation5 [shape = 's32[2]{0}', space=sflag, size = 0x8, scoped, tag = 'scoped memory for tpu_custom_call.1']
    %18 = vsyncpa [#allocation5], 0
    %s19 = scalar_lea.sflag [#allocation5], 1
    %20 = vsyncpa %s19, 0
    loop: start=0, step=1, limit=6
    $region2: #{tpu_custom_call.1} parent=1 // loop_pre_header
      _
    $region3: #{tpu_custom_call.1} parent=1 // loop_header
      %s22 = sphi 0, %s26
      %p23 = scmp.ge.s32.totalorder %s22, 6
      %s29 = sphi 0, %s41
      %s30 = sphi 0, %s37
      %s31 = sphi 0, %s29
      %s32 = sphi 0, %s30
      %s33 = sphi 0, %s31
      %s34 = sphi 0, %s32
      %s46 = sphi 0, %s48
      %s49 = sphi 0, %s46
      %s50 = sphi 0, %s49
      %s66 = sphi 0, %s50
      %s70 = sphi 0, %s70
      %s72 = sphi 0, %s70
      %s73 = sphi 0, %s72
      %s87 = sphi 0, %s73
      %s91 = sphi 0, %s91
      %s93 = sphi 0, %s91
      %s94 = sphi 0, %s93
      %s108 = sphi 0, %s94
      %s112 = sphi 0, %s112
      %s114 = sphi 0, %s112
      %s115 = sphi 0, %s114
      %s129 = sphi 0, %s115
      %s133 = sphi 0, %s133
      %s135 = sphi 0, %s133
      %s136 = sphi 0, %s135
      %s150 = sphi 0, %s136
      %s154 = sphi 0, %s154
      %s156 = sphi 0, %s154
      %s157 = sphi 0, %s156
      %s171 = sphi 0, %s157
      %s175 = sphi 0, %s175
      %s177 = sphi 0, %s175
      %s178 = sphi 0, %s177
      %s192 = sphi 0, %s178
      %s196 = sphi 0, %s196
      %s198 = sphi 0, %s196
      %s199 = sphi 0, %s198
      %s213 = sphi 0, %s199
      %s217 = sphi 0, %s217
      %s219 = sphi 0, %s217
      %s220 = sphi 0, %s219
      %s234 = sphi 0, %s220
      %s238 = sphi 0, %s238
      %s240 = sphi 0, %s238
      %s241 = sphi 0, %s240
      %s255 = sphi 0, %s241
      %s259 = sphi 0, %s259
      %s261 = sphi 0, %s259
      %s262 = sphi 0, %s261
      %s276 = sphi 0, %s262
      %s280 = sphi 0, %s280
      %s282 = sphi 0, %s280
      %s283 = sphi 0, %s282
      %s297 = sphi 0, %s283
      %s301 = sphi 0, %s301
      %s303 = sphi 0, %s301
      %s304 = sphi 0, %s303
      %s318 = sphi 0, %s304
      %s324 = sphi 0, %s326
      %s327 = sphi 0, %s324
      %s328 = sphi 0, %s327
      %s344 = sphi 0, %s328
    $region4: #{tpu_custom_call.1} parent=1 // loop_header_branch
      %25 = sbr.rel (%p23) target = $region8
    $region5: #{tpu_custom_call.1} parent=1 // loop_body
      %s27 = ssub.s32 %s22, 1
      %s28 = ssub.s32 %s22, 2
      %s35 = sadd.s32 1, %s30
      %p36 = scmp.ge.s32.totalorder %s35, 2
      %s37 = scalar_select %p36, 0, %s35
      %s38 = sadd.s32 1, %s29
      %s39 = scalar_select %p36, %s38, %s29
      %p40 = scmp.ge.s32.totalorder %s39, 2
      %s41 = scalar_select %p40, 0, %s39
      %s42 = ssub.s32 %s29, %s41
      %s43 = ssub.s32 %s30, %s37
      %s44 = sor.u32 %s42, %s43
      %p45 = scmp.eq.s32.totalorder %s44, 0
      %s47 = sadd.s32 %s46, 1
      %s48 = scalar_select %p45, %s46, %s47
      %p51 = pneg %p45
      %p52 = scmp.eq.s32.totalorder %s22, 3
      %p53 = por %p51, %p52
      %p54 = scmp.ne.s32.totalorder %s46, %s49
      %p55 = scmp.eq.s32.totalorder %s22, 0
      %p56 = por %p54, %p55
      %p57 = scmp.ne.s32.totalorder %s46, %s49
      %p58 = scmp.eq.s32.totalorder %s27, 3
      %p59 = por %p57, %p58
      %p60 = scmp.ne.s32.totalorder %s49, %s50
      %p61 = scmp.eq.s32.totalorder %s27, 0
      %p62 = por %p60, %p61
      %p63 = scmp.ne.s32.totalorder %s49, %s50
      %p64 = scmp.eq.s32.totalorder %s28, 3
      %p65 = por %p63, %p64
      %p67 = scmp.ne.s32.totalorder %s50, %s66
      %p68 = scmp.eq.s32.totalorder %s28, 0
      %p69 = por %p67, %p68
      %s71 = sadd.s32 %s70, 1
      %p74 = scmp.eq.s32.totalorder %s22, 3
      %p75 = scmp.ne.s32.totalorder %s70, %s72
      %p76 = scmp.eq.s32.totalorder %s22, 0
      %p77 = por %p75, %p76
      %p78 = scmp.ne.s32.totalorder %s70, %s72
      %p79 = scmp.eq.s32.totalorder %s27, 3
      %p80 = por %p78, %p79
      %p81 = scmp.ne.s32.totalorder %s72, %s73
      %p82 = scmp.eq.s32.totalorder %s27, 0
      %p83 = por %p81, %p82
      %p84 = scmp.ne.s32.totalorder %s72, %s73
      %p85 = scmp.eq.s32.totalorder %s28, 3
      %p86 = por %p84, %p85
      %p88 = scmp.ne.s32.totalorder %s73, %s87
      %p89 = scmp.eq.s32.totalorder %s28, 0
      %p90 = por %p88, %p89
      %s92 = sadd.s32 %s91, 1
      %p95 = scmp.eq.s32.totalorder %s22, 3
      %p96 = scmp.ne.s32.totalorder %s91, %s93
      %p97 = scmp.eq.s32.totalorder %s22, 0
      %p98 = por %p96, %p97
      %p99 = scmp.ne.s32.totalorder %s91, %s93
      %p100 = scmp.eq.s32.totalorder %s27, 3
      %p101 = por %p99, %p100
      %p102 = scmp.ne.s32.totalorder %s93, %s94
      %p103 = scmp.eq.s32.totalorder %s27, 0
      %p104 = por %p102, %p103
      %p105 = scmp.ne.s32.totalorder %s93, %s94
      %p106 = scmp.eq.s32.totalorder %s28, 3
      %p107 = por %p105, %p106
      %p109 = scmp.ne.s32.totalorder %s94, %s108
      %p110 = scmp.eq.s32.totalorder %s28, 0
      %p111 = por %p109, %p110
      %s113 = sadd.s32 %s112, 1
      %p116 = scmp.eq.s32.totalorder %s22, 3
      %p117 = scmp.ne.s32.totalorder %s112, %s114
      %p118 = scmp.eq.s32.totalorder %s22, 0
      %p119 = por %p117, %p118
      %p120 = scmp.ne.s32.totalorder %s112, %s114
      %p121 = scmp.eq.s32.totalorder %s27, 3
      %p122 = por %p120, %p121
      %p123 = scmp.ne.s32.totalorder %s114, %s115
      %p124 = scmp.eq.s32.totalorder %s27, 0
      %p125 = por %p123, %p124
      %p126 = scmp.ne.s32.totalorder %s114, %s115
      %p127 = scmp.eq.s32.totalorder %s28, 3
      %p128 = por %p126, %p127
      %p130 = scmp.ne.s32.totalorder %s115, %s129
      %p131 = scmp.eq.s32.totalorder %s28, 0
      %p132 = por %p130, %p131
      %s134 = sadd.s32 %s133, 1
      %p137 = scmp.eq.s32.totalorder %s22, 3
      %p138 = scmp.ne.s32.totalorder %s133, %s135
      %p139 = scmp.eq.s32.totalorder %s22, 0
      %p140 = por %p138, %p139
      %p141 = scmp.ne.s32.totalorder %s133, %s135
      %p142 = scmp.eq.s32.totalorder %s27, 3
      %p143 = por %p141, %p142
      %p144 = scmp.ne.s32.totalorder %s135, %s136
      %p145 = scmp.eq.s32.totalorder %s27, 0
      %p146 = por %p144, %p145
      %p147 = scmp.ne.s32.totalorder %s135, %s136
      %p148 = scmp.eq.s32.totalorder %s28, 3
      %p149 = por %p147, %p148
      %p151 = scmp.ne.s32.totalorder %s136, %s150
      %p152 = scmp.eq.s32.totalorder %s28, 0
      %p153 = por %p151, %p152
      %s155 = sadd.s32 %s154, 1
      %p158 = scmp.eq.s32.totalorder %s22, 3
      %p159 = scmp.ne.s32.totalorder %s154, %s156
      %p160 = scmp.eq.s32.totalorder %s22, 0
      %p161 = por %p159, %p160
      %p162 = scmp.ne.s32.totalorder %s154, %s156
      %p163 = scmp.eq.s32.totalorder %s27, 3
      %p164 = por %p162, %p163
      %p165 = scmp.ne.s32.totalorder %s156, %s157
      %p166 = scmp.eq.s32.totalorder %s27, 0
      %p167 = por %p165, %p166
      %p168 = scmp.ne.s32.totalorder %s156, %s157
      %p169 = scmp.eq.s32.totalorder %s28, 3
      %p170 = por %p168, %p169
      %p172 = scmp.ne.s32.totalorder %s157, %s171
      %p173 = scmp.eq.s32.totalorder %s28, 0
      %p174 = por %p172, %p173
      %s176 = sadd.s32 %s175, 1
      %p179 = scmp.eq.s32.totalorder %s22, 3
      %p180 = scmp.ne.s32.totalorder %s175, %s177
      %p181 = scmp.eq.s32.totalorder %s22, 0
      %p182 = por %p180, %p181
      %p183 = scmp.ne.s32.totalorder %s175, %s177
      %p184 = scmp.eq.s32.totalorder %s27, 3
      %p185 = por %p183, %p184
      %p186 = scmp.ne.s32.totalorder %s177, %s178
      %p187 = scmp.eq.s32.totalorder %s27, 0
      %p188 = por %p186, %p187
      %p189 = scmp.ne.s32.totalorder %s177, %s178
      %p190 = scmp.eq.s32.totalorder %s28, 3
      %p191 = por %p189, %p190
      %p193 = scmp.ne.s32.totalorder %s178, %s192
      %p194 = scmp.eq.s32.totalorder %s28, 0
      %p195 = por %p193, %p194
      %s197 = sadd.s32 %s196, 1
      %p200 = scmp.eq.s32.totalorder %s22, 3
      %p201 = scmp.ne.s32.totalorder %s196, %s198
      %p202 = scmp.eq.s32.totalorder %s22, 0
      %p203 = por %p201, %p202
      %p204 = scmp.ne.s32.totalorder %s196, %s198
      %p205 = scmp.eq.s32.totalorder %s27, 3
      %p206 = por %p204, %p205
      %p207 = scmp.ne.s32.totalorder %s198, %s199
      %p208 = scmp.eq.s32.totalorder %s27, 0
      %p209 = por %p207, %p208
      %p210 = scmp.ne.s32.totalorder %s198, %s199
      %p211 = scmp.eq.s32.totalorder %s28, 3
      %p212 = por %p210, %p211
      %p214 = scmp.ne.s32.totalorder %s199, %s213
      %p215 = scmp.eq.s32.totalorder %s28, 0
      %p216 = por %p214, %p215
      %s218 = sadd.s32 %s217, 1
      %p221 = scmp.eq.s32.totalorder %s22, 3
      %p222 = scmp.ne.s32.totalorder %s217, %s219
      %p223 = scmp.eq.s32.totalorder %s22, 0
      %p224 = por %p222, %p223
      %p225 = scmp.ne.s32.totalorder %s217, %s219
      %p226 = scmp.eq.s32.totalorder %s27, 3
      %p227 = por %p225, %p226
      %p228 = scmp.ne.s32.totalorder %s219, %s220
      %p229 = scmp.eq.s32.totalorder %s27, 0
      %p230 = por %p228, %p229
      %p231 = scmp.ne.s32.totalorder %s219, %s220
      %p232 = scmp.eq.s32.totalorder %s28, 3
      %p233 = por %p231, %p232
      %p235 = scmp.ne.s32.totalorder %s220, %s234
      %p236 = scmp.eq.s32.totalorder %s28, 0
      %p237 = por %p235, %p236
      %s239 = sadd.s32 %s238, 1
      %p242 = scmp.eq.s32.totalorder %s22, 3
      %p243 = scmp.ne.s32.totalorder %s238, %s240
      %p244 = scmp.eq.s32.totalorder %s22, 0
      %p245 = por %p243, %p244
      %p246 = scmp.ne.s32.totalorder %s238, %s240
      %p247 = scmp.eq.s32.totalorder %s27, 3
      %p248 = por %p246, %p247
      %p249 = scmp.ne.s32.totalorder %s240, %s241
      %p250 = scmp.eq.s32.totalorder %s27, 0
      %p251 = por %p249, %p250
      %p252 = scmp.ne.s32.totalorder %s240, %s241
      %p253 = scmp.eq.s32.totalorder %s28, 3
      %p254 = por %p252, %p253
      %p256 = scmp.ne.s32.totalorder %s241, %s255
      %p257 = scmp.eq.s32.totalorder %s28, 0
      %p258 = por %p256, %p257
      %s260 = sadd.s32 %s259, 1
      %p263 = scmp.eq.s32.totalorder %s22, 3
      %p264 = scmp.ne.s32.totalorder %s259, %s261
      %p265 = scmp.eq.s32.totalorder %s22, 0
      %p266 = por %p264, %p265
      %p267 = scmp.ne.s32.totalorder %s259, %s261
      %p268 = scmp.eq.s32.totalorder %s27, 3
      %p269 = por %p267, %p268
      %p270 = scmp.ne.s32.totalorder %s261, %s262
      %p271 = scmp.eq.s32.totalorder %s27, 0
      %p272 = por %p270, %p271
      %p273 = scmp.ne.s32.totalorder %s261, %s262
      %p274 = scmp.eq.s32.totalorder %s28, 3
      %p275 = por %p273, %p274
      %p277 = scmp.ne.s32.totalorder %s262, %s276
      %p278 = scmp.eq.s32.totalorder %s28, 0
      %p279 = por %p277, %p278
      %s281 = sadd.s32 %s280, 1
      %p284 = scmp.eq.s32.totalorder %s22, 3
      %p285 = scmp.ne.s32.totalorder %s280, %s282
      %p286 = scmp.eq.s32.totalorder %s22, 0
      %p287 = por %p285, %p286
      %p288 = scmp.ne.s32.totalorder %s280, %s282
      %p289 = scmp.eq.s32.totalorder %s27, 3
      %p290 = por %p288, %p289
      %p291 = scmp.ne.s32.totalorder %s282, %s283
      %p292 = scmp.eq.s32.totalorder %s27, 0
      %p293 = por %p291, %p292
      %p294 = scmp.ne.s32.totalorder %s282, %s283
      %p295 = scmp.eq.s32.totalorder %s28, 3
      %p296 = por %p294, %p295
      %p298 = scmp.ne.s32.totalorder %s283, %s297
      %p299 = scmp.eq.s32.totalorder %s28, 0
      %p300 = por %p298, %p299
      %s302 = sadd.s32 %s301, 1
      %p305 = scmp.eq.s32.totalorder %s22, 3
      %p306 = scmp.ne.s32.totalorder %s301, %s303
      %p307 = scmp.eq.s32.totalorder %s22, 0
      %p308 = por %p306, %p307
      %p309 = scmp.ne.s32.totalorder %s301, %s303
      %p310 = scmp.eq.s32.totalorder %s27, 3
      %p311 = por %p309, %p310
      %p312 = scmp.ne.s32.totalorder %s303, %s304
      %p313 = scmp.eq.s32.totalorder %s27, 0
      %p314 = por %p312, %p313
      %p315 = scmp.ne.s32.totalorder %s303, %s304
      %p316 = scmp.eq.s32.totalorder %s28, 3
      %p317 = por %p315, %p316
      %p319 = scmp.ne.s32.totalorder %s304, %s318
      %p320 = scmp.eq.s32.totalorder %s28, 0
      %p321 = por %p319, %p320
      %s322 = ssub.s32 %s29, %s41
      %p323 = scmp.eq.s32.totalorder %s322, 0
      %s325 = sadd.s32 %s324, 1
      %s326 = scalar_select %p323, %s324, %s325
      %p329 = pneg %p323
      %p330 = scmp.eq.s32.totalorder %s22, 3
      %p331 = por %p329, %p330
      %p332 = scmp.ne.s32.totalorder %s324, %s327
      %p333 = scmp.eq.s32.totalorder %s22, 0
      %p334 = por %p332, %p333
      %p335 = scmp.ne.s32.totalorder %s324, %s327
      %p336 = scmp.eq.s32.totalorder %s27, 3
      %p337 = por %p335, %p336
      %p338 = scmp.ne.s32.totalorder %s327, %s328
      %p339 = scmp.eq.s32.totalorder %s27, 0
      %p340 = por %p338, %p339
      %p341 = scmp.ne.s32.totalorder %s327, %s328
      %p342 = scmp.eq.s32.totalorder %s28, 3
      %p343 = por %p341, %p342
      %p345 = scmp.ne.s32.totalorder %s328, %s344
      %p346 = scmp.eq.s32.totalorder %s28, 0
      %p347 = por %p345, %p346
      %p348 = scmp.le.s32.totalorder 1, %s22
      %p349 = scmp.lt.s32.totalorder %s22, 5
      %p350 = pnand %p348, %p349
      %p351 = pneg %p350
      // Predicated region
      $region9: #{tpu_custom_call.1} parent=5 // pred_check
        _
      $region10: #{tpu_custom_call.1} parent=5 // pred_check_branch
        %353 = sbr.rel (%p350) target = $region12
      $region11: #{tpu_custom_call.1} parent=5 // pred_region
        %s354 = ssub.s32 %s22, 1
        // Predicated region
        $region13: #{tpu_custom_call.1} parent=11 // pred_check
          %p355 = pneg %p83
        $region14: #{tpu_custom_call.1} parent=11 // pred_check_branch
          %357 = sbr.rel (%p355) target = $region16
        $region15: #{tpu_custom_call.1} parent=11 // pred_region
          _
        $region16: #{tpu_custom_call.1} parent=11 // pred_fallthru
          _
        // Predicated region
        $region17: #{tpu_custom_call.1} parent=11 // pred_check
          %p358 = pneg %p104
        $region18: #{tpu_custom_call.1} parent=11 // pred_check_branch
          %360 = sbr.rel (%p358) target = $region20
        $region19: #{tpu_custom_call.1} parent=11 // pred_region
          _
        $region20: #{tpu_custom_call.1} parent=11 // pred_fallthru
          _
        // Predicated region
        $region21: #{tpu_custom_call.1} parent=11 // pred_check
          %p361 = pneg %p125
        $region22: #{tpu_custom_call.1} parent=11 // pred_check_branch
          %363 = sbr.rel (%p361) target = $region24
        $region23: #{tpu_custom_call.1} parent=11 // pred_region
          _
        $region24: #{tpu_custom_call.1} parent=11 // pred_fallthru
          _
        // Predicated region
        $region25: #{tpu_custom_call.1} parent=11 // pred_check
          %p364 = pneg %p146
        $region26: #{tpu_custom_call.1} parent=11 // pred_check_branch
          %366 = sbr.rel (%p364) target = $region28
        $region27: #{tpu_custom_call.1} parent=11 // pred_region
          _
        $region28: #{tpu_custom_call.1} parent=11 // pred_fallthru
          _
        // Predicated region
        $region29: #{tpu_custom_call.1} parent=11 // pred_check
          %p367 = pneg %p167
        $region30: #{tpu_custom_call.1} parent=11 // pred_check_branch
          %369 = sbr.rel (%p367) target = $region32
        $region31: #{tpu_custom_call.1} parent=11 // pred_region
          _
        $region32: #{tpu_custom_call.1} parent=11 // pred_fallthru
          _
        // Predicated region
        $region33: #{tpu_custom_call.1} parent=11 // pred_check
          %p370 = pneg %p188
        $region34: #{tpu_custom_call.1} parent=11 // pred_check_branch
          %372 = sbr.rel (%p370) target = $region36
        $region35: #{tpu_custom_call.1} parent=11 // pred_region
          _
        $region36: #{tpu_custom_call.1} parent=11 // pred_fallthru
          _
        // Predicated region
        $region37: #{tpu_custom_call.1} parent=11 // pred_check
          %p373 = pneg %p209
        $region38: #{tpu_custom_call.1} parent=11 // pred_check_branch
          %375 = sbr.rel (%p373) target = $region40
        $region39: #{tpu_custom_call.1} parent=11 // pred_region
          _
        $region40: #{tpu_custom_call.1} parent=11 // pred_fallthru
          _
        // Predicated region
        $region41: #{tpu_custom_call.1} parent=11 // pred_check
          %p376 = pneg %p230
        $region42: #{tpu_custom_call.1} parent=11 // pred_check_branch
          %378 = sbr.rel (%p376) target = $region44
        $region43: #{tpu_custom_call.1} parent=11 // pred_region
          _
        $region44: #{tpu_custom_call.1} parent=11 // pred_fallthru
          _
        // Predicated region
        $region45: #{tpu_custom_call.1} parent=11 // pred_check
          %p379 = pneg %p251
        $region46: #{tpu_custom_call.1} parent=11 // pred_check_branch
          %381 = sbr.rel (%p379) target = $region48
        $region47: #{tpu_custom_call.1} parent=11 // pred_region
          _
        $region48: #{tpu_custom_call.1} parent=11 // pred_fallthru
          _
        // Predicated region
        $region49: #{tpu_custom_call.1} parent=11 // pred_check
          %p382 = pneg %p272
        $region50: #{tpu_custom_call.1} parent=11 // pred_check_branch
          %384 = sbr.rel (%p382) target = $region52
        $region51: #{tpu_custom_call.1} parent=11 // pred_region
          _
        $region52: #{tpu_custom_call.1} parent=11 // pred_fallthru
          _
        // Predicated region
        $region53: #{tpu_custom_call.1} parent=11 // pred_check
          %p385 = pneg %p293
        $region54: #{tpu_custom_call.1} parent=11 // pred_check_branch
          %387 = sbr.rel (%p385) target = $region56
        $region55: #{tpu_custom_call.1} parent=11 // pred_region
          _
        $region56: #{tpu_custom_call.1} parent=11 // pred_fallthru
          _
        // Predicated region
        $region57: #{tpu_custom_call.1} parent=11 // pred_check
          %p388 = pneg %p314
        $region58: #{tpu_custom_call.1} parent=11 // pred_check_branch
          %390 = sbr.rel (%p388) target = $region60
        $region59: #{tpu_custom_call.1} parent=11 // pred_region
          _
        $region60: #{tpu_custom_call.1} parent=11 // pred_fallthru
          _
      $region12: #{tpu_custom_call.1} parent=5 // pred_fallthru
        _
      %p391 = scmp.lt.s32.totalorder %s22, 4
      // Predicated region
      $region61: #{tpu_custom_call.1} parent=5 // pred_check
        %p392 = pneg %p391
      $region62: #{tpu_custom_call.1} parent=5 // pred_check_branch
        %394 = sbr.rel (%p392) target = $region64
      $region63: #{tpu_custom_call.1} parent=5 // pred_region
        // Predicated region
        $region65: #{tpu_custom_call.1} parent=63 // pred_check
          %p395 = pneg %p56
        $region66: #{tpu_custom_call.1} parent=63 // pred_check_branch
          %397 = sbr.rel (%p395) target = $region68
        $region67: #{tpu_custom_call.1} parent=63 // pred_region
          %s398 = sand.u32 %s46, 1
          %s399 = sand.u32 %s46, 1
          %s400 = smul.addr %s399, 1024
          %s401 = scalar_lea.vmem [#allocation3], %s400
          %s402 = smul.u32 8, %s29
          %s403 = smul.u32 16, %s30
          %s404 = smul.addr %s402, 32
          %s405 = sadd.s32 %s403, %s404
          %s406 = smul.addr %s405, 8
          %s407 = scalar_lea.vmem %s0, %s406
          // Predicated region
          $region69: #{tpu_custom_call.1} parent=67 // pred_check
            _
          $region70: #{tpu_custom_call.1} parent=67 // pred_check_branch
            %409 = sbr.rel (0) target = $region72
          $region71: #{tpu_custom_call.1} parent=67 // pred_region
            // Predicated region
            $region73: #{tpu_custom_call.1} parent=71 // pred_check
              _
            $region74: #{tpu_custom_call.1} parent=71 // pred_check_branch
              %411 = sbr.rel (0) target = $region76
            $region75: #{tpu_custom_call.1} parent=71 // pred_region
              // Predicated region
              $region88: #{tpu_custom_call.1} parent=75 // pred_check
                _
              $region89: #{tpu_custom_call.1} parent=75 // pred_check_branch
                %680 = sbr.rel (0) target = $region91
              $region90: #{tpu_custom_call.1} parent=75 // pred_region
                loop: start=0, step=1, limit=1
                $region92: #{tpu_custom_call.1} parent=90 // loop_pre_header
                  _
                $region93: #{tpu_custom_call.1} parent=90 // loop_header
                  %s682 = sphi 0, %s686
                  %p683 = scmp.ge.s32.totalorder %s682, 1
                  %s687 = sphi %s407, %s407
                  %s688 = sphi %s401, %s401
                $region94: #{tpu_custom_call.1} parent=90 // loop_header_branch
                  %685 = sbr.rel (%p683) target = $region98
                $region95: #{tpu_custom_call.1} parent=90 // loop_body
                  %v689 = vld [vmem:[%s687] sm:$0xff]
                  %690 = vst [vmem:[%s688] sm:$0xff] %v689
                  %v691 = vld [vmem:[%s687 + $0x8] sm:$0xff]
                  %692 = vst [vmem:[%s688 + $0x8] sm:$0xff] %v691
                  %v693 = vld [vmem:[%s687 + $0x10] sm:$0xff]
                  %694 = vst [vmem:[%s688 + $0x10] sm:$0xff] %v693
                  %v695 = vld [vmem:[%s687 + $0x18] sm:$0xff]
                  %696 = vst [vmem:[%s688 + $0x18] sm:$0xff] %v695
                  %v697 = vld [vmem:[%s687 + $0x20] sm:$0xff]
                  %698 = vst [vmem:[%s688 + $0x20] sm:$0xff] %v697
                  %v699 = vld [vmem:[%s687 + $0x28] sm:$0xff]
                  %700 = vst [vmem:[%s688 + $0x28] sm:$0xff] %v699
                  %v701 = vld [vmem:[%s687 + $0x30] sm:$0xff]
                  %702 = vst [vmem:[%s688 + $0x30] sm:$0xff] %v701
                  %v703 = vld [vmem:[%s687 + $0x38] sm:$0xff]
                  %704 = vst [vmem:[%s688 + $0x38] sm:$0xff] %v703
                  %v705 = vld [vmem:[%s687 + $0x40] sm:$0xff]
                  %706 = vst [vmem:[%s688 + $0x40] sm:$0xff] %v705
                  %v707 = vld [vmem:[%s687 + $0x48] sm:$0xff]
                  %708 = vst [vmem:[%s688 + $0x48] sm:$0xff] %v707
                  %v709 = vld [vmem:[%s687 + $0x50] sm:$0xff]
                  %710 = vst [vmem:[%s688 + $0x50] sm:$0xff] %v709
                  %v711 = vld [vmem:[%s687 + $0x58] sm:$0xff]
                  %712 = vst [vmem:[%s688 + $0x58] sm:$0xff] %v711
                  %v713 = vld [vmem:[%s687 + $0x60] sm:$0xff]
                  %714 = vst [vmem:[%s688 + $0x60] sm:$0xff] %v713
                  %v715 = vld [vmem:[%s687 + $0x68] sm:$0xff]
                  %716 = vst [vmem:[%s688 + $0x68] sm:$0xff] %v715
                  %v717 = vld [vmem:[%s687 + $0x70] sm:$0xff]
                  %718 = vst [vmem:[%s688 + $0x70] sm:$0xff] %v717
                  %v719 = vld [vmem:[%s687 + $0x78] sm:$0xff]
                  %720 = vst [vmem:[%s688 + $0x78] sm:$0xff] %v719
                  %v721 = vld [vmem:[%s687 + $0x100] sm:$0xff]
                  %722 = vst [vmem:[%s688 + $0x80] sm:$0xff] %v721
                  %v723 = vld [vmem:[%s687 + $0x108] sm:$0xff]
                  %724 = vst [vmem:[%s688 + $0x88] sm:$0xff] %v723
                  %v725 = vld [vmem:[%s687 + $0x110] sm:$0xff]
                  %726 = vst [vmem:[%s688 + $0x90] sm:$0xff] %v725
                  %v727 = vld [vmem:[%s687 + $0x118] sm:$0xff]
                  %728 = vst [vmem:[%s688 + $0x98] sm:$0xff] %v727
                  %v729 = vld [vmem:[%s687 + $0x120] sm:$0xff]
                  %730 = vst [vmem:[%s688 + $0xa0] sm:$0xff] %v729
                  %v731 = vld [vmem:[%s687 + $0x128] sm:$0xff]
                  %732 = vst [vmem:[%s688 + $0xa8] sm:$0xff] %v731
                  %v733 = vld [vmem:[%s687 + $0x130] sm:$0xff]
                  %734 = vst [vmem:[%s688 + $0xb0] sm:$0xff] %v733
                  %v735 = vld [vmem:[%s687 + $0x138] sm:$0xff]
                  %736 = vst [vmem:[%s688 + $0xb8] sm:$0xff] %v735
                  %v737 = vld [vmem:[%s687 + $0x140] sm:$0xff]
                  %738 = vst [vmem:[%s688 + $0xc0] sm:$0xff] %v737
                  %v739 = vld [vmem:[%s687 + $0x148] sm:$0xff]
                  %740 = vst [vmem:[%s688 + $0xc8] sm:$0xff] %v739
                  %v741 = vld [vmem:[%s687 + $0x150] sm:$0xff]
                  %742 = vst [vmem:[%s688 + $0xd0] sm:$0xff] %v741
                  %v743 = vld [vmem:[%s687 + $0x158] sm:$0xff]
                  %744 = vst [vmem:[%s688 + $0xd8] sm:$0xff] %v743
                  %v745 = vld [vmem:[%s687 + $0x160] sm:$0xff]
                  %746 = vst [vmem:[%s688 + $0xe0] sm:$0xff] %v745
                  %v747 = vld [vmem:[%s687 + $0x168] sm:$0xff]
                  %748 = vst [vmem:[%s688 + $0xe8] sm:$0xff] %v747
                  %v749 = vld [vmem:[%s687 + $0x170] sm:$0xff]
                  %750 = vst [vmem:[%s688 + $0xf0] sm:$0xff] %v749
                  %v751 = vld [vmem:[%s687 + $0x178] sm:$0xff]
                  %752 = vst [vmem:[%s688 + $0xf8] sm:$0xff] %v751
                  %v753 = vld [vmem:[%s687 + $0x200] sm:$0xff]
                  %754 = vst [vmem:[%s688 + $0x100] sm:$0xff] %v753
                  %v755 = vld [vmem:[%s687 + $0x208] sm:$0xff]
                  %756 = vst [vmem:[%s688 + $0x108] sm:$0xff] %v755
                  %v757 = vld [vmem:[%s687 + $0x210] sm:$0xff]
                  %758 = vst [vmem:[%s688 + $0x110] sm:$0xff] %v757
                  %v759 = vld [vmem:[%s687 + $0x218] sm:$0xff]
                  %760 = vst [vmem:[%s688 + $0x118] sm:$0xff] %v759
                  %v761 = vld [vmem:[%s687 + $0x220] sm:$0xff]
                  %762 = vst [vmem:[%s688 + $0x120] sm:$0xff] %v761
                  %v763 = vld [vmem:[%s687 + $0x228] sm:$0xff]
                  %764 = vst [vmem:[%s688 + $0x128] sm:$0xff] %v763
                  %v765 = vld [vmem:[%s687 + $0x230] sm:$0xff]
                  %766 = vst [vmem:[%s688 + $0x130] sm:$0xff] %v765
                  %v767 = vld [vmem:[%s687 + $0x238] sm:$0xff]
                  %768 = vst [vmem:[%s688 + $0x138] sm:$0xff] %v767
                  %v769 = vld [vmem:[%s687 + $0x240] sm:$0xff]
                  %770 = vst [vmem:[%s688 + $0x140] sm:$0xff] %v769
                  %v771 = vld [vmem:[%s687 + $0x248] sm:$0xff]
                  %772 = vst [vmem:[%s688 + $0x148] sm:$0xff] %v771
                  %v773 = vld [vmem:[%s687 + $0x250] sm:$0xff]
                  %774 = vst [vmem:[%s688 + $0x150] sm:$0xff] %v773
                  %v775 = vld [vmem:[%s687 + $0x258] sm:$0xff]
                  %776 = vst [vmem:[%s688 + $0x158] sm:$0xff] %v775
                  %v777 = vld [vmem:[%s687 + $0x260] sm:$0xff]
                  %778 = vst [vmem:[%s688 + $0x160] sm:$0xff] %v777
                  %v779 = vld [vmem:[%s687 + $0x268] sm:$0xff]
                  %780 = vst [vmem:[%s688 + $0x168] sm:$0xff] %v779
                  %v781 = vld [vmem:[%s687 + $0x270] sm:$0xff]
                  %782 = vst [vmem:[%s688 + $0x170] sm:$0xff] %v781
                  %v783 = vld [vmem:[%s687 + $0x278] sm:$0xff]
                  %784 = vst [vmem:[%s688 + $0x178] sm:$0xff] %v783
                  %v785 = vld [vmem:[%s687 + $0x300] sm:$0xff]
                  %786 = vst [vmem:[%s688 + $0x180] sm:$0xff] %v785
                  %v787 = vld [vmem:[%s687 + $0x308] sm:$0xff]
                  %788 = vst [vmem:[%s688 + $0x188] sm:$0xff] %v787
                  %v789 = vld [vmem:[%s687 + $0x310] sm:$0xff]
                  %790 = vst [vmem:[%s688 + $0x190] sm:$0xff] %v789
                  %v791 = vld [vmem:[%s687 + $0x318] sm:$0xff]
                  %792 = vst [vmem:[%s688 + $0x198] sm:$0xff] %v791
                  %v793 = vld [vmem:[%s687 + $0x320] sm:$0xff]
                  %794 = vst [vmem:[%s688 + $0x1a0] sm:$0xff] %v793
                  %v795 = vld [vmem:[%s687 + $0x328] sm:$0xff]
                  %796 = vst [vmem:[%s688 + $0x1a8] sm:$0xff] %v795
                  %v797 = vld [vmem:[%s687 + $0x330] sm:$0xff]
                  %798 = vst [vmem:[%s688 + $0x1b0] sm:$0xff] %v797
                  %v799 = vld [vmem:[%s687 + $0x338] sm:$0xff]
                  %800 = vst [vmem:[%s688 + $0x1b8] sm:$0xff] %v799
                  %v801 = vld [vmem:[%s687 + $0x340] sm:$0xff]
                  %802 = vst [vmem:[%s688 + $0x1c0] sm:$0xff] %v801
                  %v803 = vld [vmem:[%s687 + $0x348] sm:$0xff]
                  %804 = vst [vmem:[%s688 + $0x1c8] sm:$0xff] %v803
                  %v805 = vld [vmem:[%s687 + $0x350] sm:$0xff]
                  %806 = vst [vmem:[%s688 + $0x1d0] sm:$0xff] %v805
                  %v807 = vld [vmem:[%s687 + $0x358] sm:$0xff]
                  %808 = vst [vmem:[%s688 + $0x1d8] sm:$0xff] %v807
                  %v809 = vld [vmem:[%s687 + $0x360] sm:$0xff]
                  %810 = vst [vmem:[%s688 + $0x1e0] sm:$0xff] %v809
                  %v811 = vld [vmem:[%s687 + $0x368] sm:$0xff]
                  %812 = vst [vmem:[%s688 + $0x1e8] sm:$0xff] %v811
                  %v813 = vld [vmem:[%s687 + $0x370] sm:$0xff]
                  %814 = vst [vmem:[%s688 + $0x1f0] sm:$0xff] %v813
                  %v815 = vld [vmem:[%s687 + $0x378] sm:$0xff]
                  %816 = vst [vmem:[%s688 + $0x1f8] sm:$0xff] %v815
                  %v817 = vld [vmem:[%s687 + $0x400] sm:$0xff]
                  %818 = vst [vmem:[%s688 + $0x200] sm:$0xff] %v817
                  %v819 = vld [vmem:[%s687 + $0x408] sm:$0xff]
                  %820 = vst [vmem:[%s688 + $0x208] sm:$0xff] %v819
                  %v821 = vld [vmem:[%s687 + $0x410] sm:$0xff]
                  %822 = vst [vmem:[%s688 + $0x210] sm:$0xff] %v821
                  %v823 = vld [vmem:[%s687 + $0x418] sm:$0xff]
                  %824 = vst [vmem:[%s688 + $0x218] sm:$0xff] %v823
                  %v825 = vld [vmem:[%s687 + $0x420] sm:$0xff]
                  %826 = vst [vmem:[%s688 + $0x220] sm:$0xff] %v825
                  %v827 = vld [vmem:[%s687 + $0x428] sm:$0xff]
                  %828 = vst [vmem:[%s688 + $0x228] sm:$0xff] %v827
                  %v829 = vld [vmem:[%s687 + $0x430] sm:$0xff]
                  %830 = vst [vmem:[%s688 + $0x230] sm:$0xff] %v829
                  %v831 = vld [vmem:[%s687 + $0x438] sm:$0xff]
                  %832 = vst [vmem:[%s688 + $0x238] sm:$0xff] %v831
                  %v833 = vld [vmem:[%s687 + $0x440] sm:$0xff]
                  %834 = vst [vmem:[%s688 + $0x240] sm:$0xff] %v833
                  %v835 = vld [vmem:[%s687 + $0x448] sm:$0xff]
                  %836 = vst [vmem:[%s688 + $0x248] sm:$0xff] %v835
                  %v837 = vld [vmem:[%s687 + $0x450] sm:$0xff]
                  %838 = vst [vmem:[%s688 + $0x250] sm:$0xff] %v837
                  %v839 = vld [vmem:[%s687 + $0x458] sm:$0xff]
                  %840 = vst [vmem:[%s688 + $0x258] sm:$0xff] %v839
                  %v841 = vld [vmem:[%s687 + $0x460] sm:$0xff]
                  %842 = vst [vmem:[%s688 + $0x260] sm:$0xff] %v841
                  %v843 = vld [vmem:[%s687 + $0x468] sm:$0xff]
                  %844 = vst [vmem:[%s688 + $0x268] sm:$0xff] %v843
                  %v845 = vld [vmem:[%s687 + $0x470] sm:$0xff]
                  %846 = vst [vmem:[%s688 + $0x270] sm:$0xff] %v845
                  %v847 = vld [vmem:[%s687 + $0x478] sm:$0xff]
                  %848 = vst [vmem:[%s688 + $0x278] sm:$0xff] %v847
                  %v849 = vld [vmem:[%s687 + $0x500] sm:$0xff]
                  %850 = vst [vmem:[%s688 + $0x280] sm:$0xff] %v849
                  %v851 = vld [vmem:[%s687 + $0x508] sm:$0xff]
                  %852 = vst [vmem:[%s688 + $0x288] sm:$0xff] %v851
                  %v853 = vld [vmem:[%s687 + $0x510] sm:$0xff]
                  %854 = vst [vmem:[%s688 + $0x290] sm:$0xff] %v853
                  %v855 = vld [vmem:[%s687 + $0x518] sm:$0xff]
                  %856 = vst [vmem:[%s688 + $0x298] sm:$0xff] %v855
                  %v857 = vld [vmem:[%s687 + $0x520] sm:$0xff]
                  %858 = vst [vmem:[%s688 + $0x2a0] sm:$0xff] %v857
                  %v859 = vld [vmem:[%s687 + $0x528] sm:$0xff]
                  %860 = vst [vmem:[%s688 + $0x2a8] sm:$0xff] %v859
                  %v861 = vld [vmem:[%s687 + $0x530] sm:$0xff]
                  %862 = vst [vmem:[%s688 + $0x2b0] sm:$0xff] %v861
                  %v863 = vld [vmem:[%s687 + $0x538] sm:$0xff]
                  %864 = vst [vmem:[%s688 + $0x2b8] sm:$0xff] %v863
                  %v865 = vld [vmem:[%s687 + $0x540] sm:$0xff]
                  %866 = vst [vmem:[%s688 + $0x2c0] sm:$0xff] %v865
                  %v867 = vld [vmem:[%s687 + $0x548] sm:$0xff]
                  %868 = vst [vmem:[%s688 + $0x2c8] sm:$0xff] %v867
                  %v869 = vld [vmem:[%s687 + $0x550] sm:$0xff]
                  %870 = vst [vmem:[%s688 + $0x2d0] sm:$0xff] %v869
                  %v871 = vld [vmem:[%s687 + $0x558] sm:$0xff]
                  %872 = vst [vmem:[%s688 + $0x2d8] sm:$0xff] %v871
                  %v873 = vld [vmem:[%s687 + $0x560] sm:$0xff]
                  %874 = vst [vmem:[%s688 + $0x2e0] sm:$0xff] %v873
                  %v875 = vld [vmem:[%s687 + $0x568] sm:$0xff]
                  %876 = vst [vmem:[%s688 + $0x2e8] sm:$0xff] %v875
                  %v877 = vld [vmem:[%s687 + $0x570] sm:$0xff]
                  %878 = vst [vmem:[%s688 + $0x2f0] sm:$0xff] %v877
                  %v879 = vld [vmem:[%s687 + $0x578] sm:$0xff]
                  %880 = vst [vmem:[%s688 + $0x2f8] sm:$0xff] %v879
                  %v881 = vld [vmem:[%s687 + $0x600] sm:$0xff]
                  %882 = vst [vmem:[%s688 + $0x300] sm:$0xff] %v881
                  %v883 = vld [vmem:[%s687 + $0x608] sm:$0xff]
                  %884 = vst [vmem:[%s688 + $0x308] sm:$0xff] %v883
                  %v885 = vld [vmem:[%s687 + $0x610] sm:$0xff]
                  %886 = vst [vmem:[%s688 + $0x310] sm:$0xff] %v885
                  %v887 = vld [vmem:[%s687 + $0x618] sm:$0xff]
                  %888 = vst [vmem:[%s688 + $0x318] sm:$0xff] %v887
                  %v889 = vld [vmem:[%s687 + $0x620] sm:$0xff]
                  %890 = vst [vmem:[%s688 + $0x320] sm:$0xff] %v889
                  %v891 = vld [vmem:[%s687 + $0x628] sm:$0xff]
                  %892 = vst [vmem:[%s688 + $0x328] sm:$0xff] %v891
                  %v893 = vld [vmem:[%s687 + $0x630] sm:$0xff]
                  %894 = vst [vmem:[%s688 + $0x330] sm:$0xff] %v893
                  %v895 = vld [vmem:[%s687 + $0x638] sm:$0xff]
                  %896 = vst [vmem:[%s688 + $0x338] sm:$0xff] %v895
                  %v897 = vld [vmem:[%s687 + $0x640] sm:$0xff]
                  %898 = vst [vmem:[%s688 + $0x340] sm:$0xff] %v897
                  %v899 = vld [vmem:[%s687 + $0x648] sm:$0xff]
                  %900 = vst [vmem:[%s688 + $0x348] sm:$0xff] %v899
                  %v901 = vld [vmem:[%s687 + $0x650] sm:$0xff]
                  %902 = vst [vmem:[%s688 + $0x350] sm:$0xff] %v901
                  %v903 = vld [vmem:[%s687 + $0x658] sm:$0xff]
                  %904 = vst [vmem:[%s688 + $0x358] sm:$0xff] %v903
                  %v905 = vld [vmem:[%s687 + $0x660] sm:$0xff]
                  %906 = vst [vmem:[%s688 + $0x360] sm:$0xff] %v905
                  %v907 = vld [vmem:[%s687 + $0x668] sm:$0xff]
                  %908 = vst [vmem:[%s688 + $0x368] sm:$0xff] %v907
                  %v909 = vld [vmem:[%s687 + $0x670] sm:$0xff]
                  %910 = vst [vmem:[%s688 + $0x370] sm:$0xff] %v909
                  %v911 = vld [vmem:[%s687 + $0x678] sm:$0xff]
                  %912 = vst [vmem:[%s688 + $0x378] sm:$0xff] %v911
                  %v913 = vld [vmem:[%s687 + $0x700] sm:$0xff]
                  %914 = vst [vmem:[%s688 + $0x380] sm:$0xff] %v913
                  %v915 = vld [vmem:[%s687 + $0x708] sm:$0xff]
                  %916 = vst [vmem:[%s688 + $0x388] sm:$0xff] %v915
                  %v917 = vld [vmem:[%s687 + $0x710] sm:$0xff]
                  %918 = vst [vmem:[%s688 + $0x390] sm:$0xff] %v917
                  %v919 = vld [vmem:[%s687 + $0x718] sm:$0xff]
                  %920 = vst [vmem:[%s688 + $0x398] sm:$0xff] %v919
                  %v921 = vld [vmem:[%s687 + $0x720] sm:$0xff]
                  %922 = vst [vmem:[%s688 + $0x3a0] sm:$0xff] %v921
                  %v923 = vld [vmem:[%s687 + $0x728] sm:$0xff]
                  %924 = vst [vmem:[%s688 + $0x3a8] sm:$0xff] %v923
                  %v925 = vld [vmem:[%s687 + $0x730] sm:$0xff]
                  %926 = vst [vmem:[%s688 + $0x3b0] sm:$0xff] %v925
                  %v927 = vld [vmem:[%s687 + $0x738] sm:$0xff]
                  %928 = vst [vmem:[%s688 + $0x3b8] sm:$0xff] %v927
                  %v929 = vld [vmem:[%s687 + $0x740] sm:$0xff]
                  %930 = vst [vmem:[%s688 + $0x3c0] sm:$0xff] %v929
                  %v931 = vld [vmem:[%s687 + $0x748] sm:$0xff]
                  %932 = vst [vmem:[%s688 + $0x3c8] sm:$0xff] %v931
                  %v933 = vld [vmem:[%s687 + $0x750] sm:$0xff]
                  %934 = vst [vmem:[%s688 + $0x3d0] sm:$0xff] %v933
                  %v935 = vld [vmem:[%s687 + $0x758] sm:$0xff]
                  %936 = vst [vmem:[%s688 + $0x3d8] sm:$0xff] %v935
                  %v937 = vld [vmem:[%s687 + $0x760] sm:$0xff]
                  %938 = vst [vmem:[%s688 + $0x3e0] sm:$0xff] %v937
                  %v939 = vld [vmem:[%s687 + $0x768] sm:$0xff]
                  %940 = vst [vmem:[%s688 + $0x3e8] sm:$0xff] %v939
                  %v941 = vld [vmem:[%s687 + $0x770] sm:$0xff]
                  %942 = vst [vmem:[%s688 + $0x3f0] sm:$0xff] %v941
                  %v943 = vld [vmem:[%s687 + $0x778] sm:$0xff]
                  %944 = vst [vmem:[%s688 + $0x3f8] sm:$0xff] %v943
                $region96: #{tpu_custom_call.1} parent=90 // loop_footer
                  %s686 = sadd.s32 1, %s682
                $region97: #{tpu_custom_call.1} parent=90 // loop_footer_branch
                  %681 = sbr.rel target = $region93
                $region98: #{tpu_custom_call.1} parent=90 // loop_exit
                  _
              $region91: #{tpu_custom_call.1} parent=75 // pred_fallthru
                _
              // Predicated region
              $region99: #{tpu_custom_call.1} parent=75 // pred_check
                _
              $region100: #{tpu_custom_call.1} parent=75 // pred_check_branch
                %946 = sbr.rel target = $region102
              $region101: #{tpu_custom_call.1} parent=75 // pred_region
                _
              $region102: #{tpu_custom_call.1} parent=75 // pred_fallthru
                _
            $region76: #{tpu_custom_call.1} parent=71 // pred_fallthru
              _
            // Predicated region
            $region77: #{tpu_custom_call.1} parent=71 // pred_check
              _
            $region78: #{tpu_custom_call.1} parent=71 // pred_check_branch
              %413 = sbr.rel target = $region80
            $region79: #{tpu_custom_call.1} parent=71 // pred_region
              loop: start=0, step=1, limit=1
              $region81: #{tpu_custom_call.1} parent=79 // loop_pre_header
                _
              $region82: #{tpu_custom_call.1} parent=79 // loop_header
                %s416 = sphi 0, %s420
                %p417 = scmp.ge.s32.totalorder %s416, 1
                %s421 = sphi %s407, %s407
                %s422 = sphi %s401, %s401
              $region83: #{tpu_custom_call.1} parent=79 // loop_header_branch
                %419 = sbr.rel (%p417) target = $region87
              $region84: #{tpu_custom_call.1} parent=79 // loop_body
                %v423 = vld [vmem:[%s421] sm:$0xff]
                %424 = vst [vmem:[%s422] sm:$0xff] %v423
                %v425 = vld [vmem:[%s421 + $0x8] sm:$0xff]
                %426 = vst [vmem:[%s422 + $0x8] sm:$0xff] %v425
                %v427 = vld [vmem:[%s421 + $0x10] sm:$0xff]
                %428 = vst [vmem:[%s422 + $0x10] sm:$0xff] %v427
                %v429 = vld [vmem:[%s421 + $0x18] sm:$0xff]
                %430 = vst [vmem:[%s422 + $0x18] sm:$0xff] %v429
                %v431 = vld [vmem:[%s421 + $0x20] sm:$0xff]
                %432 = vst [vmem:[%s422 + $0x20] sm:$0xff] %v431
                %v433 = vld [vmem:[%s421 + $0x28] sm:$0xff]
                %434 = vst [vmem:[%s422 + $0x28] sm:$0xff] %v433
                %v435 = vld [vmem:[%s421 + $0x30] sm:$0xff]
                %436 = vst [vmem:[%s422 + $0x30] sm:$0xff] %v435
                %v437 = vld [vmem:[%s421 + $0x38] sm:$0xff]
                %438 = vst [vmem:[%s422 + $0x38] sm:$0xff] %v437
                %v439 = vld [vmem:[%s421 + $0x40] sm:$0xff]
                %440 = vst [vmem:[%s422 + $0x40] sm:$0xff] %v439
                %v441 = vld [vmem:[%s421 + $0x48] sm:$0xff]
                %442 = vst [vmem:[%s422 + $0x48] sm:$0xff] %v441
                %v443 = vld [vmem:[%s421 + $0x50] sm:$0xff]
                %444 = vst [vmem:[%s422 + $0x50] sm:$0xff] %v443
                %v445 = vld [vmem:[%s421 + $0x58] sm:$0xff]
                %446 = vst [vmem:[%s422 + $0x58] sm:$0xff] %v445
                %v447 = vld [vmem:[%s421 + $0x60] sm:$0xff]
                %448 = vst [vmem:[%s422 + $0x60] sm:$0xff] %v447
                %v449 = vld [vmem:[%s421 + $0x68] sm:$0xff]
                %450 = vst [vmem:[%s422 + $0x68] sm:$0xff] %v449
                %v451 = vld [vmem:[%s421 + $0x70] sm:$0xff]
                %452 = vst [vmem:[%s422 + $0x70] sm:$0xff] %v451
                %v453 = vld [vmem:[%s421 + $0x78] sm:$0xff]
                %454 = vst [vmem:[%s422 + $0x78] sm:$0xff] %v453
                %v455 = vld [vmem:[%s421 + $0x100] sm:$0xff]
                %456 = vst [vmem:[%s422 + $0x80] sm:$0xff] %v455
                %v457 = vld [vmem:[%s421 + $0x108] sm:$0xff]
                %458 = vst [vmem:[%s422 + $0x88] sm:$0xff] %v457
                %v459 = vld [vmem:[%s421 + $0x110] sm:$0xff]
                %460 = vst [vmem:[%s422 + $0x90] sm:$0xff] %v459
                %v461 = vld [vmem:[%s421 + $0x118] sm:$0xff]
                %462 = vst [vmem:[%s422 + $0x98] sm:$0xff] %v461
                %v463 = vld [vmem:[%s421 + $0x120] sm:$0xff]
                %464 = vst [vmem:[%s422 + $0xa0] sm:$0xff] %v463
                %v465 = vld [vmem:[%s421 + $0x128] sm:$0xff]
                %466 = vst [vmem:[%s422 + $0xa8] sm:$0xff] %v465
                %v467 = vld [vmem:[%s421 + $0x130] sm:$0xff]
                %468 = vst [vmem:[%s422 + $0xb0] sm:$0xff] %v467
                %v469 = vld [vmem:[%s421 + $0x138] sm:$0xff]
                %470 = vst [vmem:[%s422 + $0xb8] sm:$0xff] %v469
                %v471 = vld [vmem:[%s421 + $0x140] sm:$0xff]
                %472 = vst [vmem:[%s422 + $0xc0] sm:$0xff] %v471
                %v473 = vld [vmem:[%s421 + $0x148] sm:$0xff]
                %474 = vst [vmem:[%s422 + $0xc8] sm:$0xff] %v473
                %v475 = vld [vmem:[%s421 + $0x150] sm:$0xff]
                %476 = vst [vmem:[%s422 + $0xd0] sm:$0xff] %v475
                %v477 = vld [vmem:[%s421 + $0x158] sm:$0xff]
                %478 = vst [vmem:[%s422 + $0xd8] sm:$0xff] %v477
                %v479 = vld [vmem:[%s421 + $0x160] sm:$0xff]
                %480 = vst [vmem:[%s422 + $0xe0] sm:$0xff] %v479
                %v481 = vld [vmem:[%s421 + $0x168] sm:$0xff]
                %482 = vst [vmem:[%s422 + $0xe8] sm:$0xff] %v481
                %v483 = vld [vmem:[%s421 + $0x170] sm:$0xff]
                %484 = vst [vmem:[%s422 + $0xf0] sm:$0xff] %v483
                %v485 = vld [vmem:[%s421 + $0x178] sm:$0xff]
                %486 = vst [vmem:[%s422 + $0xf8] sm:$0xff] %v485
                %v487 = vld [vmem:[%s421 + $0x200] sm:$0xff]
                %488 = vst [vmem:[%s422 + $0x100] sm:$0xff] %v487
                %v489 = vld [vmem:[%s421 + $0x208] sm:$0xff]
                %490 = vst [vmem:[%s422 + $0x108] sm:$0xff] %v489
                %v491 = vld [vmem:[%s421 + $0x210] sm:$0xff]
                %492 = vst [vmem:[%s422 + $0x110] sm:$0xff] %v491
                %v493 = vld [vmem:[%s421 + $0x218] sm:$0xff]
                %494 = vst [vmem:[%s422 + $0x118] sm:$0xff] %v493
                %v495 = vld [vmem:[%s421 + $0x220] sm:$0xff]
                %496 = vst [vmem:[%s422 + $0x120] sm:$0xff] %v495
                %v497 = vld [vmem:[%s421 + $0x228] sm:$0xff]
                %498 = vst [vmem:[%s422 + $0x128] sm:$0xff] %v497
                %v499 = vld [vmem:[%s421 + $0x230] sm:$0xff]
                %500 = vst [vmem:[%s422 + $0x130] sm:$0xff] %v499
                %v501 = vld [vmem:[%s421 + $0x238] sm:$0xff]
                %502 = vst [vmem:[%s422 + $0x138] sm:$0xff] %v501
                %v503 = vld [vmem:[%s421 + $0x240] sm:$0xff]
                %504 = vst [vmem:[%s422 + $0x140] sm:$0xff] %v503
                %v505 = vld [vmem:[%s421 + $0x248] sm:$0xff]
                %506 = vst [vmem:[%s422 + $0x148] sm:$0xff] %v505
                %v507 = vld [vmem:[%s421 + $0x250] sm:$0xff]
                %508 = vst [vmem:[%s422 + $0x150] sm:$0xff] %v507
                %v509 = vld [vmem:[%s421 + $0x258] sm:$0xff]
                %510 = vst [vmem:[%s422 + $0x158] sm:$0xff] %v509
                %v511 = vld [vmem:[%s421 + $0x260] sm:$0xff]
                %512 = vst [vmem:[%s422 + $0x160] sm:$0xff] %v511
                %v513 = vld [vmem:[%s421 + $0x268] sm:$0xff]
                %514 = vst [vmem:[%s422 + $0x168] sm:$0xff] %v513
                %v515 = vld [vmem:[%s421 + $0x270] sm:$0xff]
                %516 = vst [vmem:[%s422 + $0x170] sm:$0xff] %v515
                %v517 = vld [vmem:[%s421 + $0x278] sm:$0xff]
                %518 = vst [vmem:[%s422 + $0x178] sm:$0xff] %v517
                %v519 = vld [vmem:[%s421 + $0x300] sm:$0xff]
                %520 = vst [vmem:[%s422 + $0x180] sm:$0xff] %v519
                %v521 = vld [vmem:[%s421 + $0x308] sm:$0xff]
                %522 = vst [vmem:[%s422 + $0x188] sm:$0xff] %v521
                %v523 = vld [vmem:[%s421 + $0x310] sm:$0xff]
                %524 = vst [vmem:[%s422 + $0x190] sm:$0xff] %v523
                %v525 = vld [vmem:[%s421 + $0x318] sm:$0xff]
                %526 = vst [vmem:[%s422 + $0x198] sm:$0xff] %v525
                %v527 = vld [vmem:[%s421 + $0x320] sm:$0xff]
                %528 = vst [vmem:[%s422 + $0x1a0] sm:$0xff] %v527
                %v529 = vld [vmem:[%s421 + $0x328] sm:$0xff]
                %530 = vst [vmem:[%s422 + $0x1a8] sm:$0xff] %v529
                %v531 = vld [vmem:[%s421 + $0x330] sm:$0xff]
                %532 = vst [vmem:[%s422 + $0x1b0] sm:$0xff] %v531
                %v533 = vld [vmem:[%s421 + $0x338] sm:$0xff]
                %534 = vst [vmem:[%s422 + $0x1b8] sm:$0xff] %v533
                %v535 = vld [vmem:[%s421 + $0x340] sm:$0xff]
                %536 = vst [vmem:[%s422 + $0x1c0] sm:$0xff] %v535
                %v537 = vld [vmem:[%s421 + $0x348] sm:$0xff]
                %538 = vst [vmem:[%s422 + $0x1c8] sm:$0xff] %v537
                %v539 = vld [vmem:[%s421 + $0x350] sm:$0xff]
                %540 = vst [vmem:[%s422 + $0x1d0] sm:$0xff] %v539
                %v541 = vld [vmem:[%s421 + $0x358] sm:$0xff]
                %542 = vst [vmem:[%s422 + $0x1d8] sm:$0xff] %v541
                %v543 = vld [vmem:[%s421 + $0x360] sm:$0xff]
                %544 = vst [vmem:[%s422 + $0x1e0] sm:$0xff] %v543
                %v545 = vld [vmem:[%s421 + $0x368] sm:$0xff]
                %546 = vst [vmem:[%s422 + $0x1e8] sm:$0xff] %v545
                %v547 = vld [vmem:[%s421 + $0x370] sm:$0xff]
                %548 = vst [vmem:[%s422 + $0x1f0] sm:$0xff] %v547
                %v549 = vld [vmem:[%s421 + $0x378] sm:$0xff]
                %550 = vst [vmem:[%s422 + $0x1f8] sm:$0xff] %v549
                %v551 = vld [vmem:[%s421 + $0x400] sm:$0xff]
                %552 = vst [vmem:[%s422 + $0x200] sm:$0xff] %v551
                %v553 = vld [vmem:[%s421 + $0x408] sm:$0xff]
                %554 = vst [vmem:[%s422 + $0x208] sm:$0xff] %v553
                %v555 = vld [vmem:[%s421 + $0x410] sm:$0xff]
                %556 = vst [vmem:[%s422 + $0x210] sm:$0xff] %v555
                %v557 = vld [vmem:[%s421 + $0x418] sm:$0xff]
                %558 = vst [vmem:[%s422 + $0x218] sm:$0xff] %v557
                %v559 = vld [vmem:[%s421 + $0x420] sm:$0xff]
                %560 = vst [vmem:[%s422 + $0x220] sm:$0xff] %v559
                %v561 = vld [vmem:[%s421 + $0x428] sm:$0xff]
                %562 = vst [vmem:[%s422 + $0x228] sm:$0xff] %v561
                %v563 = vld [vmem:[%s421 + $0x430] sm:$0xff]
                %564 = vst [vmem:[%s422 + $0x230] sm:$0xff] %v563
                %v565 = vld [vmem:[%s421 + $0x438] sm:$0xff]
                %566 = vst [vmem:[%s422 + $0x238] sm:$0xff] %v565
                %v567 = vld [vmem:[%s421 + $0x440] sm:$0xff]
                %568 = vst [vmem:[%s422 + $0x240] sm:$0xff] %v567
                %v569 = vld [vmem:[%s421 + $0x448] sm:$0xff]
                %570 = vst [vmem:[%s422 + $0x248] sm:$0xff] %v569
                %v571 = vld [vmem:[%s421 + $0x450] sm:$0xff]
                %572 = vst [vmem:[%s422 + $0x250] sm:$0xff] %v571
                %v573 = vld [vmem:[%s421 + $0x458] sm:$0xff]
                %574 = vst [vmem:[%s422 + $0x258] sm:$0xff] %v573
                %v575 = vld [vmem:[%s421 + $0x460] sm:$0xff]
                %576 = vst [vmem:[%s422 + $0x260] sm:$0xff] %v575
                %v577 = vld [vmem:[%s421 + $0x468] sm:$0xff]
                %578 = vst [vmem:[%s422 + $0x268] sm:$0xff] %v577
                %v579 = vld [vmem:[%s421 + $0x470] sm:$0xff]
                %580 = vst [vmem:[%s422 + $0x270] sm:$0xff] %v579
                %v581 = vld [vmem:[%s421 + $0x478] sm:$0xff]
                %582 = vst [vmem:[%s422 + $0x278] sm:$0xff] %v581
                %v583 = vld [vmem:[%s421 + $0x500] sm:$0xff]
                %584 = vst [vmem:[%s422 + $0x280] sm:$0xff] %v583
                %v585 = vld [vmem:[%s421 + $0x508] sm:$0xff]
                %586 = vst [vmem:[%s422 + $0x288] sm:$0xff] %v585
                %v587 = vld [vmem:[%s421 + $0x510] sm:$0xff]
                %588 = vst [vmem:[%s422 + $0x290] sm:$0xff] %v587
                %v589 = vld [vmem:[%s421 + $0x518] sm:$0xff]
                %590 = vst [vmem:[%s422 + $0x298] sm:$0xff] %v589
                %v591 = vld [vmem:[%s421 + $0x520] sm:$0xff]
                %592 = vst [vmem:[%s422 + $0x2a0] sm:$0xff] %v591
                %v593 = vld [vmem:[%s421 + $0x528] sm:$0xff]
                %594 = vst [vmem:[%s422 + $0x2a8] sm:$0xff] %v593
                %v595 = vld [vmem:[%s421 + $0x530] sm:$0xff]
                %596 = vst [vmem:[%s422 + $0x2b0] sm:$0xff] %v595
                %v597 = vld [vmem:[%s421 + $0x538] sm:$0xff]
                %598 = vst [vmem:[%s422 + $0x2b8] sm:$0xff] %v597
                %v599 = vld [vmem:[%s421 + $0x540] sm:$0xff]
                %600 = vst [vmem:[%s422 + $0x2c0] sm:$0xff] %v599
                %v601 = vld [vmem:[%s421 + $0x548] sm:$0xff]
                %602 = vst [vmem:[%s422 + $0x2c8] sm:$0xff] %v601
                %v603 = vld [vmem:[%s421 + $0x550] sm:$0xff]
                %604 = vst [vmem:[%s422 + $0x2d0] sm:$0xff] %v603
                %v605 = vld [vmem:[%s421 + $0x558] sm:$0xff]
                %606 = vst [vmem:[%s422 + $0x2d8] sm:$0xff] %v605
                %v607 = vld [vmem:[%s421 + $0x560] sm:$0xff]
                %608 = vst [vmem:[%s422 + $0x2e0] sm:$0xff] %v607
                %v609 = vld [vmem:[%s421 + $0x568] sm:$0xff]
                %610 = vst [vmem:[%s422 + $0x2e8] sm:$0xff] %v609
                %v611 = vld [vmem:[%s421 + $0x570] sm:$0xff]
                %612 = vst [vmem:[%s422 + $0x2f0] sm:$0xff] %v611
                %v613 = vld [vmem:[%s421 + $0x578] sm:$0xff]
                %614 = vst [vmem:[%s422 + $0x2f8] sm:$0xff] %v613
                %v615 = vld [vmem:[%s421 + $0x600] sm:$0xff]
                %616 = vst [vmem:[%s422 + $0x300] sm:$0xff] %v615
                %v617 = vld [vmem:[%s421 + $0x608] sm:$0xff]
                %618 = vst [vmem:[%s422 + $0x308] sm:$0xff] %v617
                %v619 = vld [vmem:[%s421 + $0x610] sm:$0xff]
                %620 = vst [vmem:[%s422 + $0x310] sm:$0xff] %v619
                %v621 = vld [vmem:[%s421 + $0x618] sm:$0xff]
                %622 = vst [vmem:[%s422 + $0x318] sm:$0xff] %v621
                %v623 = vld [vmem:[%s421 + $0x620] sm:$0xff]
                %624 = vst [vmem:[%s422 + $0x320] sm:$0xff] %v623
                %v625 = vld [vmem:[%s421 + $0x628] sm:$0xff]
                %626 = vst [vmem:[%s422 + $0x328] sm:$0xff] %v625
                %v627 = vld [vmem:[%s421 + $0x630] sm:$0xff]
                %628 = vst [vmem:[%s422 + $0x330] sm:$0xff] %v627
                %v629 = vld [vmem:[%s421 + $0x638] sm:$0xff]
                %630 = vst [vmem:[%s422 + $0x338] sm:$0xff] %v629
                %v631 = vld [vmem:[%s421 + $0x640] sm:$0xff]
                %632 = vst [vmem:[%s422 + $0x340] sm:$0xff] %v631
                %v633 = vld [vmem:[%s421 + $0x648] sm:$0xff]
                %634 = vst [vmem:[%s422 + $0x348] sm:$0xff] %v633
                %v635 = vld [vmem:[%s421 + $0x650] sm:$0xff]
                %636 = vst [vmem:[%s422 + $0x350] sm:$0xff] %v635
                %v637 = vld [vmem:[%s421 + $0x658] sm:$0xff]
                %638 = vst [vmem:[%s422 + $0x358] sm:$0xff] %v637
                %v639 = vld [vmem:[%s421 + $0x660] sm:$0xff]
                %640 = vst [vmem:[%s422 + $0x360] sm:$0xff] %v639
                %v641 = vld [vmem:[%s421 + $0x668] sm:$0xff]
                %642 = vst [vmem:[%s422 + $0x368] sm:$0xff] %v641
                %v643 = vld [vmem:[%s421 + $0x670] sm:$0xff]
                %644 = vst [vmem:[%s422 + $0x370] sm:$0xff] %v643
                %v645 = vld [vmem:[%s421 + $0x678] sm:$0xff]
                %646 = vst [vmem:[%s422 + $0x378] sm:$0xff] %v645
                %v647 = vld [vmem:[%s421 + $0x700] sm:$0xff]
                %648 = vst [vmem:[%s422 + $0x380] sm:$0xff] %v647
                %v649 = vld [vmem:[%s421 + $0x708] sm:$0xff]
                %650 = vst [vmem:[%s422 + $0x388] sm:$0xff] %v649
                %v651 = vld [vmem:[%s421 + $0x710] sm:$0xff]
                %652 = vst [vmem:[%s422 + $0x390] sm:$0xff] %v651
                %v653 = vld [vmem:[%s421 + $0x718] sm:$0xff]
                %654 = vst [vmem:[%s422 + $0x398] sm:$0xff] %v653
                %v655 = vld [vmem:[%s421 + $0x720] sm:$0xff]
                %656 = vst [vmem:[%s422 + $0x3a0] sm:$0xff] %v655
                %v657 = vld [vmem:[%s421 + $0x728] sm:$0xff]
                %658 = vst [vmem:[%s422 + $0x3a8] sm:$0xff] %v657
                %v659 = vld [vmem:[%s421 + $0x730] sm:$0xff]
                %660 = vst [vmem:[%s422 + $0x3b0] sm:$0xff] %v659
                %v661 = vld [vmem:[%s421 + $0x738] sm:$0xff]
                %662 = vst [vmem:[%s422 + $0x3b8] sm:$0xff] %v661
                %v663 = vld [vmem:[%s421 + $0x740] sm:$0xff]
                %664 = vst [vmem:[%s422 + $0x3c0] sm:$0xff] %v663
                %v665 = vld [vmem:[%s421 + $0x748] sm:$0xff]
                %666 = vst [vmem:[%s422 + $0x3c8] sm:$0xff] %v665
                %v667 = vld [vmem:[%s421 + $0x750] sm:$0xff]
                %668 = vst [vmem:[%s422 + $0x3d0] sm:$0xff] %v667
                %v669 = vld [vmem:[%s421 + $0x758] sm:$0xff]
                %670 = vst [vmem:[%s422 + $0x3d8] sm:$0xff] %v669
                %v671 = vld [vmem:[%s421 + $0x760] sm:$0xff]
                %672 = vst [vmem:[%s422 + $0x3e0] sm:$0xff] %v671
                %v673 = vld [vmem:[%s421 + $0x768] sm:$0xff]
                %674 = vst [vmem:[%s422 + $0x3e8] sm:$0xff] %v673
                %v675 = vld [vmem:[%s421 + $0x770] sm:$0xff]
                %676 = vst [vmem:[%s422 + $0x3f0] sm:$0xff] %v675
                %v677 = vld [vmem:[%s421 + $0x778] sm:$0xff]
                %678 = vst [vmem:[%s422 + $0x3f8] sm:$0xff] %v677
              $region85: #{tpu_custom_call.1} parent=79 // loop_footer
                %s420 = sadd.s32 1, %s416
              $region86: #{tpu_custom_call.1} parent=79 // loop_footer_branch
                %415 = sbr.rel target = $region82
              $region87: #{tpu_custom_call.1} parent=79 // loop_exit
                _
            $region80: #{tpu_custom_call.1} parent=71 // pred_fallthru
              _
          $region72: #{tpu_custom_call.1} parent=67 // pred_fallthru
            _
          %947 = vnop
        $region68: #{tpu_custom_call.1} parent=63 // pred_fallthru
          _
      $region64: #{tpu_custom_call.1} parent=5 // pred_fallthru
        _
      %p948 = scmp.le.s32.totalorder 1, %s22
      %p949 = scmp.lt.s32.totalorder %s22, 5
      %p950 = pnand %p948, %p949
      %p951 = pneg %p950
      // Predicated region
      $region103: #{tpu_custom_call.1} parent=5 // pred_check
        _
      $region104: #{tpu_custom_call.1} parent=5 // pred_check_branch
        %953 = sbr.rel (%p950) target = $region106
      $region105: #{tpu_custom_call.1} parent=5 // pred_region
        %s954 = ssub.s32 %s22, 1
        %s955 = sand.u32 %s49, 1
        %s956 = sand.u32 %s49, 1
        %s957 = smul.addr %s956, 1024
        %s958 = scalar_lea.vmem [#allocation3], %s957
        // Predicated region
        $region107: #{tpu_custom_call.1} parent=105 // pred_check
          %p959 = pneg %p62
        $region108: #{tpu_custom_call.1} parent=105 // pred_check_branch
          %961 = sbr.rel (%p959) target = $region110
        $region109: #{tpu_custom_call.1} parent=105 // pred_region
          _
        $region110: #{tpu_custom_call.1} parent=105 // pred_fallthru
          _
        %s962 = sand.u32 %s49, 1
        %s963 = sand.u32 %s49, 1
        %s964 = smul.addr %s963, 1024
        %s965 = scalar_lea.vmem [#allocation3], %s964
        %p966 = pneg %p62
        %p967 = pneg %p59
        %p968 = pneg %p83
        %p969 = pneg %p80
        %p970 = pneg %p104
        %p971 = pneg %p101
        %p972 = pneg %p125
        %p973 = pneg %p122
        %p974 = pneg %p146
        %p975 = pneg %p143
        %p976 = pneg %p167
        %p977 = pneg %p164
        %p978 = pneg %p188
        %p979 = pneg %p185
        %p980 = pneg %p209
        %p981 = pneg %p206
        %p982 = pneg %p230
        %p983 = pneg %p227
        %p984 = pneg %p251
        %p985 = pneg %p248
        %p986 = pneg %p272
        %p987 = pneg %p269
        %p988 = pneg %p293
        %p989 = pneg %p290
        %p990 = pneg %p314
        %p991 = pneg %p311
        %p992 = pneg %p340
        %p993 = pneg %p337
        %s994 = sand.u32 %s327, 1
        %s995 = scalar_lea.sflag [#allocation5], %s994
        %s996 = sand.u32 %s327, 1
        %s997 = smul.addr %s996, 8
        %s998 = scalar_lea.vmem [#allocation4], %s997
        %s999 = smul.u32 8, %s31
        %s1000 = smul.u32 16, %s32
        %p1002 = scmp.eq.s32.totalorder %s32, 0
        // Predicated region
        $region111: #{tpu_custom_call.1} parent=105 // pred_check
          %p1003 = pneg %p1002
        $region112: #{tpu_custom_call.1} parent=105 // pred_check_branch
          %1005 = sbr.rel (%p1003) target = $region114
        $region113: #{tpu_custom_call.1} parent=105 // pred_region
          %1006 = vst [vmem:[#allocation2] sm:$0xff] -inf
          %1007 = vst [vmem:[#allocation2 + $0x8] sm:$0xff] -inf
        $region114: #{tpu_custom_call.1} parent=105 // pred_fallthru
          _
        %v1008 = vld [vmem:[%s958] sm:$0xff]
        %v1009 = vld [vmem:[%s958 + $0x8] sm:$0xff]
        %v1010 = vld [vmem:[%s958 + $0x10] sm:$0xff]
        %v1011 = vld [vmem:[%s958 + $0x18] sm:$0xff]
        %v1012 = vld [vmem:[%s958 + $0x20] sm:$0xff]
        %v1013 = vld [vmem:[%s958 + $0x28] sm:$0xff]
        %v1014 = vld [vmem:[%s958 + $0x30] sm:$0xff]
        %v1015 = vld [vmem:[%s958 + $0x38] sm:$0xff]
        %v1016 = vld [vmem:[%s958 + $0x40] sm:$0xff]
        %v1017 = vld [vmem:[%s958 + $0x48] sm:$0xff]
        %v1018 = vld [vmem:[%s958 + $0x50] sm:$0xff]
        %v1019 = vld [vmem:[%s958 + $0x58] sm:$0xff]
        %v1020 = vld [vmem:[%s958 + $0x60] sm:$0xff]
        %v1021 = vld [vmem:[%s958 + $0x68] sm:$0xff]
        %v1022 = vld [vmem:[%s958 + $0x70] sm:$0xff]
        %v1023 = vld [vmem:[%s958 + $0x78] sm:$0xff]
        %v1024 = vld [vmem:[%s958 + $0x80] sm:$0xff]
        %v1025 = vld [vmem:[%s958 + $0x88] sm:$0xff]
        %v1026 = vld [vmem:[%s958 + $0x90] sm:$0xff]
        %v1027 = vld [vmem:[%s958 + $0x98] sm:$0xff]
        %v1028 = vld [vmem:[%s958 + $0xa0] sm:$0xff]
        %v1029 = vld [vmem:[%s958 + $0xa8] sm:$0xff]
        %v1030 = vld [vmem:[%s958 + $0xb0] sm:$0xff]
        %v1031 = vld [vmem:[%s958 + $0xb8] sm:$0xff]
        %v1032 = vld [vmem:[%s958 + $0xc0] sm:$0xff]
        %v1033 = vld [vmem:[%s958 + $0xc8] sm:$0xff]
        %v1034 = vld [vmem:[%s958 + $0xd0] sm:$0xff]
        %v1035 = vld [vmem:[%s958 + $0xd8] sm:$0xff]
        %v1036 = vld [vmem:[%s958 + $0xe0] sm:$0xff]
        %v1037 = vld [vmem:[%s958 + $0xe8] sm:$0xff]
        %v1038 = vld [vmem:[%s958 + $0xf0] sm:$0xff]
        %v1039 = vld [vmem:[%s958 + $0xf8] sm:$0xff]
        %v1040 = vld [vmem:[%s958 + $0x100] sm:$0xff]
        %v1041 = vld [vmem:[%s958 + $0x108] sm:$0xff]
        %v1042 = vld [vmem:[%s958 + $0x110] sm:$0xff]
        %v1043 = vld [vmem:[%s958 + $0x118] sm:$0xff]
        %v1044 = vld [vmem:[%s958 + $0x120] sm:$0xff]
        %v1045 = vld [vmem:[%s958 + $0x128] sm:$0xff]
        %v1046 = vld [vmem:[%s958 + $0x130] sm:$0xff]
        %v1047 = vld [vmem:[%s958 + $0x138] sm:$0xff]
        %v1048 = vld [vmem:[%s958 + $0x140] sm:$0xff]
        %v1049 = vld [vmem:[%s958 + $0x148] sm:$0xff]
        %v1050 = vld [vmem:[%s958 + $0x150] sm:$0xff]
        %v1051 = vld [vmem:[%s958 + $0x158] sm:$0xff]
        %v1052 = vld [vmem:[%s958 + $0x160] sm:$0xff]
        %v1053 = vld [vmem:[%s958 + $0x168] sm:$0xff]
        %v1054 = vld [vmem:[%s958 + $0x170] sm:$0xff]
        %v1055 = vld [vmem:[%s958 + $0x178] sm:$0xff]
        %v1056 = vld [vmem:[%s958 + $0x180] sm:$0xff]
        %v1057 = vld [vmem:[%s958 + $0x188] sm:$0xff]
        %v1058 = vld [vmem:[%s958 + $0x190] sm:$0xff]
        %v1059 = vld [vmem:[%s958 + $0x198] sm:$0xff]
        %v1060 = vld [vmem:[%s958 + $0x1a0] sm:$0xff]
        %v1061 = vld [vmem:[%s958 + $0x1a8] sm:$0xff]
        %v1062 = vld [vmem:[%s958 + $0x1b0] sm:$0xff]
        %v1063 = vld [vmem:[%s958 + $0x1b8] sm:$0xff]
        %v1064 = vld [vmem:[%s958 + $0x1c0] sm:$0xff]
        %v1065 = vld [vmem:[%s958 + $0x1c8] sm:$0xff]
        %v1066 = vld [vmem:[%s958 + $0x1d0] sm:$0xff]
        %v1067 = vld [vmem:[%s958 + $0x1d8] sm:$0xff]
        %v1068 = vld [vmem:[%s958 + $0x1e0] sm:$0xff]
        %v1069 = vld [vmem:[%s958 + $0x1e8] sm:$0xff]
        %v1070 = vld [vmem:[%s958 + $0x1f0] sm:$0xff]
        %v1071 = vld [vmem:[%s958 + $0x1f8] sm:$0xff]
        %v1072 = vld [vmem:[%s958 + $0x200] sm:$0xff]
        %v1073 = vld [vmem:[%s958 + $0x208] sm:$0xff]
        %v1074 = vld [vmem:[%s958 + $0x210] sm:$0xff]
        %v1075 = vld [vmem:[%s958 + $0x218] sm:$0xff]
        %v1076 = vld [vmem:[%s958 + $0x220] sm:$0xff]
        %v1077 = vld [vmem:[%s958 + $0x228] sm:$0xff]
        %v1078 = vld [vmem:[%s958 + $0x230] sm:$0xff]
        %v1079 = vld [vmem:[%s958 + $0x238] sm:$0xff]
        %v1080 = vld [vmem:[%s958 + $0x240] sm:$0xff]
        %v1081 = vld [vmem:[%s958 + $0x248] sm:$0xff]
        %v1082 = vld [vmem:[%s958 + $0x250] sm:$0xff]
        %v1083 = vld [vmem:[%s958 + $0x258] sm:$0xff]
        %v1084 = vld [vmem:[%s958 + $0x260] sm:$0xff]
        %v1085 = vld [vmem:[%s958 + $0x268] sm:$0xff]
        %v1086 = vld [vmem:[%s958 + $0x270] sm:$0xff]
        %v1087 = vld [vmem:[%s958 + $0x278] sm:$0xff]
        %v1088 = vld [vmem:[%s958 + $0x280] sm:$0xff]
        %v1089 = vld [vmem:[%s958 + $0x288] sm:$0xff]
        %v1090 = vld [vmem:[%s958 + $0x290] sm:$0xff]
        %v1091 = vld [vmem:[%s958 + $0x298] sm:$0xff]
        %v1092 = vld [vmem:[%s958 + $0x2a0] sm:$0xff]
        %v1093 = vld [vmem:[%s958 + $0x2a8] sm:$0xff]
        %v1094 = vld [vmem:[%s958 + $0x2b0] sm:$0xff]
        %v1095 = vld [vmem:[%s958 + $0x2b8] sm:$0xff]
        %v1096 = vld [vmem:[%s958 + $0x2c0] sm:$0xff]
        %v1097 = vld [vmem:[%s958 + $0x2c8] sm:$0xff]
        %v1098 = vld [vmem:[%s958 + $0x2d0] sm:$0xff]
        %v1099 = vld [vmem:[%s958 + $0x2d8] sm:$0xff]
        %v1100 = vld [vmem:[%s958 + $0x2e0] sm:$0xff]
        %v1101 = vld [vmem:[%s958 + $0x2e8] sm:$0xff]
        %v1102 = vld [vmem:[%s958 + $0x2f0] sm:$0xff]
        %v1103 = vld [vmem:[%s958 + $0x2f8] sm:$0xff]
        %v1104 = vld [vmem:[%s958 + $0x300] sm:$0xff]
        %v1105 = vld [vmem:[%s958 + $0x308] sm:$0xff]
        %v1106 = vld [vmem:[%s958 + $0x310] sm:$0xff]
        %v1107 = vld [vmem:[%s958 + $0x318] sm:$0xff]
        %v1108 = vld [vmem:[%s958 + $0x320] sm:$0xff]
        %v1109 = vld [vmem:[%s958 + $0x328] sm:$0xff]
        %v1110 = vld [vmem:[%s958 + $0x330] sm:$0xff]
        %v1111 = vld [vmem:[%s958 + $0x338] sm:$0xff]
        %v1112 = vld [vmem:[%s958 + $0x340] sm:$0xff]
        %v1113 = vld [vmem:[%s958 + $0x348] sm:$0xff]
        %v1114 = vld [vmem:[%s958 + $0x350] sm:$0xff]
        %v1115 = vld [vmem:[%s958 + $0x358] sm:$0xff]
        %v1116 = vld [vmem:[%s958 + $0x360] sm:$0xff]
        %v1117 = vld [vmem:[%s958 + $0x368] sm:$0xff]
        %v1118 = vld [vmem:[%s958 + $0x370] sm:$0xff]
        %v1119 = vld [vmem:[%s958 + $0x378] sm:$0xff]
        %v1120 = vld [vmem:[%s958 + $0x380] sm:$0xff]
        %v1121 = vld [vmem:[%s958 + $0x388] sm:$0xff]
        %v1122 = vld [vmem:[%s958 + $0x390] sm:$0xff]
        %v1123 = vld [vmem:[%s958 + $0x398] sm:$0xff]
        %v1124 = vld [vmem:[%s958 + $0x3a0] sm:$0xff]
        %v1125 = vld [vmem:[%s958 + $0x3a8] sm:$0xff]
        %v1126 = vld [vmem:[%s958 + $0x3b0] sm:$0xff]
        %v1127 = vld [vmem:[%s958 + $0x3b8] sm:$0xff]
        %v1128 = vld [vmem:[%s958 + $0x3c0] sm:$0xff]
        %v1129 = vld [vmem:[%s958 + $0x3c8] sm:$0xff]
        %v1130 = vld [vmem:[%s958 + $0x3d0] sm:$0xff]
        %v1131 = vld [vmem:[%s958 + $0x3d8] sm:$0xff]
        %v1132 = vld [vmem:[%s958 + $0x3e0] sm:$0xff]
        %v1133 = vld [vmem:[%s958 + $0x3e8] sm:$0xff]
        %v1134 = vld [vmem:[%s958 + $0x3f0] sm:$0xff]
        %v1135 = vld [vmem:[%s958 + $0x3f8] sm:$0xff]
        %v1136 = vld [vmem:[%s1] sm:$0x7]
        %1138 = vset.pattern.permute.xlu0 0
        %1139 = vperm.xlu0 %1138, %v1008
        %v1140 = vpop.permute.xlu0 %1139
        %1143 = vset.pattern.permute.xlu0 0
        %1144 = vperm.xlu0 %1143, %v1009
        %v1145 = vpop.permute.xlu0 %1144
        %1148 = vset.pattern.permute.xlu0 0
        %1149 = vperm.xlu0 %1148, %v1010
        %v1150 = vpop.permute.xlu0 %1149
        %1153 = vset.pattern.permute.xlu0 0
        %1154 = vperm.xlu0 %1153, %v1011
        %v1155 = vpop.permute.xlu0 %1154
        %1158 = vset.pattern.permute.xlu0 0
        %1159 = vperm.xlu0 %1158, %v1012
        %v1160 = vpop.permute.xlu0 %1159
        %1163 = vset.pattern.permute.xlu0 0
        %1164 = vperm.xlu0 %1163, %v1013
        %v1165 = vpop.permute.xlu0 %1164
        %1168 = vset.pattern.permute.xlu0 0
        %1169 = vperm.xlu0 %1168, %v1014
        %v1170 = vpop.permute.xlu0 %1169
        %1173 = vset.pattern.permute.xlu0 0
        %1174 = vperm.xlu0 %1173, %v1015
        %v1175 = vpop.permute.xlu0 %1174
        %1178 = vset.pattern.permute.xlu0 0
        %1179 = vperm.xlu0 %1178, %v1016
        %v1180 = vpop.permute.xlu0 %1179
        %1183 = vset.pattern.permute.xlu0 0
        %1184 = vperm.xlu0 %1183, %v1017
        %v1185 = vpop.permute.xlu0 %1184
        %1188 = vset.pattern.permute.xlu0 0
        %1189 = vperm.xlu0 %1188, %v1018
        %v1190 = vpop.permute.xlu0 %1189
        %1193 = vset.pattern.permute.xlu0 0
        %1194 = vperm.xlu0 %1193, %v1019
        %v1195 = vpop.permute.xlu0 %1194
        %1198 = vset.pattern.permute.xlu0 0
        %1199 = vperm.xlu0 %1198, %v1020
        %v1200 = vpop.permute.xlu0 %1199
        %1203 = vset.pattern.permute.xlu0 0
        %1204 = vperm.xlu0 %1203, %v1021
        %v1205 = vpop.permute.xlu0 %1204
        %1208 = vset.pattern.permute.xlu0 0
        %1209 = vperm.xlu0 %1208, %v1022
        %v1210 = vpop.permute.xlu0 %1209
        %1213 = vset.pattern.permute.xlu0 0
        %1214 = vperm.xlu0 %1213, %v1023
        %v1215 = vpop.permute.xlu0 %1214
        %1218 = vset.pattern.permute.xlu0 0
        %1219 = vperm.xlu0 %1218, %v1024
        %v1220 = vpop.permute.xlu0 %1219
        %1223 = vset.pattern.permute.xlu0 0
        %1224 = vperm.xlu0 %1223, %v1025
        %v1225 = vpop.permute.xlu0 %1224
        %1228 = vset.pattern.permute.xlu0 0
        %1229 = vperm.xlu0 %1228, %v1026
        %v1230 = vpop.permute.xlu0 %1229
        %1233 = vset.pattern.permute.xlu0 0
        %1234 = vperm.xlu0 %1233, %v1027
        %v1235 = vpop.permute.xlu0 %1234
        %1238 = vset.pattern.permute.xlu0 0
        %1239 = vperm.xlu0 %1238, %v1028
        %v1240 = vpop.permute.xlu0 %1239
        %1243 = vset.pattern.permute.xlu0 0
        %1244 = vperm.xlu0 %1243, %v1029
        %v1245 = vpop.permute.xlu0 %1244
        %1248 = vset.pattern.permute.xlu0 0
        %1249 = vperm.xlu0 %1248, %v1030
        %v1250 = vpop.permute.xlu0 %1249
        %1253 = vset.pattern.permute.xlu0 0
        %1254 = vperm.xlu0 %1253, %v1031
        %v1255 = vpop.permute.xlu0 %1254
        %1258 = vset.pattern.permute.xlu0 0
        %1259 = vperm.xlu0 %1258, %v1032
        %v1260 = vpop.permute.xlu0 %1259
        %1263 = vset.pattern.permute.xlu0 0
        %1264 = vperm.xlu0 %1263, %v1033
        %v1265 = vpop.permute.xlu0 %1264
        %1268 = vset.pattern.permute.xlu0 0
        %1269 = vperm.xlu0 %1268, %v1034
        %v1270 = vpop.permute.xlu0 %1269
        %1273 = vset.pattern.permute.xlu0 0
        %1274 = vperm.xlu0 %1273, %v1035
        %v1275 = vpop.permute.xlu0 %1274
        %1278 = vset.pattern.permute.xlu0 0
        %1279 = vperm.xlu0 %1278, %v1036
        %v1280 = vpop.permute.xlu0 %1279
        %1283 = vset.pattern.permute.xlu0 0
        %1284 = vperm.xlu0 %1283, %v1037
        %v1285 = vpop.permute.xlu0 %1284
        %1288 = vset.pattern.permute.xlu0 0
        %1289 = vperm.xlu0 %1288, %v1038
        %v1290 = vpop.permute.xlu0 %1289
        %1293 = vset.pattern.permute.xlu0 0
        %1294 = vperm.xlu0 %1293, %v1039
        %v1295 = vpop.permute.xlu0 %1294
        %1298 = vset.pattern.permute.xlu0 0
        %1299 = vperm.xlu0 %1298, %v1040
        %v1300 = vpop.permute.xlu0 %1299
        %1303 = vset.pattern.permute.xlu0 0
        %1304 = vperm.xlu0 %1303, %v1041
        %v1305 = vpop.permute.xlu0 %1304
        %1308 = vset.pattern.permute.xlu0 0
        %1309 = vperm.xlu0 %1308, %v1042
        %v1310 = vpop.permute.xlu0 %1309
        %1313 = vset.pattern.permute.xlu0 0
        %1314 = vperm.xlu0 %1313, %v1043
        %v1315 = vpop.permute.xlu0 %1314
        %1318 = vset.pattern.permute.xlu0 0
        %1319 = vperm.xlu0 %1318, %v1044
        %v1320 = vpop.permute.xlu0 %1319
        %1323 = vset.pattern.permute.xlu0 0
        %1324 = vperm.xlu0 %1323, %v1045
        %v1325 = vpop.permute.xlu0 %1324
        %1328 = vset.pattern.permute.xlu0 0
        %1329 = vperm.xlu0 %1328, %v1046
        %v1330 = vpop.permute.xlu0 %1329
        %1333 = vset.pattern.permute.xlu0 0
        %1334 = vperm.xlu0 %1333, %v1047
        %v1335 = vpop.permute.xlu0 %1334
        %1338 = vset.pattern.permute.xlu0 0
        %1339 = vperm.xlu0 %1338, %v1048
        %v1340 = vpop.permute.xlu0 %1339
        %1343 = vset.pattern.permute.xlu0 0
        %1344 = vperm.xlu0 %1343, %v1049
        %v1345 = vpop.permute.xlu0 %1344
        %1348 = vset.pattern.permute.xlu0 0
        %1349 = vperm.xlu0 %1348, %v1050
        %v1350 = vpop.permute.xlu0 %1349
        %1353 = vset.pattern.permute.xlu0 0
        %1354 = vperm.xlu0 %1353, %v1051
        %v1355 = vpop.permute.xlu0 %1354
        %1358 = vset.pattern.permute.xlu0 0
        %1359 = vperm.xlu0 %1358, %v1052
        %v1360 = vpop.permute.xlu0 %1359
        %1363 = vset.pattern.permute.xlu0 0
        %1364 = vperm.xlu0 %1363, %v1053
        %v1365 = vpop.permute.xlu0 %1364
        %1368 = vset.pattern.permute.xlu0 0
        %1369 = vperm.xlu0 %1368, %v1054
        %v1370 = vpop.permute.xlu0 %1369
        %1373 = vset.pattern.permute.xlu0 0
        %1374 = vperm.xlu0 %1373, %v1055
        %v1375 = vpop.permute.xlu0 %1374
        %1378 = vset.pattern.permute.xlu0 0
        %1379 = vperm.xlu0 %1378, %v1056
        %v1380 = vpop.permute.xlu0 %1379
        %1383 = vset.pattern.permute.xlu0 0
        %1384 = vperm.xlu0 %1383, %v1057
        %v1385 = vpop.permute.xlu0 %1384
        %1388 = vset.pattern.permute.xlu0 0
        %1389 = vperm.xlu0 %1388, %v1058
        %v1390 = vpop.permute.xlu0 %1389
        %1393 = vset.pattern.permute.xlu0 0
        %1394 = vperm.xlu0 %1393, %v1059
        %v1395 = vpop.permute.xlu0 %1394
        %1398 = vset.pattern.permute.xlu0 0
        %1399 = vperm.xlu0 %1398, %v1060
        %v1400 = vpop.permute.xlu0 %1399
        %1403 = vset.pattern.permute.xlu0 0
        %1404 = vperm.xlu0 %1403, %v1061
        %v1405 = vpop.permute.xlu0 %1404
        %1408 = vset.pattern.permute.xlu0 0
        %1409 = vperm.xlu0 %1408, %v1062
        %v1410 = vpop.permute.xlu0 %1409
        %1413 = vset.pattern.permute.xlu0 0
        %1414 = vperm.xlu0 %1413, %v1063
        %v1415 = vpop.permute.xlu0 %1414
        %1418 = vset.pattern.permute.xlu0 0
        %1419 = vperm.xlu0 %1418, %v1064
        %v1420 = vpop.permute.xlu0 %1419
        %1423 = vset.pattern.permute.xlu0 0
        %1424 = vperm.xlu0 %1423, %v1065
        %v1425 = vpop.permute.xlu0 %1424
        %1428 = vset.pattern.permute.xlu0 0
        %1429 = vperm.xlu0 %1428, %v1066
        %v1430 = vpop.permute.xlu0 %1429
        %1433 = vset.pattern.permute.xlu0 0
        %1434 = vperm.xlu0 %1433, %v1067
        %v1435 = vpop.permute.xlu0 %1434
        %1438 = vset.pattern.permute.xlu0 0
        %1439 = vperm.xlu0 %1438, %v1068
        %v1440 = vpop.permute.xlu0 %1439
        %1443 = vset.pattern.permute.xlu0 0
        %1444 = vperm.xlu0 %1443, %v1069
        %v1445 = vpop.permute.xlu0 %1444
        %1448 = vset.pattern.permute.xlu0 0
        %1449 = vperm.xlu0 %1448, %v1070
        %v1450 = vpop.permute.xlu0 %1449
        %1453 = vset.pattern.permute.xlu0 0
        %1454 = vperm.xlu0 %1453, %v1071
        %v1455 = vpop.permute.xlu0 %1454
        %1458 = vset.pattern.permute.xlu0 0
        %1459 = vperm.xlu0 %1458, %v1072
        %v1460 = vpop.permute.xlu0 %1459
        %1463 = vset.pattern.permute.xlu0 0
        %1464 = vperm.xlu0 %1463, %v1073
        %v1465 = vpop.permute.xlu0 %1464
        %1468 = vset.pattern.permute.xlu0 0
        %1469 = vperm.xlu0 %1468, %v1074
        %v1470 = vpop.permute.xlu0 %1469
        %1473 = vset.pattern.permute.xlu0 0
        %1474 = vperm.xlu0 %1473, %v1075
        %v1475 = vpop.permute.xlu0 %1474
        %1478 = vset.pattern.permute.xlu0 0
        %1479 = vperm.xlu0 %1478, %v1076
        %v1480 = vpop.permute.xlu0 %1479
        %1483 = vset.pattern.permute.xlu0 0
        %1484 = vperm.xlu0 %1483, %v1077
        %v1485 = vpop.permute.xlu0 %1484
        %1488 = vset.pattern.permute.xlu0 0
        %1489 = vperm.xlu0 %1488, %v1078
        %v1490 = vpop.permute.xlu0 %1489
        %1493 = vset.pattern.permute.xlu0 0
        %1494 = vperm.xlu0 %1493, %v1079
        %v1495 = vpop.permute.xlu0 %1494
        %1498 = vset.pattern.permute.xlu0 0
        %1499 = vperm.xlu0 %1498, %v1080
        %v1500 = vpop.permute.xlu0 %1499
        %1503 = vset.pattern.permute.xlu0 0
        %1504 = vperm.xlu0 %1503, %v1081
        %v1505 = vpop.permute.xlu0 %1504
        %1508 = vset.pattern.permute.xlu0 0
        %1509 = vperm.xlu0 %1508, %v1082
        %v1510 = vpop.permute.xlu0 %1509
        %1513 = vset.pattern.permute.xlu0 0
        %1514 = vperm.xlu0 %1513, %v1083
        %v1515 = vpop.permute.xlu0 %1514
        %1518 = vset.pattern.permute.xlu0 0
        %1519 = vperm.xlu0 %1518, %v1084
        %v1520 = vpop.permute.xlu0 %1519
        %1523 = vset.pattern.permute.xlu0 0
        %1524 = vperm.xlu0 %1523, %v1085
        %v1525 = vpop.permute.xlu0 %1524
        %1528 = vset.pattern.permute.xlu0 0
        %1529 = vperm.xlu0 %1528, %v1086
        %v1530 = vpop.permute.xlu0 %1529
        %1533 = vset.pattern.permute.xlu0 0
        %1534 = vperm.xlu0 %1533, %v1087
        %v1535 = vpop.permute.xlu0 %1534
        %1538 = vset.pattern.permute.xlu0 0
        %1539 = vperm.xlu0 %1538, %v1088
        %v1540 = vpop.permute.xlu0 %1539
        %1543 = vset.pattern.permute.xlu0 0
        %1544 = vperm.xlu0 %1543, %v1089
        %v1545 = vpop.permute.xlu0 %1544
        %1548 = vset.pattern.permute.xlu0 0
        %1549 = vperm.xlu0 %1548, %v1090
        %v1550 = vpop.permute.xlu0 %1549
        %1553 = vset.pattern.permute.xlu0 0
        %1554 = vperm.xlu0 %1553, %v1091
        %v1555 = vpop.permute.xlu0 %1554
        %1558 = vset.pattern.permute.xlu0 0
        %1559 = vperm.xlu0 %1558, %v1092
        %v1560 = vpop.permute.xlu0 %1559
        %1563 = vset.pattern.permute.xlu0 0
        %1564 = vperm.xlu0 %1563, %v1093
        %v1565 = vpop.permute.xlu0 %1564
        %1568 = vset.pattern.permute.xlu0 0
        %1569 = vperm.xlu0 %1568, %v1094
        %v1570 = vpop.permute.xlu0 %1569
        %1573 = vset.pattern.permute.xlu0 0
        %1574 = vperm.xlu0 %1573, %v1095
        %v1575 = vpop.permute.xlu0 %1574
        %1578 = vset.pattern.permute.xlu0 0
        %1579 = vperm.xlu0 %1578, %v1096
        %v1580 = vpop.permute.xlu0 %1579
        %1583 = vset.pattern.permute.xlu0 0
        %1584 = vperm.xlu0 %1583, %v1097
        %v1585 = vpop.permute.xlu0 %1584
        %1588 = vset.pattern.permute.xlu0 0
        %1589 = vperm.xlu0 %1588, %v1098
        %v1590 = vpop.permute.xlu0 %1589
        %1593 = vset.pattern.permute.xlu0 0
        %1594 = vperm.xlu0 %1593, %v1099
        %v1595 = vpop.permute.xlu0 %1594
        %1598 = vset.pattern.permute.xlu0 0
        %1599 = vperm.xlu0 %1598, %v1100
        %v1600 = vpop.permute.xlu0 %1599
        %1603 = vset.pattern.permute.xlu0 0
        %1604 = vperm.xlu0 %1603, %v1101
        %v1605 = vpop.permute.xlu0 %1604
        %1608 = vset.pattern.permute.xlu0 0
        %1609 = vperm.xlu0 %1608, %v1102
        %v1610 = vpop.permute.xlu0 %1609
        %1613 = vset.pattern.permute.xlu0 0
        %1614 = vperm.xlu0 %1613, %v1103
        %v1615 = vpop.permute.xlu0 %1614
        %1618 = vset.pattern.permute.xlu0 0
        %1619 = vperm.xlu0 %1618, %v1104
        %v1620 = vpop.permute.xlu0 %1619
        %1623 = vset.pattern.permute.xlu0 0
        %1624 = vperm.xlu0 %1623, %v1105
        %v1625 = vpop.permute.xlu0 %1624
        %1628 = vset.pattern.permute.xlu0 0
        %1629 = vperm.xlu0 %1628, %v1106
        %v1630 = vpop.permute.xlu0 %1629
        %1633 = vset.pattern.permute.xlu0 0
        %1634 = vperm.xlu0 %1633, %v1107
        %v1635 = vpop.permute.xlu0 %1634
        %1638 = vset.pattern.permute.xlu0 0
        %1639 = vperm.xlu0 %1638, %v1108
        %v1640 = vpop.permute.xlu0 %1639
        %1643 = vset.pattern.permute.xlu0 0
        %1644 = vperm.xlu0 %1643, %v1109
        %v1645 = vpop.permute.xlu0 %1644
        %1648 = vset.pattern.permute.xlu0 0
        %1649 = vperm.xlu0 %1648, %v1110
        %v1650 = vpop.permute.xlu0 %1649
        %1653 = vset.pattern.permute.xlu0 0
        %1654 = vperm.xlu0 %1653, %v1111
        %v1655 = vpop.permute.xlu0 %1654
        %1658 = vset.pattern.permute.xlu0 0
        %1659 = vperm.xlu0 %1658, %v1112
        %v1660 = vpop.permute.xlu0 %1659
        %1663 = vset.pattern.permute.xlu0 0
        %1664 = vperm.xlu0 %1663, %v1113
        %v1665 = vpop.permute.xlu0 %1664
        %1668 = vset.pattern.permute.xlu0 0
        %1669 = vperm.xlu0 %1668, %v1114
        %v1670 = vpop.permute.xlu0 %1669
        %1673 = vset.pattern.permute.xlu0 0
        %1674 = vperm.xlu0 %1673, %v1115
        %v1675 = vpop.permute.xlu0 %1674
        %1678 = vset.pattern.permute.xlu0 0
        %1679 = vperm.xlu0 %1678, %v1116
        %v1680 = vpop.permute.xlu0 %1679
        %1683 = vset.pattern.permute.xlu0 0
        %1684 = vperm.xlu0 %1683, %v1117
        %v1685 = vpop.permute.xlu0 %1684
        %1688 = vset.pattern.permute.xlu0 0
        %1689 = vperm.xlu0 %1688, %v1118
        %v1690 = vpop.permute.xlu0 %1689
        %1693 = vset.pattern.permute.xlu0 0
        %1694 = vperm.xlu0 %1693, %v1119
        %v1695 = vpop.permute.xlu0 %1694
        %1698 = vset.pattern.permute.xlu0 0
        %1699 = vperm.xlu0 %1698, %v1120
        %v1700 = vpop.permute.xlu0 %1699
        %1703 = vset.pattern.permute.xlu0 0
        %1704 = vperm.xlu0 %1703, %v1121
        %v1705 = vpop.permute.xlu0 %1704
        %1708 = vset.pattern.permute.xlu0 0
        %1709 = vperm.xlu0 %1708, %v1122
        %v1710 = vpop.permute.xlu0 %1709
        %1713 = vset.pattern.permute.xlu0 0
        %1714 = vperm.xlu0 %1713, %v1123
        %v1715 = vpop.permute.xlu0 %1714
        %1718 = vset.pattern.permute.xlu0 0
        %1719 = vperm.xlu0 %1718, %v1124
        %v1720 = vpop.permute.xlu0 %1719
        %1723 = vset.pattern.permute.xlu0 0
        %1724 = vperm.xlu0 %1723, %v1125
        %v1725 = vpop.permute.xlu0 %1724
        %1728 = vset.pattern.permute.xlu0 0
        %1729 = vperm.xlu0 %1728, %v1126
        %v1730 = vpop.permute.xlu0 %1729
        %1733 = vset.pattern.permute.xlu0 0
        %1734 = vperm.xlu0 %1733, %v1127
        %v1735 = vpop.permute.xlu0 %1734
        %1738 = vset.pattern.permute.xlu0 0
        %1739 = vperm.xlu0 %1738, %v1128
        %v1740 = vpop.permute.xlu0 %1739
        %1743 = vset.pattern.permute.xlu0 0
        %1744 = vperm.xlu0 %1743, %v1129
        %v1745 = vpop.permute.xlu0 %1744
        %1748 = vset.pattern.permute.xlu0 0
        %1749 = vperm.xlu0 %1748, %v1130
        %v1750 = vpop.permute.xlu0 %1749
        %1753 = vset.pattern.permute.xlu0 0
        %1754 = vperm.xlu0 %1753, %v1131
        %v1755 = vpop.permute.xlu0 %1754
        %1758 = vset.pattern.permute.xlu0 0
        %1759 = vperm.xlu0 %1758, %v1132
        %v1760 = vpop.permute.xlu0 %1759
        %1763 = vset.pattern.permute.xlu0 0
        %1764 = vperm.xlu0 %1763, %v1133
        %v1765 = vpop.permute.xlu0 %1764
        %1768 = vset.pattern.permute.xlu0 0
        %1769 = vperm.xlu0 %1768, %v1134
        %v1770 = vpop.permute.xlu0 %1769
        %1773 = vset.pattern.permute.xlu0 0
        %1774 = vperm.xlu0 %1773, %v1135
        %v1775 = vpop.permute.xlu0 %1774
        %v1777 = vlaneseq
        %v1778 = vshrl.u32 %v1777, 7
        %v1779 = vsub.s32 0, %v1778
        %v1780 = vrot.slane %v1136, %v1779
        %v1781 = vmul.f32 %v1140, %v1780
        %v1782 = vmul.f32 %v1145, %v1780
        %v1783 = vmul.f32 %v1150, %v1780
        %v1784 = vmul.f32 %v1155, %v1780
        %v1785 = vmul.f32 %v1160, %v1780
        %v1786 = vmul.f32 %v1165, %v1780
        %v1787 = vmul.f32 %v1170, %v1780
        %v1788 = vmul.f32 %v1175, %v1780
        %v1789 = vmul.f32 %v1180, %v1780
        %v1790 = vmul.f32 %v1185, %v1780
        %v1791 = vmul.f32 %v1190, %v1780
        %v1792 = vmul.f32 %v1195, %v1780
        %v1793 = vmul.f32 %v1200, %v1780
        %v1794 = vmul.f32 %v1205, %v1780
        %v1795 = vmul.f32 %v1210, %v1780
        %v1796 = vmul.f32 %v1215, %v1780
        %v1797 = vmul.f32 %v1220, %v1780
        %v1798 = vmul.f32 %v1225, %v1780
        %v1799 = vmul.f32 %v1230, %v1780
        %v1800 = vmul.f32 %v1235, %v1780
        %v1801 = vmul.f32 %v1240, %v1780
        %v1802 = vmul.f32 %v1245, %v1780
        %v1803 = vmul.f32 %v1250, %v1780
        %v1804 = vmul.f32 %v1255, %v1780
        %v1805 = vmul.f32 %v1260, %v1780
        %v1806 = vmul.f32 %v1265, %v1780
        %v1807 = vmul.f32 %v1270, %v1780
        %v1808 = vmul.f32 %v1275, %v1780
        %v1809 = vmul.f32 %v1280, %v1780
        %v1810 = vmul.f32 %v1285, %v1780
        %v1811 = vmul.f32 %v1290, %v1780
        %v1812 = vmul.f32 %v1295, %v1780
        %v1813 = vmul.f32 %v1300, %v1780
        %v1814 = vmul.f32 %v1305, %v1780
        %v1815 = vmul.f32 %v1310, %v1780
        %v1816 = vmul.f32 %v1315, %v1780
        %v1817 = vmul.f32 %v1320, %v1780
        %v1818 = vmul.f32 %v1325, %v1780
        %v1819 = vmul.f32 %v1330, %v1780
        %v1820 = vmul.f32 %v1335, %v1780
        %v1821 = vmul.f32 %v1340, %v1780
        %v1822 = vmul.f32 %v1345, %v1780
        %v1823 = vmul.f32 %v1350, %v1780
        %v1824 = vmul.f32 %v1355, %v1780
        %v1825 = vmul.f32 %v1360, %v1780
        %v1826 = vmul.f32 %v1365, %v1780
        %v1827 = vmul.f32 %v1370, %v1780
        %v1828 = vmul.f32 %v1375, %v1780
        %v1829 = vmul.f32 %v1380, %v1780
        %v1830 = vmul.f32 %v1385, %v1780
        %v1831 = vmul.f32 %v1390, %v1780
        %v1832 = vmul.f32 %v1395, %v1780
        %v1833 = vmul.f32 %v1400, %v1780
        %v1834 = vmul.f32 %v1405, %v1780
        %v1835 = vmul.f32 %v1410, %v1780
        %v1836 = vmul.f32 %v1415, %v1780
        %v1837 = vmul.f32 %v1420, %v1780
        %v1838 = vmul.f32 %v1425, %v1780
        %v1839 = vmul.f32 %v1430, %v1780
        %v1840 = vmul.f32 %v1435, %v1780
        %v1841 = vmul.f32 %v1440, %v1780
        %v1842 = vmul.f32 %v1445, %v1780
        %v1843 = vmul.f32 %v1450, %v1780
        %v1844 = vmul.f32 %v1455, %v1780
        %v1845 = vmul.f32 %v1460, %v1780
        %v1846 = vmul.f32 %v1465, %v1780
        %v1847 = vmul.f32 %v1470, %v1780
        %v1848 = vmul.f32 %v1475, %v1780
        %v1849 = vmul.f32 %v1480, %v1780
        %v1850 = vmul.f32 %v1485, %v1780
        %v1851 = vmul.f32 %v1490, %v1780
        %v1852 = vmul.f32 %v1495, %v1780
        %v1853 = vmul.f32 %v1500, %v1780
        %v1854 = vmul.f32 %v1505, %v1780
        %v1855 = vmul.f32 %v1510, %v1780
        %v1856 = vmul.f32 %v1515, %v1780
        %v1857 = vmul.f32 %v1520, %v1780
        %v1858 = vmul.f32 %v1525, %v1780
        %v1859 = vmul.f32 %v1530, %v1780
        %v1860 = vmul.f32 %v1535, %v1780
        %v1861 = vmul.f32 %v1540, %v1780
        %v1862 = vmul.f32 %v1545, %v1780
        %v1863 = vmul.f32 %v1550, %v1780
        %v1864 = vmul.f32 %v1555, %v1780
        %v1865 = vmul.f32 %v1560, %v1780
        %v1866 = vmul.f32 %v1565, %v1780
        %v1867 = vmul.f32 %v1570, %v1780
        %v1868 = vmul.f32 %v1575, %v1780
        %v1869 = vmul.f32 %v1580, %v1780
        %v1870 = vmul.f32 %v1585, %v1780
        %v1871 = vmul.f32 %v1590, %v1780
        %v1872 = vmul.f32 %v1595, %v1780
        %v1873 = vmul.f32 %v1600, %v1780
        %v1874 = vmul.f32 %v1605, %v1780
        %v1875 = vmul.f32 %v1610, %v1780
        %v1876 = vmul.f32 %v1615, %v1780
        %v1877 = vmul.f32 %v1620, %v1780
        %v1878 = vmul.f32 %v1625, %v1780
        %v1879 = vmul.f32 %v1630, %v1780
        %v1880 = vmul.f32 %v1635, %v1780
        %v1881 = vmul.f32 %v1640, %v1780
        %v1882 = vmul.f32 %v1645, %v1780
        %v1883 = vmul.f32 %v1650, %v1780
        %v1884 = vmul.f32 %v1655, %v1780
        %v1885 = vmul.f32 %v1660, %v1780
        %v1886 = vmul.f32 %v1665, %v1780
        %v1887 = vmul.f32 %v1670, %v1780
        %v1888 = vmul.f32 %v1675, %v1780
        %v1889 = vmul.f32 %v1680, %v1780
        %v1890 = vmul.f32 %v1685, %v1780
        %v1891 = vmul.f32 %v1690, %v1780
        %v1892 = vmul.f32 %v1695, %v1780
        %v1893 = vmul.f32 %v1700, %v1780
        %v1894 = vmul.f32 %v1705, %v1780
        %v1895 = vmul.f32 %v1710, %v1780
        %v1896 = vmul.f32 %v1715, %v1780
        %v1897 = vmul.f32 %v1720, %v1780
        %v1898 = vmul.f32 %v1725, %v1780
        %v1899 = vmul.f32 %v1730, %v1780
        %v1900 = vmul.f32 %v1735, %v1780
        %v1901 = vmul.f32 %v1740, %v1780
        %v1902 = vmul.f32 %v1745, %v1780
        %v1903 = vmul.f32 %v1750, %v1780
        %v1904 = vmul.f32 %v1755, %v1780
        %v1905 = vmul.f32 %v1760, %v1780
        %v1906 = vmul.f32 %v1765, %v1780
        %v1907 = vmul.f32 %v1770, %v1780
        %v1908 = vmul.f32 %v1775, %v1780
        %1909 = vset.pattern.permute.xlu0 1
        %1910 = vperm.xlu0 %1909, %v1008
        %v1911 = vpop.permute.xlu0 %1910
        %1913 = vset.pattern.permute.xlu0 1
        %1914 = vperm.xlu0 %1913, %v1009
        %v1915 = vpop.permute.xlu0 %1914
        %1917 = vset.pattern.permute.xlu0 1
        %1918 = vperm.xlu0 %1917, %v1010
        %v1919 = vpop.permute.xlu0 %1918
        %1921 = vset.pattern.permute.xlu0 1
        %1922 = vperm.xlu0 %1921, %v1011
        %v1923 = vpop.permute.xlu0 %1922
        %1925 = vset.pattern.permute.xlu0 1
        %1926 = vperm.xlu0 %1925, %v1012
        %v1927 = vpop.permute.xlu0 %1926
        %1929 = vset.pattern.permute.xlu0 1
        %1930 = vperm.xlu0 %1929, %v1013
        %v1931 = vpop.permute.xlu0 %1930
        %1933 = vset.pattern.permute.xlu0 1
        %1934 = vperm.xlu0 %1933, %v1014
        %v1935 = vpop.permute.xlu0 %1934
        %1937 = vset.pattern.permute.xlu0 1
        %1938 = vperm.xlu0 %1937, %v1015
        %v1939 = vpop.permute.xlu0 %1938
        %1941 = vset.pattern.permute.xlu0 1
        %1942 = vperm.xlu0 %1941, %v1016
        %v1943 = vpop.permute.xlu0 %1942
        %1945 = vset.pattern.permute.xlu0 1
        %1946 = vperm.xlu0 %1945, %v1017
        %v1947 = vpop.permute.xlu0 %1946
        %1949 = vset.pattern.permute.xlu0 1
        %1950 = vperm.xlu0 %1949, %v1018
        %v1951 = vpop.permute.xlu0 %1950
        %1953 = vset.pattern.permute.xlu0 1
        %1954 = vperm.xlu0 %1953, %v1019
        %v1955 = vpop.permute.xlu0 %1954
        %1957 = vset.pattern.permute.xlu0 1
        %1958 = vperm.xlu0 %1957, %v1020
        %v1959 = vpop.permute.xlu0 %1958
        %1961 = vset.pattern.permute.xlu0 1
        %1962 = vperm.xlu0 %1961, %v1021
        %v1963 = vpop.permute.xlu0 %1962
        %1965 = vset.pattern.permute.xlu0 1
        %1966 = vperm.xlu0 %1965, %v1022
        %v1967 = vpop.permute.xlu0 %1966
        %1969 = vset.pattern.permute.xlu0 1
        %1970 = vperm.xlu0 %1969, %v1023
        %v1971 = vpop.permute.xlu0 %1970
        %1973 = vset.pattern.permute.xlu0 1
        %1974 = vperm.xlu0 %1973, %v1024
        %v1975 = vpop.permute.xlu0 %1974
        %1977 = vset.pattern.permute.xlu0 1
        %1978 = vperm.xlu0 %1977, %v1025
        %v1979 = vpop.permute.xlu0 %1978
        %1981 = vset.pattern.permute.xlu0 1
        %1982 = vperm.xlu0 %1981, %v1026
        %v1983 = vpop.permute.xlu0 %1982
        %1985 = vset.pattern.permute.xlu0 1
        %1986 = vperm.xlu0 %1985, %v1027
        %v1987 = vpop.permute.xlu0 %1986
        %1989 = vset.pattern.permute.xlu0 1
        %1990 = vperm.xlu0 %1989, %v1028
        %v1991 = vpop.permute.xlu0 %1990
        %1993 = vset.pattern.permute.xlu0 1
        %1994 = vperm.xlu0 %1993, %v1029
        %v1995 = vpop.permute.xlu0 %1994
        %1997 = vset.pattern.permute.xlu0 1
        %1998 = vperm.xlu0 %1997, %v1030
        %v1999 = vpop.permute.xlu0 %1998
        %2001 = vset.pattern.permute.xlu0 1
        %2002 = vperm.xlu0 %2001, %v1031
        %v2003 = vpop.permute.xlu0 %2002
        %2005 = vset.pattern.permute.xlu0 1
        %2006 = vperm.xlu0 %2005, %v1032
        %v2007 = vpop.permute.xlu0 %2006
        %2009 = vset.pattern.permute.xlu0 1
        %2010 = vperm.xlu0 %2009, %v1033
        %v2011 = vpop.permute.xlu0 %2010
        %2013 = vset.pattern.permute.xlu0 1
        %2014 = vperm.xlu0 %2013, %v1034
        %v2015 = vpop.permute.xlu0 %2014
        %2017 = vset.pattern.permute.xlu0 1
        %2018 = vperm.xlu0 %2017, %v1035
        %v2019 = vpop.permute.xlu0 %2018
        %2021 = vset.pattern.permute.xlu0 1
        %2022 = vperm.xlu0 %2021, %v1036
        %v2023 = vpop.permute.xlu0 %2022
        %2025 = vset.pattern.permute.xlu0 1
        %2026 = vperm.xlu0 %2025, %v1037
        %v2027 = vpop.permute.xlu0 %2026
        %2029 = vset.pattern.permute.xlu0 1
        %2030 = vperm.xlu0 %2029, %v1038
        %v2031 = vpop.permute.xlu0 %2030
        %2033 = vset.pattern.permute.xlu0 1
        %2034 = vperm.xlu0 %2033, %v1039
        %v2035 = vpop.permute.xlu0 %2034
        %2037 = vset.pattern.permute.xlu0 1
        %2038 = vperm.xlu0 %2037, %v1040
        %v2039 = vpop.permute.xlu0 %2038
        %2041 = vset.pattern.permute.xlu0 1
        %2042 = vperm.xlu0 %2041, %v1041
        %v2043 = vpop.permute.xlu0 %2042
        %2045 = vset.pattern.permute.xlu0 1
        %2046 = vperm.xlu0 %2045, %v1042
        %v2047 = vpop.permute.xlu0 %2046
        %2049 = vset.pattern.permute.xlu0 1
        %2050 = vperm.xlu0 %2049, %v1043
        %v2051 = vpop.permute.xlu0 %2050
        %2053 = vset.pattern.permute.xlu0 1
        %2054 = vperm.xlu0 %2053, %v1044
        %v2055 = vpop.permute.xlu0 %2054
        %2057 = vset.pattern.permute.xlu0 1
        %2058 = vperm.xlu0 %2057, %v1045
        %v2059 = vpop.permute.xlu0 %2058
        %2061 = vset.pattern.permute.xlu0 1
        %2062 = vperm.xlu0 %2061, %v1046
        %v2063 = vpop.permute.xlu0 %2062
        %2065 = vset.pattern.permute.xlu0 1
        %2066 = vperm.xlu0 %2065, %v1047
        %v2067 = vpop.permute.xlu0 %2066
        %2069 = vset.pattern.permute.xlu0 1
        %2070 = vperm.xlu0 %2069, %v1048
        %v2071 = vpop.permute.xlu0 %2070
        %2073 = vset.pattern.permute.xlu0 1
        %2074 = vperm.xlu0 %2073, %v1049
        %v2075 = vpop.permute.xlu0 %2074
        %2077 = vset.pattern.permute.xlu0 1
        %2078 = vperm.xlu0 %2077, %v1050
        %v2079 = vpop.permute.xlu0 %2078
        %2081 = vset.pattern.permute.xlu0 1
        %2082 = vperm.xlu0 %2081, %v1051
        %v2083 = vpop.permute.xlu0 %2082
        %2085 = vset.pattern.permute.xlu0 1
        %2086 = vperm.xlu0 %2085, %v1052
        %v2087 = vpop.permute.xlu0 %2086
        %2089 = vset.pattern.permute.xlu0 1
        %2090 = vperm.xlu0 %2089, %v1053
        %v2091 = vpop.permute.xlu0 %2090
        %2093 = vset.pattern.permute.xlu0 1
        %2094 = vperm.xlu0 %2093, %v1054
        %v2095 = vpop.permute.xlu0 %2094
        %2097 = vset.pattern.permute.xlu0 1
        %2098 = vperm.xlu0 %2097, %v1055
        %v2099 = vpop.permute.xlu0 %2098
        %2101 = vset.pattern.permute.xlu0 1
        %2102 = vperm.xlu0 %2101, %v1056
        %v2103 = vpop.permute.xlu0 %2102
        %2105 = vset.pattern.permute.xlu0 1
        %2106 = vperm.xlu0 %2105, %v1057
        %v2107 = vpop.permute.xlu0 %2106
        %2109 = vset.pattern.permute.xlu0 1
        %2110 = vperm.xlu0 %2109, %v1058
        %v2111 = vpop.permute.xlu0 %2110
        %2113 = vset.pattern.permute.xlu0 1
        %2114 = vperm.xlu0 %2113, %v1059
        %v2115 = vpop.permute.xlu0 %2114
        %2117 = vset.pattern.permute.xlu0 1
        %2118 = vperm.xlu0 %2117, %v1060
        %v2119 = vpop.permute.xlu0 %2118
        %2121 = vset.pattern.permute.xlu0 1
        %2122 = vperm.xlu0 %2121, %v1061
        %v2123 = vpop.permute.xlu0 %2122
        %2125 = vset.pattern.permute.xlu0 1
        %2126 = vperm.xlu0 %2125, %v1062
        %v2127 = vpop.permute.xlu0 %2126
        %2129 = vset.pattern.permute.xlu0 1
        %2130 = vperm.xlu0 %2129, %v1063
        %v2131 = vpop.permute.xlu0 %2130
        %2133 = vset.pattern.permute.xlu0 1
        %2134 = vperm.xlu0 %2133, %v1064
        %v2135 = vpop.permute.xlu0 %2134
        %2137 = vset.pattern.permute.xlu0 1
        %2138 = vperm.xlu0 %2137, %v1065
        %v2139 = vpop.permute.xlu0 %2138
        %2141 = vset.pattern.permute.xlu0 1
        %2142 = vperm.xlu0 %2141, %v1066
        %v2143 = vpop.permute.xlu0 %2142
        %2145 = vset.pattern.permute.xlu0 1
        %2146 = vperm.xlu0 %2145, %v1067
        %v2147 = vpop.permute.xlu0 %2146
        %2149 = vset.pattern.permute.xlu0 1
        %2150 = vperm.xlu0 %2149, %v1068
        %v2151 = vpop.permute.xlu0 %2150
        %2153 = vset.pattern.permute.xlu0 1
        %2154 = vperm.xlu0 %2153, %v1069
        %v2155 = vpop.permute.xlu0 %2154
        %2157 = vset.pattern.permute.xlu0 1
        %2158 = vperm.xlu0 %2157, %v1070
        %v2159 = vpop.permute.xlu0 %2158
        %2161 = vset.pattern.permute.xlu0 1
        %2162 = vperm.xlu0 %2161, %v1071
        %v2163 = vpop.permute.xlu0 %2162
        %2165 = vset.pattern.permute.xlu0 1
        %2166 = vperm.xlu0 %2165, %v1072
        %v2167 = vpop.permute.xlu0 %2166
        %2169 = vset.pattern.permute.xlu0 1
        %2170 = vperm.xlu0 %2169, %v1073
        %v2171 = vpop.permute.xlu0 %2170
        %2173 = vset.pattern.permute.xlu0 1
        %2174 = vperm.xlu0 %2173, %v1074
        %v2175 = vpop.permute.xlu0 %2174
        %2177 = vset.pattern.permute.xlu0 1
        %2178 = vperm.xlu0 %2177, %v1075
        %v2179 = vpop.permute.xlu0 %2178
        %2181 = vset.pattern.permute.xlu0 1
        %2182 = vperm.xlu0 %2181, %v1076
        %v2183 = vpop.permute.xlu0 %2182
        %2185 = vset.pattern.permute.xlu0 1
        %2186 = vperm.xlu0 %2185, %v1077
        %v2187 = vpop.permute.xlu0 %2186
        %2189 = vset.pattern.permute.xlu0 1
        %2190 = vperm.xlu0 %2189, %v1078
        %v2191 = vpop.permute.xlu0 %2190
        %2193 = vset.pattern.permute.xlu0 1
        %2194 = vperm.xlu0 %2193, %v1079
        %v2195 = vpop.permute.xlu0 %2194
        %2197 = vset.pattern.permute.xlu0 1
        %2198 = vperm.xlu0 %2197, %v1080
        %v2199 = vpop.permute.xlu0 %2198
        %2201 = vset.pattern.permute.xlu0 1
        %2202 = vperm.xlu0 %2201, %v1081
        %v2203 = vpop.permute.xlu0 %2202
        %2205 = vset.pattern.permute.xlu0 1
        %2206 = vperm.xlu0 %2205, %v1082
        %v2207 = vpop.permute.xlu0 %2206
        %2209 = vset.pattern.permute.xlu0 1
        %2210 = vperm.xlu0 %2209, %v1083
        %v2211 = vpop.permute.xlu0 %2210
        %2213 = vset.pattern.permute.xlu0 1
        %2214 = vperm.xlu0 %2213, %v1084
        %v2215 = vpop.permute.xlu0 %2214
        %2217 = vset.pattern.permute.xlu0 1
        %2218 = vperm.xlu0 %2217, %v1085
        %v2219 = vpop.permute.xlu0 %2218
        %2221 = vset.pattern.permute.xlu0 1
        %2222 = vperm.xlu0 %2221, %v1086
        %v2223 = vpop.permute.xlu0 %2222
        %2225 = vset.pattern.permute.xlu0 1
        %2226 = vperm.xlu0 %2225, %v1087
        %v2227 = vpop.permute.xlu0 %2226
        %2229 = vset.pattern.permute.xlu0 1
        %2230 = vperm.xlu0 %2229, %v1088
        %v2231 = vpop.permute.xlu0 %2230
        %2233 = vset.pattern.permute.xlu0 1
        %2234 = vperm.xlu0 %2233, %v1089
        %v2235 = vpop.permute.xlu0 %2234
        %2237 = vset.pattern.permute.xlu0 1
        %2238 = vperm.xlu0 %2237, %v1090
        %v2239 = vpop.permute.xlu0 %2238
        %2241 = vset.pattern.permute.xlu0 1
        %2242 = vperm.xlu0 %2241, %v1091
        %v2243 = vpop.permute.xlu0 %2242
        %2245 = vset.pattern.permute.xlu0 1
        %2246 = vperm.xlu0 %2245, %v1092
        %v2247 = vpop.permute.xlu0 %2246
        %2249 = vset.pattern.permute.xlu0 1
        %2250 = vperm.xlu0 %2249, %v1093
        %v2251 = vpop.permute.xlu0 %2250
        %2253 = vset.pattern.permute.xlu0 1
        %2254 = vperm.xlu0 %2253, %v1094
        %v2255 = vpop.permute.xlu0 %2254
        %2257 = vset.pattern.permute.xlu0 1
        %2258 = vperm.xlu0 %2257, %v1095
        %v2259 = vpop.permute.xlu0 %2258
        %2261 = vset.pattern.permute.xlu0 1
        %2262 = vperm.xlu0 %2261, %v1096
        %v2263 = vpop.permute.xlu0 %2262
        %2265 = vset.pattern.permute.xlu0 1
        %2266 = vperm.xlu0 %2265, %v1097
        %v2267 = vpop.permute.xlu0 %2266
        %2269 = vset.pattern.permute.xlu0 1
        %2270 = vperm.xlu0 %2269, %v1098
        %v2271 = vpop.permute.xlu0 %2270
        %2273 = vset.pattern.permute.xlu0 1
        %2274 = vperm.xlu0 %2273, %v1099
        %v2275 = vpop.permute.xlu0 %2274
        %2277 = vset.pattern.permute.xlu0 1
        %2278 = vperm.xlu0 %2277, %v1100
        %v2279 = vpop.permute.xlu0 %2278
        %2281 = vset.pattern.permute.xlu0 1
        %2282 = vperm.xlu0 %2281, %v1101
        %v2283 = vpop.permute.xlu0 %2282
        %2285 = vset.pattern.permute.xlu0 1
        %2286 = vperm.xlu0 %2285, %v1102
        %v2287 = vpop.permute.xlu0 %2286
        %2289 = vset.pattern.permute.xlu0 1
        %2290 = vperm.xlu0 %2289, %v1103
        %v2291 = vpop.permute.xlu0 %2290
        %2293 = vset.pattern.permute.xlu0 1
        %2294 = vperm.xlu0 %2293, %v1104
        %v2295 = vpop.permute.xlu0 %2294
        %2297 = vset.pattern.permute.xlu0 1
        %2298 = vperm.xlu0 %2297, %v1105
        %v2299 = vpop.permute.xlu0 %2298
        %2301 = vset.pattern.permute.xlu0 1
        %2302 = vperm.xlu0 %2301, %v1106
        %v2303 = vpop.permute.xlu0 %2302
        %2305 = vset.pattern.permute.xlu0 1
        %2306 = vperm.xlu0 %2305, %v1107
        %v2307 = vpop.permute.xlu0 %2306
        %2309 = vset.pattern.permute.xlu0 1
        %2310 = vperm.xlu0 %2309, %v1108
        %v2311 = vpop.permute.xlu0 %2310
        %2313 = vset.pattern.permute.xlu0 1
        %2314 = vperm.xlu0 %2313, %v1109
        %v2315 = vpop.permute.xlu0 %2314
        %2317 = vset.pattern.permute.xlu0 1
        %2318 = vperm.xlu0 %2317, %v1110
        %v2319 = vpop.permute.xlu0 %2318
        %2321 = vset.pattern.permute.xlu0 1
        %2322 = vperm.xlu0 %2321, %v1111
        %v2323 = vpop.permute.xlu0 %2322
        %2325 = vset.pattern.permute.xlu0 1
        %2326 = vperm.xlu0 %2325, %v1112
        %v2327 = vpop.permute.xlu0 %2326
        %2329 = vset.pattern.permute.xlu0 1
        %2330 = vperm.xlu0 %2329, %v1113
        %v2331 = vpop.permute.xlu0 %2330
        %2333 = vset.pattern.permute.xlu0 1
        %2334 = vperm.xlu0 %2333, %v1114
        %v2335 = vpop.permute.xlu0 %2334
        %2337 = vset.pattern.permute.xlu0 1
        %2338 = vperm.xlu0 %2337, %v1115
        %v2339 = vpop.permute.xlu0 %2338
        %2341 = vset.pattern.permute.xlu0 1
        %2342 = vperm.xlu0 %2341, %v1116
        %v2343 = vpop.permute.xlu0 %2342
        %2345 = vset.pattern.permute.xlu0 1
        %2346 = vperm.xlu0 %2345, %v1117
        %v2347 = vpop.permute.xlu0 %2346
        %2349 = vset.pattern.permute.xlu0 1
        %2350 = vperm.xlu0 %2349, %v1118
        %v2351 = vpop.permute.xlu0 %2350
        %2353 = vset.pattern.permute.xlu0 1
        %2354 = vperm.xlu0 %2353, %v1119
        %v2355 = vpop.permute.xlu0 %2354
        %2357 = vset.pattern.permute.xlu0 1
        %2358 = vperm.xlu0 %2357, %v1120
        %v2359 = vpop.permute.xlu0 %2358
        %2361 = vset.pattern.permute.xlu0 1
        %2362 = vperm.xlu0 %2361, %v1121
        %v2363 = vpop.permute.xlu0 %2362
        %2365 = vset.pattern.permute.xlu0 1
        %2366 = vperm.xlu0 %2365, %v1122
        %v2367 = vpop.permute.xlu0 %2366
        %2369 = vset.pattern.permute.xlu0 1
        %2370 = vperm.xlu0 %2369, %v1123
        %v2371 = vpop.permute.xlu0 %2370
        %2373 = vset.pattern.permute.xlu0 1
        %2374 = vperm.xlu0 %2373, %v1124
        %v2375 = vpop.permute.xlu0 %2374
        %2377 = vset.pattern.permute.xlu0 1
        %2378 = vperm.xlu0 %2377, %v1125
        %v2379 = vpop.permute.xlu0 %2378
        %2381 = vset.pattern.permute.xlu0 1
        %2382 = vperm.xlu0 %2381, %v1126
        %v2383 = vpop.permute.xlu0 %2382
        %2385 = vset.pattern.permute.xlu0 1
        %2386 = vperm.xlu0 %2385, %v1127
        %v2387 = vpop.permute.xlu0 %2386
        %2389 = vset.pattern.permute.xlu0 1
        %2390 = vperm.xlu0 %2389, %v1128
        %v2391 = vpop.permute.xlu0 %2390
        %2393 = vset.pattern.permute.xlu0 1
        %2394 = vperm.xlu0 %2393, %v1129
        %v2395 = vpop.permute.xlu0 %2394
        %2397 = vset.pattern.permute.xlu0 1
        %2398 = vperm.xlu0 %2397, %v1130
        %v2399 = vpop.permute.xlu0 %2398
        %2401 = vset.pattern.permute.xlu0 1
        %2402 = vperm.xlu0 %2401, %v1131
        %v2403 = vpop.permute.xlu0 %2402
        %2405 = vset.pattern.permute.xlu0 1
        %2406 = vperm.xlu0 %2405, %v1132
        %v2407 = vpop.permute.xlu0 %2406
        %2409 = vset.pattern.permute.xlu0 1
        %2410 = vperm.xlu0 %2409, %v1133
        %v2411 = vpop.permute.xlu0 %2410
        %2413 = vset.pattern.permute.xlu0 1
        %2414 = vperm.xlu0 %2413, %v1134
        %v2415 = vpop.permute.xlu0 %2414
        %2417 = vset.pattern.permute.xlu0 1
        %2418 = vperm.xlu0 %2417, %v1135
        %v2419 = vpop.permute.xlu0 %2418
        %v2421 = vlaneseq
        %v2422 = vshrl.u32 %v2421, 7
        %v2423 = vsub.s32 1, %v2422
        %v2424 = vrot.slane %v1136, %v2423
        %v2425 = vmul.f32 %v1911, %v2424
        %v2426 = vmul.f32 %v1915, %v2424
        %v2427 = vmul.f32 %v1919, %v2424
        %v2428 = vmul.f32 %v1923, %v2424
        %v2429 = vmul.f32 %v1927, %v2424
        %v2430 = vmul.f32 %v1931, %v2424
        %v2431 = vmul.f32 %v1935, %v2424
        %v2432 = vmul.f32 %v1939, %v2424
        %v2433 = vmul.f32 %v1943, %v2424
        %v2434 = vmul.f32 %v1947, %v2424
        %v2435 = vmul.f32 %v1951, %v2424
        %v2436 = vmul.f32 %v1955, %v2424
        %v2437 = vmul.f32 %v1959, %v2424
        %v2438 = vmul.f32 %v1963, %v2424
        %v2439 = vmul.f32 %v1967, %v2424
        %v2440 = vmul.f32 %v1971, %v2424
        %v2441 = vmul.f32 %v1975, %v2424
        %v2442 = vmul.f32 %v1979, %v2424
        %v2443 = vmul.f32 %v1983, %v2424
        %v2444 = vmul.f32 %v1987, %v2424
        %v2445 = vmul.f32 %v1991, %v2424
        %v2446 = vmul.f32 %v1995, %v2424
        %v2447 = vmul.f32 %v1999, %v2424
        %v2448 = vmul.f32 %v2003, %v2424
        %v2449 = vmul.f32 %v2007, %v2424
        %v2450 = vmul.f32 %v2011, %v2424
        %v2451 = vmul.f32 %v2015, %v2424
        %v2452 = vmul.f32 %v2019, %v2424
        %v2453 = vmul.f32 %v2023, %v2424
        %v2454 = vmul.f32 %v2027, %v2424
        %v2455 = vmul.f32 %v2031, %v2424
        %v2456 = vmul.f32 %v2035, %v2424
        %v2457 = vmul.f32 %v2039, %v2424
        %v2458 = vmul.f32 %v2043, %v2424
        %v2459 = vmul.f32 %v2047, %v2424
        %v2460 = vmul.f32 %v2051, %v2424
        %v2461 = vmul.f32 %v2055, %v2424
        %v2462 = vmul.f32 %v2059, %v2424
        %v2463 = vmul.f32 %v2063, %v2424
        %v2464 = vmul.f32 %v2067, %v2424
        %v2465 = vmul.f32 %v2071, %v2424
        %v2466 = vmul.f32 %v2075, %v2424
        %v2467 = vmul.f32 %v2079, %v2424
        %v2468 = vmul.f32 %v2083, %v2424
        %v2469 = vmul.f32 %v2087, %v2424
        %v2470 = vmul.f32 %v2091, %v2424
        %v2471 = vmul.f32 %v2095, %v2424
        %v2472 = vmul.f32 %v2099, %v2424
        %v2473 = vmul.f32 %v2103, %v2424
        %v2474 = vmul.f32 %v2107, %v2424
        %v2475 = vmul.f32 %v2111, %v2424
        %v2476 = vmul.f32 %v2115, %v2424
        %v2477 = vmul.f32 %v2119, %v2424
        %v2478 = vmul.f32 %v2123, %v2424
        %v2479 = vmul.f32 %v2127, %v2424
        %v2480 = vmul.f32 %v2131, %v2424
        %v2481 = vmul.f32 %v2135, %v2424
        %v2482 = vmul.f32 %v2139, %v2424
        %v2483 = vmul.f32 %v2143, %v2424
        %v2484 = vmul.f32 %v2147, %v2424
        %v2485 = vmul.f32 %v2151, %v2424
        %v2486 = vmul.f32 %v2155, %v2424
        %v2487 = vmul.f32 %v2159, %v2424
        %v2488 = vmul.f32 %v2163, %v2424
        %v2489 = vmul.f32 %v2167, %v2424
        %v2490 = vmul.f32 %v2171, %v2424
        %v2491 = vmul.f32 %v2175, %v2424
        %v2492 = vmul.f32 %v2179, %v2424
        %v2493 = vmul.f32 %v2183, %v2424
        %v2494 = vmul.f32 %v2187, %v2424
        %v2495 = vmul.f32 %v2191, %v2424
        %v2496 = vmul.f32 %v2195, %v2424
        %v2497 = vmul.f32 %v2199, %v2424
        %v2498 = vmul.f32 %v2203, %v2424
        %v2499 = vmul.f32 %v2207, %v2424
        %v2500 = vmul.f32 %v2211, %v2424
        %v2501 = vmul.f32 %v2215, %v2424
        %v2502 = vmul.f32 %v2219, %v2424
        %v2503 = vmul.f32 %v2223, %v2424
        %v2504 = vmul.f32 %v2227, %v2424
        %v2505 = vmul.f32 %v2231, %v2424
        %v2506 = vmul.f32 %v2235, %v2424
        %v2507 = vmul.f32 %v2239, %v2424
        %v2508 = vmul.f32 %v2243, %v2424
        %v2509 = vmul.f32 %v2247, %v2424
        %v2510 = vmul.f32 %v2251, %v2424
        %v2511 = vmul.f32 %v2255, %v2424
        %v2512 = vmul.f32 %v2259, %v2424
        %v2513 = vmul.f32 %v2263, %v2424
        %v2514 = vmul.f32 %v2267, %v2424
        %v2515 = vmul.f32 %v2271, %v2424
        %v2516 = vmul.f32 %v2275, %v2424
        %v2517 = vmul.f32 %v2279, %v2424
        %v2518 = vmul.f32 %v2283, %v2424
        %v2519 = vmul.f32 %v2287, %v2424
        %v2520 = vmul.f32 %v2291, %v2424
        %v2521 = vmul.f32 %v2295, %v2424
        %v2522 = vmul.f32 %v2299, %v2424
        %v2523 = vmul.f32 %v2303, %v2424
        %v2524 = vmul.f32 %v2307, %v2424
        %v2525 = vmul.f32 %v2311, %v2424
        %v2526 = vmul.f32 %v2315, %v2424
        %v2527 = vmul.f32 %v2319, %v2424
        %v2528 = vmul.f32 %v2323, %v2424
        %v2529 = vmul.f32 %v2327, %v2424
        %v2530 = vmul.f32 %v2331, %v2424
        %v2531 = vmul.f32 %v2335, %v2424
        %v2532 = vmul.f32 %v2339, %v2424
        %v2533 = vmul.f32 %v2343, %v2424
        %v2534 = vmul.f32 %v2347, %v2424
        %v2535 = vmul.f32 %v2351, %v2424
        %v2536 = vmul.f32 %v2355, %v2424
        %v2537 = vmul.f32 %v2359, %v2424
        %v2538 = vmul.f32 %v2363, %v2424
        %v2539 = vmul.f32 %v2367, %v2424
        %v2540 = vmul.f32 %v2371, %v2424
        %v2541 = vmul.f32 %v2375, %v2424
        %v2542 = vmul.f32 %v2379, %v2424
        %v2543 = vmul.f32 %v2383, %v2424
        %v2544 = vmul.f32 %v2387, %v2424
        %v2545 = vmul.f32 %v2391, %v2424
        %v2546 = vmul.f32 %v2395, %v2424
        %v2547 = vmul.f32 %v2399, %v2424
        %v2548 = vmul.f32 %v2403, %v2424
        %v2549 = vmul.f32 %v2407, %v2424
        %v2550 = vmul.f32 %v2411, %v2424
        %v2551 = vmul.f32 %v2415, %v2424
        %v2552 = vmul.f32 %v2419, %v2424
        %v2553 = vadd.f32 %v1781, %v2425
        %v2554 = vadd.f32 %v1782, %v2426
        %v2555 = vadd.f32 %v1783, %v2427
        %v2556 = vadd.f32 %v1784, %v2428
        %v2557 = vadd.f32 %v1785, %v2429
        %v2558 = vadd.f32 %v1786, %v2430
        %v2559 = vadd.f32 %v1787, %v2431
        %v2560 = vadd.f32 %v1788, %v2432
        %v2561 = vadd.f32 %v1789, %v2433
        %v2562 = vadd.f32 %v1790, %v2434
        %v2563 = vadd.f32 %v1791, %v2435
        %v2564 = vadd.f32 %v1792, %v2436
        %v2565 = vadd.f32 %v1793, %v2437
        %v2566 = vadd.f32 %v1794, %v2438
        %v2567 = vadd.f32 %v1795, %v2439
        %v2568 = vadd.f32 %v1796, %v2440
        %v2569 = vadd.f32 %v1797, %v2441
        %v2570 = vadd.f32 %v1798, %v2442
        %v2571 = vadd.f32 %v1799, %v2443
        %v2572 = vadd.f32 %v1800, %v2444
        %v2573 = vadd.f32 %v1801, %v2445
        %v2574 = vadd.f32 %v1802, %v2446
        %v2575 = vadd.f32 %v1803, %v2447
        %v2576 = vadd.f32 %v1804, %v2448
        %v2577 = vadd.f32 %v1805, %v2449
        %v2578 = vadd.f32 %v1806, %v2450
        %v2579 = vadd.f32 %v1807, %v2451
        %v2580 = vadd.f32 %v1808, %v2452
        %v2581 = vadd.f32 %v1809, %v2453
        %v2582 = vadd.f32 %v1810, %v2454
        %v2583 = vadd.f32 %v1811, %v2455
        %v2584 = vadd.f32 %v1812, %v2456
        %v2585 = vadd.f32 %v1813, %v2457
        %v2586 = vadd.f32 %v1814, %v2458
        %v2587 = vadd.f32 %v1815, %v2459
        %v2588 = vadd.f32 %v1816, %v2460
        %v2589 = vadd.f32 %v1817, %v2461
        %v2590 = vadd.f32 %v1818, %v2462
        %v2591 = vadd.f32 %v1819, %v2463
        %v2592 = vadd.f32 %v1820, %v2464
        %v2593 = vadd.f32 %v1821, %v2465
        %v2594 = vadd.f32 %v1822, %v2466
        %v2595 = vadd.f32 %v1823, %v2467
        %v2596 = vadd.f32 %v1824, %v2468
        %v2597 = vadd.f32 %v1825, %v2469
        %v2598 = vadd.f32 %v1826, %v2470
        %v2599 = vadd.f32 %v1827, %v2471
        %v2600 = vadd.f32 %v1828, %v2472
        %v2601 = vadd.f32 %v1829, %v2473
        %v2602 = vadd.f32 %v1830, %v2474
        %v2603 = vadd.f32 %v1831, %v2475
        %v2604 = vadd.f32 %v1832, %v2476
        %v2605 = vadd.f32 %v1833, %v2477
        %v2606 = vadd.f32 %v1834, %v2478
        %v2607 = vadd.f32 %v1835, %v2479
        %v2608 = vadd.f32 %v1836, %v2480
        %v2609 = vadd.f32 %v1837, %v2481
        %v2610 = vadd.f32 %v1838, %v2482
        %v2611 = vadd.f32 %v1839, %v2483
        %v2612 = vadd.f32 %v1840, %v2484
        %v2613 = vadd.f32 %v1841, %v2485
        %v2614 = vadd.f32 %v1842, %v2486
        %v2615 = vadd.f32 %v1843, %v2487
        %v2616 = vadd.f32 %v1844, %v2488
        %v2617 = vadd.f32 %v1845, %v2489
        %v2618 = vadd.f32 %v1846, %v2490
        %v2619 = vadd.f32 %v1847, %v2491
        %v2620 = vadd.f32 %v1848, %v2492
        %v2621 = vadd.f32 %v1849, %v2493
        %v2622 = vadd.f32 %v1850, %v2494
        %v2623 = vadd.f32 %v1851, %v2495
        %v2624 = vadd.f32 %v1852, %v2496
        %v2625 = vadd.f32 %v1853, %v2497
        %v2626 = vadd.f32 %v1854, %v2498
        %v2627 = vadd.f32 %v1855, %v2499
        %v2628 = vadd.f32 %v1856, %v2500
        %v2629 = vadd.f32 %v1857, %v2501
        %v2630 = vadd.f32 %v1858, %v2502
        %v2631 = vadd.f32 %v1859, %v2503
        %v2632 = vadd.f32 %v1860, %v2504
        %v2633 = vadd.f32 %v1861, %v2505
        %v2634 = vadd.f32 %v1862, %v2506
        %v2635 = vadd.f32 %v1863, %v2507
        %v2636 = vadd.f32 %v1864, %v2508
        %v2637 = vadd.f32 %v1865, %v2509
        %v2638 = vadd.f32 %v1866, %v2510
        %v2639 = vadd.f32 %v1867, %v2511
        %v2640 = vadd.f32 %v1868, %v2512
        %v2641 = vadd.f32 %v1869, %v2513
        %v2642 = vadd.f32 %v1870, %v2514
        %v2643 = vadd.f32 %v1871, %v2515
        %v2644 = vadd.f32 %v1872, %v2516
        %v2645 = vadd.f32 %v1873, %v2517
        %v2646 = vadd.f32 %v1874, %v2518
        %v2647 = vadd.f32 %v1875, %v2519
        %v2648 = vadd.f32 %v1876, %v2520
        %v2649 = vadd.f32 %v1877, %v2521
        %v2650 = vadd.f32 %v1878, %v2522
        %v2651 = vadd.f32 %v1879, %v2523
        %v2652 = vadd.f32 %v1880, %v2524
        %v2653 = vadd.f32 %v1881, %v2525
        %v2654 = vadd.f32 %v1882, %v2526
        %v2655 = vadd.f32 %v1883, %v2527
        %v2656 = vadd.f32 %v1884, %v2528
        %v2657 = vadd.f32 %v1885, %v2529
        %v2658 = vadd.f32 %v1886, %v2530
        %v2659 = vadd.f32 %v1887, %v2531
        %v2660 = vadd.f32 %v1888, %v2532
        %v2661 = vadd.f32 %v1889, %v2533
        %v2662 = vadd.f32 %v1890, %v2534
        %v2663 = vadd.f32 %v1891, %v2535
        %v2664 = vadd.f32 %v1892, %v2536
        %v2665 = vadd.f32 %v1893, %v2537
        %v2666 = vadd.f32 %v1894, %v2538
        %v2667 = vadd.f32 %v1895, %v2539
        %v2668 = vadd.f32 %v1896, %v2540
        %v2669 = vadd.f32 %v1897, %v2541
        %v2670 = vadd.f32 %v1898, %v2542
        %v2671 = vadd.f32 %v1899, %v2543
        %v2672 = vadd.f32 %v1900, %v2544
        %v2673 = vadd.f32 %v1901, %v2545
        %v2674 = vadd.f32 %v1902, %v2546
        %v2675 = vadd.f32 %v1903, %v2547
        %v2676 = vadd.f32 %v1904, %v2548
        %v2677 = vadd.f32 %v1905, %v2549
        %v2678 = vadd.f32 %v1906, %v2550
        %v2679 = vadd.f32 %v1907, %v2551
        %v2680 = vadd.f32 %v1908, %v2552
        %2681 = vset.pattern.permute.xlu0 2
        %2682 = vperm.xlu0 %2681, %v1008
        %v2683 = vpop.permute.xlu0 %2682
        %2685 = vset.pattern.permute.xlu0 2
        %2686 = vperm.xlu0 %2685, %v1009
        %v2687 = vpop.permute.xlu0 %2686
        %2689 = vset.pattern.permute.xlu0 2
        %2690 = vperm.xlu0 %2689, %v1010
        %v2691 = vpop.permute.xlu0 %2690
        %2693 = vset.pattern.permute.xlu0 2
        %2694 = vperm.xlu0 %2693, %v1011
        %v2695 = vpop.permute.xlu0 %2694
        %2697 = vset.pattern.permute.xlu0 2
        %2698 = vperm.xlu0 %2697, %v1012
        %v2699 = vpop.permute.xlu0 %2698
        %2701 = vset.pattern.permute.xlu0 2
        %2702 = vperm.xlu0 %2701, %v1013
        %v2703 = vpop.permute.xlu0 %2702
        %2705 = vset.pattern.permute.xlu0 2
        %2706 = vperm.xlu0 %2705, %v1014
        %v2707 = vpop.permute.xlu0 %2706
        %2709 = vset.pattern.permute.xlu0 2
        %2710 = vperm.xlu0 %2709, %v1015
        %v2711 = vpop.permute.xlu0 %2710
        %2713 = vset.pattern.permute.xlu0 2
        %2714 = vperm.xlu0 %2713, %v1016
        %v2715 = vpop.permute.xlu0 %2714
        %2717 = vset.pattern.permute.xlu0 2
        %2718 = vperm.xlu0 %2717, %v1017
        %v2719 = vpop.permute.xlu0 %2718
        %2721 = vset.pattern.permute.xlu0 2
        %2722 = vperm.xlu0 %2721, %v1018
        %v2723 = vpop.permute.xlu0 %2722
        %2725 = vset.pattern.permute.xlu0 2
        %2726 = vperm.xlu0 %2725, %v1019
        %v2727 = vpop.permute.xlu0 %2726
        %2729 = vset.pattern.permute.xlu0 2
        %2730 = vperm.xlu0 %2729, %v1020
        %v2731 = vpop.permute.xlu0 %2730
        %2733 = vset.pattern.permute.xlu0 2
        %2734 = vperm.xlu0 %2733, %v1021
        %v2735 = vpop.permute.xlu0 %2734
        %2737 = vset.pattern.permute.xlu0 2
        %2738 = vperm.xlu0 %2737, %v1022
        %v2739 = vpop.permute.xlu0 %2738
        %2741 = vset.pattern.permute.xlu0 2
        %2742 = vperm.xlu0 %2741, %v1023
        %v2743 = vpop.permute.xlu0 %2742
        %2745 = vset.pattern.permute.xlu0 2
        %2746 = vperm.xlu0 %2745, %v1024
        %v2747 = vpop.permute.xlu0 %2746
        %2749 = vset.pattern.permute.xlu0 2
        %2750 = vperm.xlu0 %2749, %v1025
        %v2751 = vpop.permute.xlu0 %2750
        %2753 = vset.pattern.permute.xlu0 2
        %2754 = vperm.xlu0 %2753, %v1026
        %v2755 = vpop.permute.xlu0 %2754
        %2757 = vset.pattern.permute.xlu0 2
        %2758 = vperm.xlu0 %2757, %v1027
        %v2759 = vpop.permute.xlu0 %2758
        %2761 = vset.pattern.permute.xlu0 2
        %2762 = vperm.xlu0 %2761, %v1028
        %v2763 = vpop.permute.xlu0 %2762
        %2765 = vset.pattern.permute.xlu0 2
        %2766 = vperm.xlu0 %2765, %v1029
        %v2767 = vpop.permute.xlu0 %2766
        %2769 = vset.pattern.permute.xlu0 2
        %2770 = vperm.xlu0 %2769, %v1030
        %v2771 = vpop.permute.xlu0 %2770
        %2773 = vset.pattern.permute.xlu0 2
        %2774 = vperm.xlu0 %2773, %v1031
        %v2775 = vpop.permute.xlu0 %2774
        %2777 = vset.pattern.permute.xlu0 2
        %2778 = vperm.xlu0 %2777, %v1032
        %v2779 = vpop.permute.xlu0 %2778
        %2781 = vset.pattern.permute.xlu0 2
        %2782 = vperm.xlu0 %2781, %v1033
        %v2783 = vpop.permute.xlu0 %2782
        %2785 = vset.pattern.permute.xlu0 2
        %2786 = vperm.xlu0 %2785, %v1034
        %v2787 = vpop.permute.xlu0 %2786
        %2789 = vset.pattern.permute.xlu0 2
        %2790 = vperm.xlu0 %2789, %v1035
        %v2791 = vpop.permute.xlu0 %2790
        %2793 = vset.pattern.permute.xlu0 2
        %2794 = vperm.xlu0 %2793, %v1036
        %v2795 = vpop.permute.xlu0 %2794
        %2797 = vset.pattern.permute.xlu0 2
        %2798 = vperm.xlu0 %2797, %v1037
        %v2799 = vpop.permute.xlu0 %2798
        %2801 = vset.pattern.permute.xlu0 2
        %2802 = vperm.xlu0 %2801, %v1038
        %v2803 = vpop.permute.xlu0 %2802
        %2805 = vset.pattern.permute.xlu0 2
        %2806 = vperm.xlu0 %2805, %v1039
        %v2807 = vpop.permute.xlu0 %2806
        %2809 = vset.pattern.permute.xlu0 2
        %2810 = vperm.xlu0 %2809, %v1040
        %v2811 = vpop.permute.xlu0 %2810
        %2813 = vset.pattern.permute.xlu0 2
        %2814 = vperm.xlu0 %2813, %v1041
        %v2815 = vpop.permute.xlu0 %2814
        %2817 = vset.pattern.permute.xlu0 2
        %2818 = vperm.xlu0 %2817, %v1042
        %v2819 = vpop.permute.xlu0 %2818
        %2821 = vset.pattern.permute.xlu0 2
        %2822 = vperm.xlu0 %2821, %v1043
        %v2823 = vpop.permute.xlu0 %2822
        %2825 = vset.pattern.permute.xlu0 2
        %2826 = vperm.xlu0 %2825, %v1044
        %v2827 = vpop.permute.xlu0 %2826
        %2829 = vset.pattern.permute.xlu0 2
        %2830 = vperm.xlu0 %2829, %v1045
        %v2831 = vpop.permute.xlu0 %2830
        %2833 = vset.pattern.permute.xlu0 2
        %2834 = vperm.xlu0 %2833, %v1046
        %v2835 = vpop.permute.xlu0 %2834
        %2837 = vset.pattern.permute.xlu0 2
        %2838 = vperm.xlu0 %2837, %v1047
        %v2839 = vpop.permute.xlu0 %2838
        %2841 = vset.pattern.permute.xlu0 2
        %2842 = vperm.xlu0 %2841, %v1048
        %v2843 = vpop.permute.xlu0 %2842
        %2845 = vset.pattern.permute.xlu0 2
        %2846 = vperm.xlu0 %2845, %v1049
        %v2847 = vpop.permute.xlu0 %2846
        %2849 = vset.pattern.permute.xlu0 2
        %2850 = vperm.xlu0 %2849, %v1050
        %v2851 = vpop.permute.xlu0 %2850
        %2853 = vset.pattern.permute.xlu0 2
        %2854 = vperm.xlu0 %2853, %v1051
        %v2855 = vpop.permute.xlu0 %2854
        %2857 = vset.pattern.permute.xlu0 2
        %2858 = vperm.xlu0 %2857, %v1052
        %v2859 = vpop.permute.xlu0 %2858
        %2861 = vset.pattern.permute.xlu0 2
        %2862 = vperm.xlu0 %2861, %v1053
        %v2863 = vpop.permute.xlu0 %2862
        %2865 = vset.pattern.permute.xlu0 2
        %2866 = vperm.xlu0 %2865, %v1054
        %v2867 = vpop.permute.xlu0 %2866
        %2869 = vset.pattern.permute.xlu0 2
        %2870 = vperm.xlu0 %2869, %v1055
        %v2871 = vpop.permute.xlu0 %2870
        %2873 = vset.pattern.permute.xlu0 2
        %2874 = vperm.xlu0 %2873, %v1056
        %v2875 = vpop.permute.xlu0 %2874
        %2877 = vset.pattern.permute.xlu0 2
        %2878 = vperm.xlu0 %2877, %v1057
        %v2879 = vpop.permute.xlu0 %2878
        %2881 = vset.pattern.permute.xlu0 2
        %2882 = vperm.xlu0 %2881, %v1058
        %v2883 = vpop.permute.xlu0 %2882
        %2885 = vset.pattern.permute.xlu0 2
        %2886 = vperm.xlu0 %2885, %v1059
        %v2887 = vpop.permute.xlu0 %2886
        %2889 = vset.pattern.permute.xlu0 2
        %2890 = vperm.xlu0 %2889, %v1060
        %v2891 = vpop.permute.xlu0 %2890
        %2893 = vset.pattern.permute.xlu0 2
        %2894 = vperm.xlu0 %2893, %v1061
        %v2895 = vpop.permute.xlu0 %2894
        %2897 = vset.pattern.permute.xlu0 2
        %2898 = vperm.xlu0 %2897, %v1062
        %v2899 = vpop.permute.xlu0 %2898
        %2901 = vset.pattern.permute.xlu0 2
        %2902 = vperm.xlu0 %2901, %v1063
        %v2903 = vpop.permute.xlu0 %2902
        %2905 = vset.pattern.permute.xlu0 2
        %2906 = vperm.xlu0 %2905, %v1064
        %v2907 = vpop.permute.xlu0 %2906
        %2909 = vset.pattern.permute.xlu0 2
        %2910 = vperm.xlu0 %2909, %v1065
        %v2911 = vpop.permute.xlu0 %2910
        %2913 = vset.pattern.permute.xlu0 2
        %2914 = vperm.xlu0 %2913, %v1066
        %v2915 = vpop.permute.xlu0 %2914
        %2917 = vset.pattern.permute.xlu0 2
        %2918 = vperm.xlu0 %2917, %v1067
        %v2919 = vpop.permute.xlu0 %2918
        %2921 = vset.pattern.permute.xlu0 2
        %2922 = vperm.xlu0 %2921, %v1068
        %v2923 = vpop.permute.xlu0 %2922
        %2925 = vset.pattern.permute.xlu0 2
        %2926 = vperm.xlu0 %2925, %v1069
        %v2927 = vpop.permute.xlu0 %2926
        %2929 = vset.pattern.permute.xlu0 2
        %2930 = vperm.xlu0 %2929, %v1070
        %v2931 = vpop.permute.xlu0 %2930
        %2933 = vset.pattern.permute.xlu0 2
        %2934 = vperm.xlu0 %2933, %v1071
        %v2935 = vpop.permute.xlu0 %2934
        %2937 = vset.pattern.permute.xlu0 2
        %2938 = vperm.xlu0 %2937, %v1072
        %v2939 = vpop.permute.xlu0 %2938
        %2941 = vset.pattern.permute.xlu0 2
        %2942 = vperm.xlu0 %2941, %v1073
        %v2943 = vpop.permute.xlu0 %2942
        %2945 = vset.pattern.permute.xlu0 2
        %2946 = vperm.xlu0 %2945, %v1074
        %v2947 = vpop.permute.xlu0 %2946
        %2949 = vset.pattern.permute.xlu0 2
        %2950 = vperm.xlu0 %2949, %v1075
        %v2951 = vpop.permute.xlu0 %2950
        %2953 = vset.pattern.permute.xlu0 2
        %2954 = vperm.xlu0 %2953, %v1076
        %v2955 = vpop.permute.xlu0 %2954
        %2957 = vset.pattern.permute.xlu0 2
        %2958 = vperm.xlu0 %2957, %v1077
        %v2959 = vpop.permute.xlu0 %2958
        %2961 = vset.pattern.permute.xlu0 2
        %2962 = vperm.xlu0 %2961, %v1078
        %v2963 = vpop.permute.xlu0 %2962
        %2965 = vset.pattern.permute.xlu0 2
        %2966 = vperm.xlu0 %2965, %v1079
        %v2967 = vpop.permute.xlu0 %2966
        %2969 = vset.pattern.permute.xlu0 2
        %2970 = vperm.xlu0 %2969, %v1080
        %v2971 = vpop.permute.xlu0 %2970
        %2973 = vset.pattern.permute.xlu0 2
        %2974 = vperm.xlu0 %2973, %v1081
        %v2975 = vpop.permute.xlu0 %2974
        %2977 = vset.pattern.permute.xlu0 2
        %2978 = vperm.xlu0 %2977, %v1082
        %v2979 = vpop.permute.xlu0 %2978
        %2981 = vset.pattern.permute.xlu0 2
        %2982 = vperm.xlu0 %2981, %v1083
        %v2983 = vpop.permute.xlu0 %2982
        %2985 = vset.pattern.permute.xlu0 2
        %2986 = vperm.xlu0 %2985, %v1084
        %v2987 = vpop.permute.xlu0 %2986
        %2989 = vset.pattern.permute.xlu0 2
        %2990 = vperm.xlu0 %2989, %v1085
        %v2991 = vpop.permute.xlu0 %2990
        %2993 = vset.pattern.permute.xlu0 2
        %2994 = vperm.xlu0 %2993, %v1086
        %v2995 = vpop.permute.xlu0 %2994
        %2997 = vset.pattern.permute.xlu0 2
        %2998 = vperm.xlu0 %2997, %v1087
        %v2999 = vpop.permute.xlu0 %2998
        %3001 = vset.pattern.permute.xlu0 2
        %3002 = vperm.xlu0 %3001, %v1088
        %v3003 = vpop.permute.xlu0 %3002
        %3005 = vset.pattern.permute.xlu0 2
        %3006 = vperm.xlu0 %3005, %v1089
        %v3007 = vpop.permute.xlu0 %3006
        %3009 = vset.pattern.permute.xlu0 2
        %3010 = vperm.xlu0 %3009, %v1090
        %v3011 = vpop.permute.xlu0 %3010
        %3013 = vset.pattern.permute.xlu0 2
        %3014 = vperm.xlu0 %3013, %v1091
        %v3015 = vpop.permute.xlu0 %3014
        %3017 = vset.pattern.permute.xlu0 2
        %3018 = vperm.xlu0 %3017, %v1092
        %v3019 = vpop.permute.xlu0 %3018
        %3021 = vset.pattern.permute.xlu0 2
        %3022 = vperm.xlu0 %3021, %v1093
        %v3023 = vpop.permute.xlu0 %3022
        %3025 = vset.pattern.permute.xlu0 2
        %3026 = vperm.xlu0 %3025, %v1094
        %v3027 = vpop.permute.xlu0 %3026
        %3029 = vset.pattern.permute.xlu0 2
        %3030 = vperm.xlu0 %3029, %v1095
        %v3031 = vpop.permute.xlu0 %3030
        %3033 = vset.pattern.permute.xlu0 2
        %3034 = vperm.xlu0 %3033, %v1096
        %v3035 = vpop.permute.xlu0 %3034
        %3037 = vset.pattern.permute.xlu0 2
        %3038 = vperm.xlu0 %3037, %v1097
        %v3039 = vpop.permute.xlu0 %3038
        %3041 = vset.pattern.permute.xlu0 2
        %3042 = vperm.xlu0 %3041, %v1098
        %v3043 = vpop.permute.xlu0 %3042
        %3045 = vset.pattern.permute.xlu0 2
        %3046 = vperm.xlu0 %3045, %v1099
        %v3047 = vpop.permute.xlu0 %3046
        %3049 = vset.pattern.permute.xlu0 2
        %3050 = vperm.xlu0 %3049, %v1100
        %v3051 = vpop.permute.xlu0 %3050
        %3053 = vset.pattern.permute.xlu0 2
        %3054 = vperm.xlu0 %3053, %v1101
        %v3055 = vpop.permute.xlu0 %3054
        %3057 = vset.pattern.permute.xlu0 2
        %3058 = vperm.xlu0 %3057, %v1102
        %v3059 = vpop.permute.xlu0 %3058
        %3061 = vset.pattern.permute.xlu0 2
        %3062 = vperm.xlu0 %3061, %v1103
        %v3063 = vpop.permute.xlu0 %3062
        %3065 = vset.pattern.permute.xlu0 2
        %3066 = vperm.xlu0 %3065, %v1104
        %v3067 = vpop.permute.xlu0 %3066
        %3069 = vset.pattern.permute.xlu0 2
        %3070 = vperm.xlu0 %3069, %v1105
        %v3071 = vpop.permute.xlu0 %3070
        %3073 = vset.pattern.permute.xlu0 2
        %3074 = vperm.xlu0 %3073, %v1106
        %v3075 = vpop.permute.xlu0 %3074
        %3077 = vset.pattern.permute.xlu0 2
        %3078 = vperm.xlu0 %3077, %v1107
        %v3079 = vpop.permute.xlu0 %3078
        %3081 = vset.pattern.permute.xlu0 2
        %3082 = vperm.xlu0 %3081, %v1108
        %v3083 = vpop.permute.xlu0 %3082
        %3085 = vset.pattern.permute.xlu0 2
        %3086 = vperm.xlu0 %3085, %v1109
        %v3087 = vpop.permute.xlu0 %3086
        %3089 = vset.pattern.permute.xlu0 2
        %3090 = vperm.xlu0 %3089, %v1110
        %v3091 = vpop.permute.xlu0 %3090
        %3093 = vset.pattern.permute.xlu0 2
        %3094 = vperm.xlu0 %3093, %v1111
        %v3095 = vpop.permute.xlu0 %3094
        %3097 = vset.pattern.permute.xlu0 2
        %3098 = vperm.xlu0 %3097, %v1112
        %v3099 = vpop.permute.xlu0 %3098
        %3101 = vset.pattern.permute.xlu0 2
        %3102 = vperm.xlu0 %3101, %v1113
        %v3103 = vpop.permute.xlu0 %3102
        %3105 = vset.pattern.permute.xlu0 2
        %3106 = vperm.xlu0 %3105, %v1114
        %v3107 = vpop.permute.xlu0 %3106
        %3109 = vset.pattern.permute.xlu0 2
        %3110 = vperm.xlu0 %3109, %v1115
        %v3111 = vpop.permute.xlu0 %3110
        %3113 = vset.pattern.permute.xlu0 2
        %3114 = vperm.xlu0 %3113, %v1116
        %v3115 = vpop.permute.xlu0 %3114
        %3117 = vset.pattern.permute.xlu0 2
        %3118 = vperm.xlu0 %3117, %v1117
        %v3119 = vpop.permute.xlu0 %3118
        %3121 = vset.pattern.permute.xlu0 2
        %3122 = vperm.xlu0 %3121, %v1118
        %v3123 = vpop.permute.xlu0 %3122
        %3125 = vset.pattern.permute.xlu0 2
        %3126 = vperm.xlu0 %3125, %v1119
        %v3127 = vpop.permute.xlu0 %3126
        %3129 = vset.pattern.permute.xlu0 2
        %3130 = vperm.xlu0 %3129, %v1120
        %v3131 = vpop.permute.xlu0 %3130
        %3133 = vset.pattern.permute.xlu0 2
        %3134 = vperm.xlu0 %3133, %v1121
        %v3135 = vpop.permute.xlu0 %3134
        %3137 = vset.pattern.permute.xlu0 2
        %3138 = vperm.xlu0 %3137, %v1122
        %v3139 = vpop.permute.xlu0 %3138
        %3141 = vset.pattern.permute.xlu0 2
        %3142 = vperm.xlu0 %3141, %v1123
        %v3143 = vpop.permute.xlu0 %3142
        %3145 = vset.pattern.permute.xlu0 2
        %3146 = vperm.xlu0 %3145, %v1124
        %v3147 = vpop.permute.xlu0 %3146
        %3149 = vset.pattern.permute.xlu0 2
        %3150 = vperm.xlu0 %3149, %v1125
        %v3151 = vpop.permute.xlu0 %3150
        %3153 = vset.pattern.permute.xlu0 2
        %3154 = vperm.xlu0 %3153, %v1126
        %v3155 = vpop.permute.xlu0 %3154
        %3157 = vset.pattern.permute.xlu0 2
        %3158 = vperm.xlu0 %3157, %v1127
        %v3159 = vpop.permute.xlu0 %3158
        %3161 = vset.pattern.permute.xlu0 2
        %3162 = vperm.xlu0 %3161, %v1128
        %v3163 = vpop.permute.xlu0 %3162
        %3165 = vset.pattern.permute.xlu0 2
        %3166 = vperm.xlu0 %3165, %v1129
        %v3167 = vpop.permute.xlu0 %3166
        %3169 = vset.pattern.permute.xlu0 2
        %3170 = vperm.xlu0 %3169, %v1130
        %v3171 = vpop.permute.xlu0 %3170
        %3173 = vset.pattern.permute.xlu0 2
        %3174 = vperm.xlu0 %3173, %v1131
        %v3175 = vpop.permute.xlu0 %3174
        %3177 = vset.pattern.permute.xlu0 2
        %3178 = vperm.xlu0 %3177, %v1132
        %v3179 = vpop.permute.xlu0 %3178
        %3181 = vset.pattern.permute.xlu0 2
        %3182 = vperm.xlu0 %3181, %v1133
        %v3183 = vpop.permute.xlu0 %3182
        %3185 = vset.pattern.permute.xlu0 2
        %3186 = vperm.xlu0 %3185, %v1134
        %v3187 = vpop.permute.xlu0 %3186
        %3189 = vset.pattern.permute.xlu0 2
        %3190 = vperm.xlu0 %3189, %v1135
        %v3191 = vpop.permute.xlu0 %3190
        %v3193 = vlaneseq
        %v3194 = vshrl.u32 %v3193, 7
        %v3195 = vsub.s32 2, %v3194
        %v3196 = vrot.slane %v1136, %v3195
        %v3197 = vmul.f32 %v2683, %v3196
        %v3198 = vmul.f32 %v2687, %v3196
        %v3199 = vmul.f32 %v2691, %v3196
        %v3200 = vmul.f32 %v2695, %v3196
        %v3201 = vmul.f32 %v2699, %v3196
        %v3202 = vmul.f32 %v2703, %v3196
        %v3203 = vmul.f32 %v2707, %v3196
        %v3204 = vmul.f32 %v2711, %v3196
        %v3205 = vmul.f32 %v2715, %v3196
        %v3206 = vmul.f32 %v2719, %v3196
        %v3207 = vmul.f32 %v2723, %v3196
        %v3208 = vmul.f32 %v2727, %v3196
        %v3209 = vmul.f32 %v2731, %v3196
        %v3210 = vmul.f32 %v2735, %v3196
        %v3211 = vmul.f32 %v2739, %v3196
        %v3212 = vmul.f32 %v2743, %v3196
        %v3213 = vmul.f32 %v2747, %v3196
        %v3214 = vmul.f32 %v2751, %v3196
        %v3215 = vmul.f32 %v2755, %v3196
        %v3216 = vmul.f32 %v2759, %v3196
        %v3217 = vmul.f32 %v2763, %v3196
        %v3218 = vmul.f32 %v2767, %v3196
        %v3219 = vmul.f32 %v2771, %v3196
        %v3220 = vmul.f32 %v2775, %v3196
        %v3221 = vmul.f32 %v2779, %v3196
        %v3222 = vmul.f32 %v2783, %v3196
        %v3223 = vmul.f32 %v2787, %v3196
        %v3224 = vmul.f32 %v2791, %v3196
        %v3225 = vmul.f32 %v2795, %v3196
        %v3226 = vmul.f32 %v2799, %v3196
        %v3227 = vmul.f32 %v2803, %v3196
        %v3228 = vmul.f32 %v2807, %v3196
        %v3229 = vmul.f32 %v2811, %v3196
        %v3230 = vmul.f32 %v2815, %v3196
        %v3231 = vmul.f32 %v2819, %v3196
        %v3232 = vmul.f32 %v2823, %v3196
        %v3233 = vmul.f32 %v2827, %v3196
        %v3234 = vmul.f32 %v2831, %v3196
        %v3235 = vmul.f32 %v2835, %v3196
        %v3236 = vmul.f32 %v2839, %v3196
        %v3237 = vmul.f32 %v2843, %v3196
        %v3238 = vmul.f32 %v2847, %v3196
        %v3239 = vmul.f32 %v2851, %v3196
        %v3240 = vmul.f32 %v2855, %v3196
        %v3241 = vmul.f32 %v2859, %v3196
        %v3242 = vmul.f32 %v2863, %v3196
        %v3243 = vmul.f32 %v2867, %v3196
        %v3244 = vmul.f32 %v2871, %v3196
        %v3245 = vmul.f32 %v2875, %v3196
        %v3246 = vmul.f32 %v2879, %v3196
        %v3247 = vmul.f32 %v2883, %v3196
        %v3248 = vmul.f32 %v2887, %v3196
        %v3249 = vmul.f32 %v2891, %v3196
        %v3250 = vmul.f32 %v2895, %v3196
        %v3251 = vmul.f32 %v2899, %v3196
        %v3252 = vmul.f32 %v2903, %v3196
        %v3253 = vmul.f32 %v2907, %v3196
        %v3254 = vmul.f32 %v2911, %v3196
        %v3255 = vmul.f32 %v2915, %v3196
        %v3256 = vmul.f32 %v2919, %v3196
        %v3257 = vmul.f32 %v2923, %v3196
        %v3258 = vmul.f32 %v2927, %v3196
        %v3259 = vmul.f32 %v2931, %v3196
        %v3260 = vmul.f32 %v2935, %v3196
        %v3261 = vmul.f32 %v2939, %v3196
        %v3262 = vmul.f32 %v2943, %v3196
        %v3263 = vmul.f32 %v2947, %v3196
        %v3264 = vmul.f32 %v2951, %v3196
        %v3265 = vmul.f32 %v2955, %v3196
        %v3266 = vmul.f32 %v2959, %v3196
        %v3267 = vmul.f32 %v2963, %v3196
        %v3268 = vmul.f32 %v2967, %v3196
        %v3269 = vmul.f32 %v2971, %v3196
        %v3270 = vmul.f32 %v2975, %v3196
        %v3271 = vmul.f32 %v2979, %v3196
        %v3272 = vmul.f32 %v2983, %v3196
        %v3273 = vmul.f32 %v2987, %v3196
        %v3274 = vmul.f32 %v2991, %v3196
        %v3275 = vmul.f32 %v2995, %v3196
        %v3276 = vmul.f32 %v2999, %v3196
        %v3277 = vmul.f32 %v3003, %v3196
        %v3278 = vmul.f32 %v3007, %v3196
        %v3279 = vmul.f32 %v3011, %v3196
        %v3280 = vmul.f32 %v3015, %v3196
        %v3281 = vmul.f32 %v3019, %v3196
        %v3282 = vmul.f32 %v3023, %v3196
        %v3283 = vmul.f32 %v3027, %v3196
        %v3284 = vmul.f32 %v3031, %v3196
        %v3285 = vmul.f32 %v3035, %v3196
        %v3286 = vmul.f32 %v3039, %v3196
        %v3287 = vmul.f32 %v3043, %v3196
        %v3288 = vmul.f32 %v3047, %v3196
        %v3289 = vmul.f32 %v3051, %v3196
        %v3290 = vmul.f32 %v3055, %v3196
        %v3291 = vmul.f32 %v3059, %v3196
        %v3292 = vmul.f32 %v3063, %v3196
        %v3293 = vmul.f32 %v3067, %v3196
        %v3294 = vmul.f32 %v3071, %v3196
        %v3295 = vmul.f32 %v3075, %v3196
        %v3296 = vmul.f32 %v3079, %v3196
        %v3297 = vmul.f32 %v3083, %v3196
        %v3298 = vmul.f32 %v3087, %v3196
        %v3299 = vmul.f32 %v3091, %v3196
        %v3300 = vmul.f32 %v3095, %v3196
        %v3301 = vmul.f32 %v3099, %v3196
        %v3302 = vmul.f32 %v3103, %v3196
        %v3303 = vmul.f32 %v3107, %v3196
        %v3304 = vmul.f32 %v3111, %v3196
        %v3305 = vmul.f32 %v3115, %v3196
        %v3306 = vmul.f32 %v3119, %v3196
        %v3307 = vmul.f32 %v3123, %v3196
        %v3308 = vmul.f32 %v3127, %v3196
        %v3309 = vmul.f32 %v3131, %v3196
        %v3310 = vmul.f32 %v3135, %v3196
        %v3311 = vmul.f32 %v3139, %v3196
        %v3312 = vmul.f32 %v3143, %v3196
        %v3313 = vmul.f32 %v3147, %v3196
        %v3314 = vmul.f32 %v3151, %v3196
        %v3315 = vmul.f32 %v3155, %v3196
        %v3316 = vmul.f32 %v3159, %v3196
        %v3317 = vmul.f32 %v3163, %v3196
        %v3318 = vmul.f32 %v3167, %v3196
        %v3319 = vmul.f32 %v3171, %v3196
        %v3320 = vmul.f32 %v3175, %v3196
        %v3321 = vmul.f32 %v3179, %v3196
        %v3322 = vmul.f32 %v3183, %v3196
        %v3323 = vmul.f32 %v3187, %v3196
        %v3324 = vmul.f32 %v3191, %v3196
        %v3325 = vadd.f32 %v2553, %v3197
        %v3326 = vadd.f32 %v2554, %v3198
        %v3327 = vadd.f32 %v2555, %v3199
        %v3328 = vadd.f32 %v2556, %v3200
        %v3329 = vadd.f32 %v2557, %v3201
        %v3330 = vadd.f32 %v2558, %v3202
        %v3331 = vadd.f32 %v2559, %v3203
        %v3332 = vadd.f32 %v2560, %v3204
        %v3333 = vadd.f32 %v2561, %v3205
        %v3334 = vadd.f32 %v2562, %v3206
        %v3335 = vadd.f32 %v2563, %v3207
        %v3336 = vadd.f32 %v2564, %v3208
        %v3337 = vadd.f32 %v2565, %v3209
        %v3338 = vadd.f32 %v2566, %v3210
        %v3339 = vadd.f32 %v2567, %v3211
        %v3340 = vadd.f32 %v2568, %v3212
        %v3341 = vadd.f32 %v2569, %v3213
        %v3342 = vadd.f32 %v2570, %v3214
        %v3343 = vadd.f32 %v2571, %v3215
        %v3344 = vadd.f32 %v2572, %v3216
        %v3345 = vadd.f32 %v2573, %v3217
        %v3346 = vadd.f32 %v2574, %v3218
        %v3347 = vadd.f32 %v2575, %v3219
        %v3348 = vadd.f32 %v2576, %v3220
        %v3349 = vadd.f32 %v2577, %v3221
        %v3350 = vadd.f32 %v2578, %v3222
        %v3351 = vadd.f32 %v2579, %v3223
        %v3352 = vadd.f32 %v2580, %v3224
        %v3353 = vadd.f32 %v2581, %v3225
        %v3354 = vadd.f32 %v2582, %v3226
        %v3355 = vadd.f32 %v2583, %v3227
        %v3356 = vadd.f32 %v2584, %v3228
        %v3357 = vadd.f32 %v2585, %v3229
        %v3358 = vadd.f32 %v2586, %v3230
        %v3359 = vadd.f32 %v2587, %v3231
        %v3360 = vadd.f32 %v2588, %v3232
        %v3361 = vadd.f32 %v2589, %v3233
        %v3362 = vadd.f32 %v2590, %v3234
        %v3363 = vadd.f32 %v2591, %v3235
        %v3364 = vadd.f32 %v2592, %v3236
        %v3365 = vadd.f32 %v2593, %v3237
        %v3366 = vadd.f32 %v2594, %v3238
        %v3367 = vadd.f32 %v2595, %v3239
        %v3368 = vadd.f32 %v2596, %v3240
        %v3369 = vadd.f32 %v2597, %v3241
        %v3370 = vadd.f32 %v2598, %v3242
        %v3371 = vadd.f32 %v2599, %v3243
        %v3372 = vadd.f32 %v2600, %v3244
        %v3373 = vadd.f32 %v2601, %v3245
        %v3374 = vadd.f32 %v2602, %v3246
        %v3375 = vadd.f32 %v2603, %v3247
        %v3376 = vadd.f32 %v2604, %v3248
        %v3377 = vadd.f32 %v2605, %v3249
        %v3378 = vadd.f32 %v2606, %v3250
        %v3379 = vadd.f32 %v2607, %v3251
        %v3380 = vadd.f32 %v2608, %v3252
        %v3381 = vadd.f32 %v2609, %v3253
        %v3382 = vadd.f32 %v2610, %v3254
        %v3383 = vadd.f32 %v2611, %v3255
        %v3384 = vadd.f32 %v2612, %v3256
        %v3385 = vadd.f32 %v2613, %v3257
        %v3386 = vadd.f32 %v2614, %v3258
        %v3387 = vadd.f32 %v2615, %v3259
        %v3388 = vadd.f32 %v2616, %v3260
        %v3389 = vadd.f32 %v2617, %v3261
        %v3390 = vadd.f32 %v2618, %v3262
        %v3391 = vadd.f32 %v2619, %v3263
        %v3392 = vadd.f32 %v2620, %v3264
        %v3393 = vadd.f32 %v2621, %v3265
        %v3394 = vadd.f32 %v2622, %v3266
        %v3395 = vadd.f32 %v2623, %v3267
        %v3396 = vadd.f32 %v2624, %v3268
        %v3397 = vadd.f32 %v2625, %v3269
        %v3398 = vadd.f32 %v2626, %v3270
        %v3399 = vadd.f32 %v2627, %v3271
        %v3400 = vadd.f32 %v2628, %v3272
        %v3401 = vadd.f32 %v2629, %v3273
        %v3402 = vadd.f32 %v2630, %v3274
        %v3403 = vadd.f32 %v2631, %v3275
        %v3404 = vadd.f32 %v2632, %v3276
        %v3405 = vadd.f32 %v2633, %v3277
        %v3406 = vadd.f32 %v2634, %v3278
        %v3407 = vadd.f32 %v2635, %v3279
        %v3408 = vadd.f32 %v2636, %v3280
        %v3409 = vadd.f32 %v2637, %v3281
        %v3410 = vadd.f32 %v2638, %v3282
        %v3411 = vadd.f32 %v2639, %v3283
        %v3412 = vadd.f32 %v2640, %v3284
        %v3413 = vadd.f32 %v2641, %v3285
        %v3414 = vadd.f32 %v2642, %v3286
        %v3415 = vadd.f32 %v2643, %v3287
        %v3416 = vadd.f32 %v2644, %v3288
        %v3417 = vadd.f32 %v2645, %v3289
        %v3418 = vadd.f32 %v2646, %v3290
        %v3419 = vadd.f32 %v2647, %v3291
        %v3420 = vadd.f32 %v2648, %v3292
        %v3421 = vadd.f32 %v2649, %v3293
        %v3422 = vadd.f32 %v2650, %v3294
        %v3423 = vadd.f32 %v2651, %v3295
        %v3424 = vadd.f32 %v2652, %v3296
        %v3425 = vadd.f32 %v2653, %v3297
        %v3426 = vadd.f32 %v2654, %v3298
        %v3427 = vadd.f32 %v2655, %v3299
        %v3428 = vadd.f32 %v2656, %v3300
        %v3429 = vadd.f32 %v2657, %v3301
        %v3430 = vadd.f32 %v2658, %v3302
        %v3431 = vadd.f32 %v2659, %v3303
        %v3432 = vadd.f32 %v2660, %v3304
        %v3433 = vadd.f32 %v2661, %v3305
        %v3434 = vadd.f32 %v2662, %v3306
        %v3435 = vadd.f32 %v2663, %v3307
        %v3436 = vadd.f32 %v2664, %v3308
        %v3437 = vadd.f32 %v2665, %v3309
        %v3438 = vadd.f32 %v2666, %v3310
        %v3439 = vadd.f32 %v2667, %v3311
        %v3440 = vadd.f32 %v2668, %v3312
        %v3441 = vadd.f32 %v2669, %v3313
        %v3442 = vadd.f32 %v2670, %v3314
        %v3443 = vadd.f32 %v2671, %v3315
        %v3444 = vadd.f32 %v2672, %v3316
        %v3445 = vadd.f32 %v2673, %v3317
        %v3446 = vadd.f32 %v2674, %v3318
        %v3447 = vadd.f32 %v2675, %v3319
        %v3448 = vadd.f32 %v2676, %v3320
        %v3449 = vadd.f32 %v2677, %v3321
        %v3450 = vadd.f32 %v2678, %v3322
        %v3451 = vadd.f32 %v2679, %v3323
        %v3452 = vadd.f32 %v2680, %v3324
        %v3453 = vld [vmem:[%s2] sm:$0x1]
        %v3455 = vlaneseq
        %v3456 = vshrl.u32 %v3455, 7
        %v3457 = vsub.s32 0, %v3456
        %v3458 = vrot.slane %v3453, %v3457
        %v3460 = vadd.f32 %v3325, %v3458
        %v3461 = vadd.f32 %v3326, %v3458
        %v3462 = vadd.f32 %v3327, %v3458
        %v3463 = vadd.f32 %v3328, %v3458
        %v3464 = vadd.f32 %v3329, %v3458
        %v3465 = vadd.f32 %v3330, %v3458
        %v3466 = vadd.f32 %v3331, %v3458
        %v3467 = vadd.f32 %v3332, %v3458
        %v3468 = vadd.f32 %v3333, %v3458
        %v3469 = vadd.f32 %v3334, %v3458
        %v3470 = vadd.f32 %v3335, %v3458
        %v3471 = vadd.f32 %v3336, %v3458
        %v3472 = vadd.f32 %v3337, %v3458
        %v3473 = vadd.f32 %v3338, %v3458
        %v3474 = vadd.f32 %v3339, %v3458
        %v3475 = vadd.f32 %v3340, %v3458
        %v3476 = vadd.f32 %v3341, %v3458
        %v3477 = vadd.f32 %v3342, %v3458
        %v3478 = vadd.f32 %v3343, %v3458
        %v3479 = vadd.f32 %v3344, %v3458
        %v3480 = vadd.f32 %v3345, %v3458
        %v3481 = vadd.f32 %v3346, %v3458
        %v3482 = vadd.f32 %v3347, %v3458
        %v3483 = vadd.f32 %v3348, %v3458
        %v3484 = vadd.f32 %v3349, %v3458
        %v3485 = vadd.f32 %v3350, %v3458
        %v3486 = vadd.f32 %v3351, %v3458
        %v3487 = vadd.f32 %v3352, %v3458
        %v3488 = vadd.f32 %v3353, %v3458
        %v3489 = vadd.f32 %v3354, %v3458
        %v3490 = vadd.f32 %v3355, %v3458
        %v3491 = vadd.f32 %v3356, %v3458
        %v3492 = vadd.f32 %v3357, %v3458
        %v3493 = vadd.f32 %v3358, %v3458
        %v3494 = vadd.f32 %v3359, %v3458
        %v3495 = vadd.f32 %v3360, %v3458
        %v3496 = vadd.f32 %v3361, %v3458
        %v3497 = vadd.f32 %v3362, %v3458
        %v3498 = vadd.f32 %v3363, %v3458
        %v3499 = vadd.f32 %v3364, %v3458
        %v3500 = vadd.f32 %v3365, %v3458
        %v3501 = vadd.f32 %v3366, %v3458
        %v3502 = vadd.f32 %v3367, %v3458
        %v3503 = vadd.f32 %v3368, %v3458
        %v3504 = vadd.f32 %v3369, %v3458
        %v3505 = vadd.f32 %v3370, %v3458
        %v3506 = vadd.f32 %v3371, %v3458
        %v3507 = vadd.f32 %v3372, %v3458
        %v3508 = vadd.f32 %v3373, %v3458
        %v3509 = vadd.f32 %v3374, %v3458
        %v3510 = vadd.f32 %v3375, %v3458
        %v3511 = vadd.f32 %v3376, %v3458
        %v3512 = vadd.f32 %v3377, %v3458
        %v3513 = vadd.f32 %v3378, %v3458
        %v3514 = vadd.f32 %v3379, %v3458
        %v3515 = vadd.f32 %v3380, %v3458
        %v3516 = vadd.f32 %v3381, %v3458
        %v3517 = vadd.f32 %v3382, %v3458
        %v3518 = vadd.f32 %v3383, %v3458
        %v3519 = vadd.f32 %v3384, %v3458
        %v3520 = vadd.f32 %v3385, %v3458
        %v3521 = vadd.f32 %v3386, %v3458
        %v3522 = vadd.f32 %v3387, %v3458
        %v3523 = vadd.f32 %v3388, %v3458
        %v3524 = vadd.f32 %v3389, %v3458
        %v3525 = vadd.f32 %v3390, %v3458
        %v3526 = vadd.f32 %v3391, %v3458
        %v3527 = vadd.f32 %v3392, %v3458
        %v3528 = vadd.f32 %v3393, %v3458
        %v3529 = vadd.f32 %v3394, %v3458
        %v3530 = vadd.f32 %v3395, %v3458
        %v3531 = vadd.f32 %v3396, %v3458
        %v3532 = vadd.f32 %v3397, %v3458
        %v3533 = vadd.f32 %v3398, %v3458
        %v3534 = vadd.f32 %v3399, %v3458
        %v3535 = vadd.f32 %v3400, %v3458
        %v3536 = vadd.f32 %v3401, %v3458
        %v3537 = vadd.f32 %v3402, %v3458
        %v3538 = vadd.f32 %v3403, %v3458
        %v3539 = vadd.f32 %v3404, %v3458
        %v3540 = vadd.f32 %v3405, %v3458
        %v3541 = vadd.f32 %v3406, %v3458
        %v3542 = vadd.f32 %v3407, %v3458
        %v3543 = vadd.f32 %v3408, %v3458
        %v3544 = vadd.f32 %v3409, %v3458
        %v3545 = vadd.f32 %v3410, %v3458
        %v3546 = vadd.f32 %v3411, %v3458
        %v3547 = vadd.f32 %v3412, %v3458
        %v3548 = vadd.f32 %v3413, %v3458
        %v3549 = vadd.f32 %v3414, %v3458
        %v3550 = vadd.f32 %v3415, %v3458
        %v3551 = vadd.f32 %v3416, %v3458
        %v3552 = vadd.f32 %v3417, %v3458
        %v3553 = vadd.f32 %v3418, %v3458
        %v3554 = vadd.f32 %v3419, %v3458
        %v3555 = vadd.f32 %v3420, %v3458
        %v3556 = vadd.f32 %v3421, %v3458
        %v3557 = vadd.f32 %v3422, %v3458
        %v3558 = vadd.f32 %v3423, %v3458
        %v3559 = vadd.f32 %v3424, %v3458
        %v3560 = vadd.f32 %v3425, %v3458
        %v3561 = vadd.f32 %v3426, %v3458
        %v3562 = vadd.f32 %v3427, %v3458
        %v3563 = vadd.f32 %v3428, %v3458
        %v3564 = vadd.f32 %v3429, %v3458
        %v3565 = vadd.f32 %v3430, %v3458
        %v3566 = vadd.f32 %v3431, %v3458
        %v3567 = vadd.f32 %v3432, %v3458
        %v3568 = vadd.f32 %v3433, %v3458
        %v3569 = vadd.f32 %v3434, %v3458
        %v3570 = vadd.f32 %v3435, %v3458
        %v3571 = vadd.f32 %v3436, %v3458
        %v3572 = vadd.f32 %v3437, %v3458
        %v3573 = vadd.f32 %v3438, %v3458
        %v3574 = vadd.f32 %v3439, %v3458
        %v3575 = vadd.f32 %v3440, %v3458
        %v3576 = vadd.f32 %v3441, %v3458
        %v3577 = vadd.f32 %v3442, %v3458
        %v3578 = vadd.f32 %v3443, %v3458
        %v3579 = vadd.f32 %v3444, %v3458
        %v3580 = vadd.f32 %v3445, %v3458
        %v3581 = vadd.f32 %v3446, %v3458
        %v3582 = vadd.f32 %v3447, %v3458
        %v3583 = vadd.f32 %v3448, %v3458
        %v3584 = vadd.f32 %v3449, %v3458
        %v3585 = vadd.f32 %v3450, %v3458
        %v3586 = vadd.f32 %v3451, %v3458
        %v3587 = vadd.f32 %v3452, %v3458
        %v3588 = vmax.f32 %v3460, 0.0
        %v3589 = vmax.f32 %v3461, 0.0
        %v3590 = vmax.f32 %v3462, 0.0
        %v3591 = vmax.f32 %v3463, 0.0
        %v3592 = vmax.f32 %v3464, 0.0
        %v3593 = vmax.f32 %v3465, 0.0
        %v3594 = vmax.f32 %v3466, 0.0
        %v3595 = vmax.f32 %v3467, 0.0
        %v3596 = vmax.f32 %v3468, 0.0
        %v3597 = vmax.f32 %v3469, 0.0
        %v3598 = vmax.f32 %v3470, 0.0
        %v3599 = vmax.f32 %v3471, 0.0
        %v3600 = vmax.f32 %v3472, 0.0
        %v3601 = vmax.f32 %v3473, 0.0
        %v3602 = vmax.f32 %v3474, 0.0
        %v3603 = vmax.f32 %v3475, 0.0
        %v3604 = vmax.f32 %v3476, 0.0
        %v3605 = vmax.f32 %v3477, 0.0
        %v3606 = vmax.f32 %v3478, 0.0
        %v3607 = vmax.f32 %v3479, 0.0
        %v3608 = vmax.f32 %v3480, 0.0
        %v3609 = vmax.f32 %v3481, 0.0
        %v3610 = vmax.f32 %v3482, 0.0
        %v3611 = vmax.f32 %v3483, 0.0
        %v3612 = vmax.f32 %v3484, 0.0
        %v3613 = vmax.f32 %v3485, 0.0
        %v3614 = vmax.f32 %v3486, 0.0
        %v3615 = vmax.f32 %v3487, 0.0
        %v3616 = vmax.f32 %v3488, 0.0
        %v3617 = vmax.f32 %v3489, 0.0
        %v3618 = vmax.f32 %v3490, 0.0
        %v3619 = vmax.f32 %v3491, 0.0
        %v3620 = vmax.f32 %v3492, 0.0
        %v3621 = vmax.f32 %v3493, 0.0
        %v3622 = vmax.f32 %v3494, 0.0
        %v3623 = vmax.f32 %v3495, 0.0
        %v3624 = vmax.f32 %v3496, 0.0
        %v3625 = vmax.f32 %v3497, 0.0
        %v3626 = vmax.f32 %v3498, 0.0
        %v3627 = vmax.f32 %v3499, 0.0
        %v3628 = vmax.f32 %v3500, 0.0
        %v3629 = vmax.f32 %v3501, 0.0
        %v3630 = vmax.f32 %v3502, 0.0
        %v3631 = vmax.f32 %v3503, 0.0
        %v3632 = vmax.f32 %v3504, 0.0
        %v3633 = vmax.f32 %v3505, 0.0
        %v3634 = vmax.f32 %v3506, 0.0
        %v3635 = vmax.f32 %v3507, 0.0
        %v3636 = vmax.f32 %v3508, 0.0
        %v3637 = vmax.f32 %v3509, 0.0
        %v3638 = vmax.f32 %v3510, 0.0
        %v3639 = vmax.f32 %v3511, 0.0
        %v3640 = vmax.f32 %v3512, 0.0
        %v3641 = vmax.f32 %v3513, 0.0
        %v3642 = vmax.f32 %v3514, 0.0
        %v3643 = vmax.f32 %v3515, 0.0
        %v3644 = vmax.f32 %v3516, 0.0
        %v3645 = vmax.f32 %v3517, 0.0
        %v3646 = vmax.f32 %v3518, 0.0
        %v3647 = vmax.f32 %v3519, 0.0
        %v3648 = vmax.f32 %v3520, 0.0
        %v3649 = vmax.f32 %v3521, 0.0
        %v3650 = vmax.f32 %v3522, 0.0
        %v3651 = vmax.f32 %v3523, 0.0
        %v3652 = vmax.f32 %v3524, 0.0
        %v3653 = vmax.f32 %v3525, 0.0
        %v3654 = vmax.f32 %v3526, 0.0
        %v3655 = vmax.f32 %v3527, 0.0
        %v3656 = vmax.f32 %v3528, 0.0
        %v3657 = vmax.f32 %v3529, 0.0
        %v3658 = vmax.f32 %v3530, 0.0
        %v3659 = vmax.f32 %v3531, 0.0
        %v3660 = vmax.f32 %v3532, 0.0
        %v3661 = vmax.f32 %v3533, 0.0
        %v3662 = vmax.f32 %v3534, 0.0
        %v3663 = vmax.f32 %v3535, 0.0
        %v3664 = vmax.f32 %v3536, 0.0
        %v3665 = vmax.f32 %v3537, 0.0
        %v3666 = vmax.f32 %v3538, 0.0
        %v3667 = vmax.f32 %v3539, 0.0
        %v3668 = vmax.f32 %v3540, 0.0
        %v3669 = vmax.f32 %v3541, 0.0
        %v3670 = vmax.f32 %v3542, 0.0
        %v3671 = vmax.f32 %v3543, 0.0
        %v3672 = vmax.f32 %v3544, 0.0
        %v3673 = vmax.f32 %v3545, 0.0
        %v3674 = vmax.f32 %v3546, 0.0
        %v3675 = vmax.f32 %v3547, 0.0
        %v3676 = vmax.f32 %v3548, 0.0
        %v3677 = vmax.f32 %v3549, 0.0
        %v3678 = vmax.f32 %v3550, 0.0
        %v3679 = vmax.f32 %v3551, 0.0
        %v3680 = vmax.f32 %v3552, 0.0
        %v3681 = vmax.f32 %v3553, 0.0
        %v3682 = vmax.f32 %v3554, 0.0
        %v3683 = vmax.f32 %v3555, 0.0
        %v3684 = vmax.f32 %v3556, 0.0
        %v3685 = vmax.f32 %v3557, 0.0
        %v3686 = vmax.f32 %v3558, 0.0
        %v3687 = vmax.f32 %v3559, 0.0
        %v3688 = vmax.f32 %v3560, 0.0
        %v3689 = vmax.f32 %v3561, 0.0
        %v3690 = vmax.f32 %v3562, 0.0
        %v3691 = vmax.f32 %v3563, 0.0
        %v3692 = vmax.f32 %v3564, 0.0
        %v3693 = vmax.f32 %v3565, 0.0
        %v3694 = vmax.f32 %v3566, 0.0
        %v3695 = vmax.f32 %v3567, 0.0
        %v3696 = vmax.f32 %v3568, 0.0
        %v3697 = vmax.f32 %v3569, 0.0
        %v3698 = vmax.f32 %v3570, 0.0
        %v3699 = vmax.f32 %v3571, 0.0
        %v3700 = vmax.f32 %v3572, 0.0
        %v3701 = vmax.f32 %v3573, 0.0
        %v3702 = vmax.f32 %v3574, 0.0
        %v3703 = vmax.f32 %v3575, 0.0
        %v3704 = vmax.f32 %v3576, 0.0
        %v3705 = vmax.f32 %v3577, 0.0
        %v3706 = vmax.f32 %v3578, 0.0
        %v3707 = vmax.f32 %v3579, 0.0
        %v3708 = vmax.f32 %v3580, 0.0
        %v3709 = vmax.f32 %v3581, 0.0
        %v3710 = vmax.f32 %v3582, 0.0
        %v3711 = vmax.f32 %v3583, 0.0
        %v3712 = vmax.f32 %v3584, 0.0
        %v3713 = vmax.f32 %v3585, 0.0
        %v3714 = vmax.f32 %v3586, 0.0
        %v3715 = vmax.f32 %v3587, 0.0
        %v3716 = vpack.c.bf16 %v3589, %v3588
        %v3717 = vpack.c.bf16 %v3591, %v3590
        %v3718 = vpack.c.bf16 %v3593, %v3592
        %v3719 = vpack.c.bf16 %v3595, %v3594
        %v3720 = vpack.c.bf16 %v3597, %v3596
        %v3721 = vpack.c.bf16 %v3599, %v3598
        %v3722 = vpack.c.bf16 %v3601, %v3600
        %v3723 = vpack.c.bf16 %v3603, %v3602
        %v3724 = vpack.c.bf16 %v3605, %v3604
        %v3725 = vpack.c.bf16 %v3607, %v3606
        %v3726 = vpack.c.bf16 %v3609, %v3608
        %v3727 = vpack.c.bf16 %v3611, %v3610
        %v3728 = vpack.c.bf16 %v3613, %v3612
        %v3729 = vpack.c.bf16 %v3615, %v3614
        %v3730 = vpack.c.bf16 %v3617, %v3616
        %v3731 = vpack.c.bf16 %v3619, %v3618
        %v3732 = vpack.c.bf16 %v3621, %v3620
        %v3733 = vpack.c.bf16 %v3623, %v3622
        %v3734 = vpack.c.bf16 %v3625, %v3624
        %v3735 = vpack.c.bf16 %v3627, %v3626
        %v3736 = vpack.c.bf16 %v3629, %v3628
        %v3737 = vpack.c.bf16 %v3631, %v3630
        %v3738 = vpack.c.bf16 %v3633, %v3632
        %v3739 = vpack.c.bf16 %v3635, %v3634
        %v3740 = vpack.c.bf16 %v3637, %v3636
        %v3741 = vpack.c.bf16 %v3639, %v3638
        %v3742 = vpack.c.bf16 %v3641, %v3640
        %v3743 = vpack.c.bf16 %v3643, %v3642
        %v3744 = vpack.c.bf16 %v3645, %v3644
        %v3745 = vpack.c.bf16 %v3647, %v3646
        %v3746 = vpack.c.bf16 %v3649, %v3648
        %v3747 = vpack.c.bf16 %v3651, %v3650
        %v3748 = vpack.c.bf16 %v3653, %v3652
        %v3749 = vpack.c.bf16 %v3655, %v3654
        %v3750 = vpack.c.bf16 %v3657, %v3656
        %v3751 = vpack.c.bf16 %v3659, %v3658
        %v3752 = vpack.c.bf16 %v3661, %v3660
        %v3753 = vpack.c.bf16 %v3663, %v3662
        %v3754 = vpack.c.bf16 %v3665, %v3664
        %v3755 = vpack.c.bf16 %v3667, %v3666
        %v3756 = vpack.c.bf16 %v3669, %v3668
        %v3757 = vpack.c.bf16 %v3671, %v3670
        %v3758 = vpack.c.bf16 %v3673, %v3672
        %v3759 = vpack.c.bf16 %v3675, %v3674
        %v3760 = vpack.c.bf16 %v3677, %v3676
        %v3761 = vpack.c.bf16 %v3679, %v3678
        %v3762 = vpack.c.bf16 %v3681, %v3680
        %v3763 = vpack.c.bf16 %v3683, %v3682
        %v3764 = vpack.c.bf16 %v3685, %v3684
        %v3765 = vpack.c.bf16 %v3687, %v3686
        %v3766 = vpack.c.bf16 %v3689, %v3688
        %v3767 = vpack.c.bf16 %v3691, %v3690
        %v3768 = vpack.c.bf16 %v3693, %v3692
        %v3769 = vpack.c.bf16 %v3695, %v3694
        %v3770 = vpack.c.bf16 %v3697, %v3696
        %v3771 = vpack.c.bf16 %v3699, %v3698
        %v3772 = vpack.c.bf16 %v3701, %v3700
        %v3773 = vpack.c.bf16 %v3703, %v3702
        %v3774 = vpack.c.bf16 %v3705, %v3704
        %v3775 = vpack.c.bf16 %v3707, %v3706
        %v3776 = vpack.c.bf16 %v3709, %v3708
        %v3777 = vpack.c.bf16 %v3711, %v3710
        %v3778 = vpack.c.bf16 %v3713, %v3712
        %v3779 = vpack.c.bf16 %v3715, %v3714
        %v3780 = vld [vmem:[%s3] sm:$0xf]
        %v3781 = vld [vmem:[%s3 + $0x4] sm:$0xf]
        %v3782 = vld [vmem:[%s3 + $0x8] sm:$0xf]
        %v3783 = vld [vmem:[%s3 + $0xc] sm:$0xf]
        %v3784 = vld [vmem:[%s3 + $0x10] sm:$0xf]
        %v3785 = vld [vmem:[%s3 + $0x14] sm:$0xf]
        %v3786 = vld [vmem:[%s3 + $0x18] sm:$0xf]
        %v3787 = vld [vmem:[%s3 + $0x1c] sm:$0xf]
        %v3796 = vunpack.c.l.b16 %v3780
        %v3797 = vunpack.c.l.b16 %v3781
        %v3798 = vunpack.c.l.b16 %v3782
        %v3799 = vunpack.c.l.b16 %v3783
        %v3800 = vunpack.c.l.b16 %v3784
        %v3801 = vunpack.c.l.b16 %v3785
        %v3802 = vunpack.c.l.b16 %v3786
        %v3803 = vunpack.c.l.b16 %v3787
        %v3804 = vpack.c.b16 %v3797, %v3796
        %v3805 = vpack.c.b16 %v3799, %v3798
        %v3806 = vpack.c.b16 %v3801, %v3800
        %v3807 = vpack.c.b16 %v3803, %v3802
        %vm3812 = vcmask 523264
        %v3814 = vsel %vm3812, %v3716, 0
        %v3817 = vsel %vm3812, %v3717, 0
        %v3820 = vsel %vm3812, %v3718, 0
        %v3823 = vsel %vm3812, %v3719, 0
        %v3826 = vsel %vm3812, %v3720, 0
        %v3829 = vsel %vm3812, %v3721, 0
        %v3832 = vsel %vm3812, %v3722, 0
        %v3835 = vsel %vm3812, %v3723, 0
        %v3838 = vsel %vm3812, %v3724, 0
        %v3841 = vsel %vm3812, %v3725, 0
        %v3844 = vsel %vm3812, %v3726, 0
        %v3847 = vsel %vm3812, %v3727, 0
        %v3850 = vsel %vm3812, %v3728, 0
        %v3853 = vsel %vm3812, %v3729, 0
        %v3856 = vsel %vm3812, %v3730, 0
        %v3859 = vsel %vm3812, %v3731, 0
        %v3862 = vsel %vm3812, %v3732, 0
        %v3865 = vsel %vm3812, %v3733, 0
        %v3868 = vsel %vm3812, %v3734, 0
        %v3871 = vsel %vm3812, %v3735, 0
        %v3874 = vsel %vm3812, %v3736, 0
        %v3877 = vsel %vm3812, %v3737, 0
        %v3880 = vsel %vm3812, %v3738, 0
        %v3883 = vsel %vm3812, %v3739, 0
        %v3886 = vsel %vm3812, %v3740, 0
        %v3889 = vsel %vm3812, %v3741, 0
        %v3892 = vsel %vm3812, %v3742, 0
        %v3895 = vsel %vm3812, %v3743, 0
        %v3898 = vsel %vm3812, %v3744, 0
        %v3901 = vsel %vm3812, %v3745, 0
        %v3904 = vsel %vm3812, %v3746, 0
        %v3907 = vsel %vm3812, %v3747, 0
        %v3910 = vsel %vm3812, %v3748, 0
        %v3913 = vsel %vm3812, %v3749, 0
        %v3916 = vsel %vm3812, %v3750, 0
        %v3919 = vsel %vm3812, %v3751, 0
        %v3922 = vsel %vm3812, %v3752, 0
        %v3925 = vsel %vm3812, %v3753, 0
        %v3928 = vsel %vm3812, %v3754, 0
        %v3931 = vsel %vm3812, %v3755, 0
        %v3934 = vsel %vm3812, %v3756, 0
        %v3937 = vsel %vm3812, %v3757, 0
        %v3940 = vsel %vm3812, %v3758, 0
        %v3943 = vsel %vm3812, %v3759, 0
        %v3946 = vsel %vm3812, %v3760, 0
        %v3949 = vsel %vm3812, %v3761, 0
        %v3952 = vsel %vm3812, %v3762, 0
        %v3955 = vsel %vm3812, %v3763, 0
        %v3958 = vsel %vm3812, %v3764, 0
        %v3961 = vsel %vm3812, %v3765, 0
        %v3964 = vsel %vm3812, %v3766, 0
        %v3967 = vsel %vm3812, %v3767, 0
        %v3970 = vsel %vm3812, %v3768, 0
        %v3973 = vsel %vm3812, %v3769, 0
        %v3976 = vsel %vm3812, %v3770, 0
        %v3979 = vsel %vm3812, %v3771, 0
        %v3982 = vsel %vm3812, %v3772, 0
        %v3985 = vsel %vm3812, %v3773, 0
        %v3988 = vsel %vm3812, %v3774, 0
        %v3991 = vsel %vm3812, %v3775, 0
        %v3994 = vsel %vm3812, %v3776, 0
        %v3997 = vsel %vm3812, %v3777, 0
        %v4000 = vsel %vm3812, %v3778, 0
        %v4003 = vsel %vm3812, %v3779, 0
        %4005 = vmatprep.subr.bf16.mxu0 0
        %4006 = vmatpush1.bf16.msra.mxu0 %v3804
        %4007 = vmatprep.subr.bf16.mxu0 0
        %4008 = vmatpush1.bf16.msra.mxu0 %v3805
        %4009 = vmatprep.subr.bf16.mxu0 0
        %4010 = vmatpush1.bf16.msra.mxu0 %v3806
        %4011 = vmatprep.subr.bf16.mxu0 0
        %4012 = vmatpush1.bf16.msra.mxu0 %v3807
        %4013 = vmatprep.subr.bf16.mxu0 0
        %4014 = vmatpush1.bf16.msra.mxu0 0
        %4015 = vmatprep.subr.bf16.mxu0 0
        %4016 = vmatpush1.bf16.msra.mxu0 0
        %4017 = vmatprep.subr.bf16.mxu0 0
        %4018 = vmatpush1.bf16.msra.mxu0 0
        %4019 = vmatprep.subr.bf16.mxu0 0
        %4020 = vmatpush1.bf16.msra.mxu0 0
        %4021 = vmatprep.subr.bf16.mxu0 0
        %4022 = vmatpush1.bf16.msra.mxu0 0
        %4023 = vmatprep.subr.bf16.mxu0 0
        %4024 = vmatpush1.bf16.msra.mxu0 0
        %4025 = vmatprep.subr.bf16.mxu0 0
        %4026 = vmatpush1.bf16.msra.mxu0 0
        %4027 = vmatprep.subr.bf16.mxu0 0
        %4028 = vmatpush1.bf16.msra.mxu0 0
        %4029 = vmatprep.subr.bf16.mxu0 0
        %4030 = vmatpush1.bf16.msra.mxu0 0
        %4031 = vmatprep.subr.bf16.mxu0 0
        %4032 = vmatpush1.bf16.msra.mxu0 0
        %4033 = vmatprep.subr.bf16.mxu0 0
        %4034 = vmatpush1.bf16.msra.mxu0 0
        %4035 = vmatprep.subr.bf16.mxu0 0
        %4036 = vmatpush1.bf16.msra.mxu0 0
        %4037 = vmatprep.mubr.bf16.mxu0 0
        %4038 = vmatmul.mubr.bf16.gmra.mrb[0].mxu0 %v3814
        %v4039 = vpop.f32.mrb[0].mxu0
        %v4040 = vadd.f32 0.0, %v4039
        %v4041 = vpop.f32.mrb[0].mxu0
        %v4042 = vpop.f32.mrb[0].mxu0
        %v4043 = vadd.f32 0.0, %v4042
        %v4044 = vpop.f32.mrb[0].mxu0
        %4045 = vmatprep.mubr.bf16.mxu0 0
        %4046 = vmatmul.mubr.bf16.gmra.mrb[0].mxu0 %v3817
        %v4047 = vpop.f32.mrb[0].mxu0
        %v4048 = vadd.f32 0.0, %v4047
        %v4049 = vpop.f32.mrb[0].mxu0
        %v4050 = vpop.f32.mrb[0].mxu0
        %v4051 = vadd.f32 0.0, %v4050
        %v4052 = vpop.f32.mrb[0].mxu0
        %4053 = vmatprep.mubr.bf16.mxu0 0
        %4054 = vmatmul.mubr.bf16.gmra.mrb[0].mxu0 %v3820
        %v4055 = vpop.f32.mrb[0].mxu0
        %v4056 = vadd.f32 0.0, %v4055
        %v4057 = vpop.f32.mrb[0].mxu0
        %v4058 = vpop.f32.mrb[0].mxu0
        %v4059 = vadd.f32 0.0, %v4058
        %v4060 = vpop.f32.mrb[0].mxu0
        %4061 = vmatprep.mubr.bf16.mxu0 0
        %4062 = vmatmul.mubr.bf16.gmra.mrb[0].mxu0 %v3823
        %v4063 = vpop.f32.mrb[0].mxu0
        %v4064 = vadd.f32 0.0, %v4063
        %v4065 = vpop.f32.mrb[0].mxu0
        %v4066 = vpop.f32.mrb[0].mxu0
        %v4067 = vadd.f32 0.0, %v4066
        %v4068 = vpop.f32.mrb[0].mxu0
        %4069 = vmatprep.mubr.bf16.mxu0 0
        %4070 = vmatmul.mubr.bf16.gmra.mrb[0].mxu0 %v3826
        %v4071 = vpop.f32.mrb[0].mxu0
        %v4072 = vadd.f32 0.0, %v4071
        %v4073 = vpop.f32.mrb[0].mxu0
        %v4074 = vpop.f32.mrb[0].mxu0
        %v4075 = vadd.f32 0.0, %v4074
        %v4076 = vpop.f32.mrb[0].mxu0
        %4077 = vmatprep.mubr.bf16.mxu0 0
        %4078 = vmatmul.mubr.bf16.gmra.mrb[0].mxu0 %v3829
        %v4079 = vpop.f32.mrb[0].mxu0
        %v4080 = vadd.f32 0.0, %v4079
        %v4081 = vpop.f32.mrb[0].mxu0
        %v4082 = vpop.f32.mrb[0].mxu0
        %v4083 = vadd.f32 0.0, %v4082
        %v4084 = vpop.f32.mrb[0].mxu0
        %4085 = vmatprep.mubr.bf16.mxu0 0
        %4086 = vmatmul.mubr.bf16.gmra.mrb[0].mxu0 %v3832
        %v4087 = vpop.f32.mrb[0].mxu0
        %v4088 = vadd.f32 0.0, %v4087
        %v4089 = vpop.f32.mrb[0].mxu0
        %v4090 = vpop.f32.mrb[0].mxu0
        %v4091 = vadd.f32 0.0, %v4090
        %v4092 = vpop.f32.mrb[0].mxu0
        %4093 = vmatprep.mubr.bf16.mxu0 0
        %4094 = vmatmul.mubr.bf16.gmra.mrb[0].mxu0 %v3835
        %v4095 = vpop.f32.mrb[0].mxu0
        %v4096 = vadd.f32 0.0, %v4095
        %v4097 = vpop.f32.mrb[0].mxu0
        %v4098 = vpop.f32.mrb[0].mxu0
        %v4099 = vadd.f32 0.0, %v4098
        %v4100 = vpop.f32.mrb[0].mxu0
        %4101 = vmatprep.mubr.bf16.mxu0 0
        %4102 = vmatmul.mubr.bf16.gmra.mrb[0].mxu0 %v3838
        %v4103 = vpop.f32.mrb[0].mxu0
        %v4104 = vadd.f32 0.0, %v4103
        %v4105 = vpop.f32.mrb[0].mxu0
        %v4106 = vpop.f32.mrb[0].mxu0
        %v4107 = vadd.f32 0.0, %v4106
        %v4108 = vpop.f32.mrb[0].mxu0
        %4109 = vmatprep.mubr.bf16.mxu0 0
        %4110 = vmatmul.mubr.bf16.gmra.mrb[0].mxu0 %v3841
        %v4111 = vpop.f32.mrb[0].mxu0
        %v4112 = vadd.f32 0.0, %v4111
        %v4113 = vpop.f32.mrb[0].mxu0
        %v4114 = vpop.f32.mrb[0].mxu0
        %v4115 = vadd.f32 0.0, %v4114
        %v4116 = vpop.f32.mrb[0].mxu0
        %4117 = vmatprep.mubr.bf16.mxu0 0
        %4118 = vmatmul.mubr.bf16.gmra.mrb[0].mxu0 %v3844
        %v4119 = vpop.f32.mrb[0].mxu0
        %v4120 = vadd.f32 0.0, %v4119
        %v4121 = vpop.f32.mrb[0].mxu0
        %v4122 = vpop.f32.mrb[0].mxu0
        %v4123 = vadd.f32 0.0, %v4122
        %v4124 = vpop.f32.mrb[0].mxu0
        %4125 = vmatprep.mubr.bf16.mxu0 0
        %4126 = vmatmul.mubr.bf16.gmra.mrb[0].mxu0 %v3847
        %v4127 = vpop.f32.mrb[0].mxu0
        %v4128 = vadd.f32 0.0, %v4127
        %v4129 = vpop.f32.mrb[0].mxu0
        %v4130 = vpop.f32.mrb[0].mxu0
        %v4131 = vadd.f32 0.0, %v4130
        %v4132 = vpop.f32.mrb[0].mxu0
        %4133 = vmatprep.mubr.bf16.mxu0 0
        %4134 = vmatmul.mubr.bf16.gmra.mrb[0].mxu0 %v3850
        %v4135 = vpop.f32.mrb[0].mxu0
        %v4136 = vadd.f32 0.0, %v4135
        %v4137 = vpop.f32.mrb[0].mxu0
        %v4138 = vpop.f32.mrb[0].mxu0
        %v4139 = vadd.f32 0.0, %v4138
        %v4140 = vpop.f32.mrb[0].mxu0
        %4141 = vmatprep.mubr.bf16.mxu0 0
        %4142 = vmatmul.mubr.bf16.gmra.mrb[0].mxu0 %v3853
        %v4143 = vpop.f32.mrb[0].mxu0
        %v4144 = vadd.f32 0.0, %v4143
        %v4145 = vpop.f32.mrb[0].mxu0
        %v4146 = vpop.f32.mrb[0].mxu0
        %v4147 = vadd.f32 0.0, %v4146
        %v4148 = vpop.f32.mrb[0].mxu0
        %4149 = vmatprep.mubr.bf16.mxu0 0
        %4150 = vmatmul.mubr.bf16.gmra.mrb[0].mxu0 %v3856
        %v4151 = vpop.f32.mrb[0].mxu0
        %v4152 = vadd.f32 0.0, %v4151
        %v4153 = vpop.f32.mrb[0].mxu0
        %v4154 = vpop.f32.mrb[0].mxu0
        %v4155 = vadd.f32 0.0, %v4154
        %v4156 = vpop.f32.mrb[0].mxu0
        %4157 = vmatprep.mubr.bf16.mxu0 0
        %4158 = vmatmul.mubr.bf16.gmra.mrb[0].mxu0 %v3859
        %v4159 = vpop.f32.mrb[0].mxu0
        %v4160 = vadd.f32 0.0, %v4159
        %v4161 = vpop.f32.mrb[0].mxu0
        %v4162 = vpop.f32.mrb[0].mxu0
        %v4163 = vadd.f32 0.0, %v4162
        %v4164 = vpop.f32.mrb[0].mxu0
        %4165 = vmatprep.mubr.bf16.mxu0 0
        %4166 = vmatmul.mubr.bf16.gmra.mrb[0].mxu0 %v3862
        %v4167 = vpop.f32.mrb[0].mxu0
        %v4168 = vadd.f32 0.0, %v4167
        %v4169 = vpop.f32.mrb[0].mxu0
        %v4170 = vpop.f32.mrb[0].mxu0
        %v4171 = vadd.f32 0.0, %v4170
        %v4172 = vpop.f32.mrb[0].mxu0
        %4173 = vmatprep.mubr.bf16.mxu0 0
        %4174 = vmatmul.mubr.bf16.gmra.mrb[0].mxu0 %v3865
        %v4175 = vpop.f32.mrb[0].mxu0
        %v4176 = vadd.f32 0.0, %v4175
        %v4177 = vpop.f32.mrb[0].mxu0
        %v4178 = vpop.f32.mrb[0].mxu0
        %v4179 = vadd.f32 0.0, %v4178
        %v4180 = vpop.f32.mrb[0].mxu0
        %4181 = vmatprep.mubr.bf16.mxu0 0
        %4182 = vmatmul.mubr.bf16.gmra.mrb[0].mxu0 %v3868
        %v4183 = vpop.f32.mrb[0].mxu0
        %v4184 = vadd.f32 0.0, %v4183
        %v4185 = vpop.f32.mrb[0].mxu0
        %v4186 = vpop.f32.mrb[0].mxu0
        %v4187 = vadd.f32 0.0, %v4186
        %v4188 = vpop.f32.mrb[0].mxu0
        %4189 = vmatprep.mubr.bf16.mxu0 0
        %4190 = vmatmul.mubr.bf16.gmra.mrb[0].mxu0 %v3871
        %v4191 = vpop.f32.mrb[0].mxu0
        %v4192 = vadd.f32 0.0, %v4191
        %v4193 = vpop.f32.mrb[0].mxu0
        %v4194 = vpop.f32.mrb[0].mxu0
        %v4195 = vadd.f32 0.0, %v4194
        %v4196 = vpop.f32.mrb[0].mxu0
        %4197 = vmatprep.mubr.bf16.mxu0 0
        %4198 = vmatmul.mubr.bf16.gmra.mrb[0].mxu0 %v3874
        %v4199 = vpop.f32.mrb[0].mxu0
        %v4200 = vadd.f32 0.0, %v4199
        %v4201 = vpop.f32.mrb[0].mxu0
        %v4202 = vpop.f32.mrb[0].mxu0
        %v4203 = vadd.f32 0.0, %v4202
        %v4204 = vpop.f32.mrb[0].mxu0
        %4205 = vmatprep.mubr.bf16.mxu0 0
        %4206 = vmatmul.mubr.bf16.gmra.mrb[0].mxu0 %v3877
        %v4207 = vpop.f32.mrb[0].mxu0
        %v4208 = vadd.f32 0.0, %v4207
        %v4209 = vpop.f32.mrb[0].mxu0
        %v4210 = vpop.f32.mrb[0].mxu0
        %v4211 = vadd.f32 0.0, %v4210
        %v4212 = vpop.f32.mrb[0].mxu0
        %4213 = vmatprep.mubr.bf16.mxu0 0
        %4214 = vmatmul.mubr.bf16.gmra.mrb[0].mxu0 %v3880
        %v4215 = vpop.f32.mrb[0].mxu0
        %v4216 = vadd.f32 0.0, %v4215
        %v4217 = vpop.f32.mrb[0].mxu0
        %v4218 = vpop.f32.mrb[0].mxu0
        %v4219 = vadd.f32 0.0, %v4218
        %v4220 = vpop.f32.mrb[0].mxu0
        %4221 = vmatprep.mubr.bf16.mxu0 0
        %4222 = vmatmul.mubr.bf16.gmra.mrb[0].mxu0 %v3883
        %v4223 = vpop.f32.mrb[0].mxu0
        %v4224 = vadd.f32 0.0, %v4223
        %v4225 = vpop.f32.mrb[0].mxu0
        %v4226 = vpop.f32.mrb[0].mxu0
        %v4227 = vadd.f32 0.0, %v4226
        %v4228 = vpop.f32.mrb[0].mxu0
        %4229 = vmatprep.mubr.bf16.mxu0 0
        %4230 = vmatmul.mubr.bf16.gmra.mrb[0].mxu0 %v3886
        %v4231 = vpop.f32.mrb[0].mxu0
        %v4232 = vadd.f32 0.0, %v4231
        %v4233 = vpop.f32.mrb[0].mxu0
        %v4234 = vpop.f32.mrb[0].mxu0
        %v4235 = vadd.f32 0.0, %v4234
        %v4236 = vpop.f32.mrb[0].mxu0
        %4237 = vmatprep.mubr.bf16.mxu0 0
        %4238 = vmatmul.mubr.bf16.gmra.mrb[0].mxu0 %v3889
        %v4239 = vpop.f32.mrb[0].mxu0
        %v4240 = vadd.f32 0.0, %v4239
        %v4241 = vpop.f32.mrb[0].mxu0
        %v4242 = vpop.f32.mrb[0].mxu0
        %v4243 = vadd.f32 0.0, %v4242
        %v4244 = vpop.f32.mrb[0].mxu0
        %4245 = vmatprep.mubr.bf16.mxu0 0
        %4246 = vmatmul.mubr.bf16.gmra.mrb[0].mxu0 %v3892
        %v4247 = vpop.f32.mrb[0].mxu0
        %v4248 = vadd.f32 0.0, %v4247
        %v4249 = vpop.f32.mrb[0].mxu0
        %v4250 = vpop.f32.mrb[0].mxu0
        %v4251 = vadd.f32 0.0, %v4250
        %v4252 = vpop.f32.mrb[0].mxu0
        %4253 = vmatprep.mubr.bf16.mxu0 0
        %4254 = vmatmul.mubr.bf16.gmra.mrb[0].mxu0 %v3895
        %v4255 = vpop.f32.mrb[0].mxu0
        %v4256 = vadd.f32 0.0, %v4255
        %v4257 = vpop.f32.mrb[0].mxu0
        %v4258 = vpop.f32.mrb[0].mxu0
        %v4259 = vadd.f32 0.0, %v4258
        %v4260 = vpop.f32.mrb[0].mxu0
        %4261 = vmatprep.mubr.bf16.mxu0 0
        %4262 = vmatmul.mubr.bf16.gmra.mrb[0].mxu0 %v3898
        %v4263 = vpop.f32.mrb[0].mxu0
        %v4264 = vadd.f32 0.0, %v4263
        %v4265 = vpop.f32.mrb[0].mxu0
        %v4266 = vpop.f32.mrb[0].mxu0
        %v4267 = vadd.f32 0.0, %v4266
        %v4268 = vpop.f32.mrb[0].mxu0
        %4269 = vmatprep.mubr.bf16.mxu0 0
        %4270 = vmatmul.mubr.bf16.gmra.mrb[0].mxu0 %v3901
        %v4271 = vpop.f32.mrb[0].mxu0
        %v4272 = vadd.f32 0.0, %v4271
        %v4273 = vpop.f32.mrb[0].mxu0
        %v4274 = vpop.f32.mrb[0].mxu0
        %v4275 = vadd.f32 0.0, %v4274
        %v4276 = vpop.f32.mrb[0].mxu0
        %4277 = vmatprep.mubr.bf16.mxu0 0
        %4278 = vmatmul.mubr.bf16.gmra.mrb[0].mxu0 %v3904
        %v4279 = vpop.f32.mrb[0].mxu0
        %v4280 = vadd.f32 0.0, %v4279
        %v4281 = vpop.f32.mrb[0].mxu0
        %v4282 = vpop.f32.mrb[0].mxu0
        %v4283 = vadd.f32 0.0, %v4282
        %v4284 = vpop.f32.mrb[0].mxu0
        %4285 = vmatprep.mubr.bf16.mxu0 0
        %4286 = vmatmul.mubr.bf16.gmra.mrb[0].mxu0 %v3907
        %v4287 = vpop.f32.mrb[0].mxu0
        %v4288 = vadd.f32 0.0, %v4287
        %v4289 = vpop.f32.mrb[0].mxu0
        %v4290 = vpop.f32.mrb[0].mxu0
        %v4291 = vadd.f32 0.0, %v4290
        %v4292 = vpop.f32.mrb[0].mxu0
        %4293 = vmatprep.mubr.bf16.mxu0 0
        %4294 = vmatmul.mubr.bf16.gmra.mrb[0].mxu0 %v3910
        %v4295 = vpop.f32.mrb[0].mxu0
        %v4296 = vadd.f32 0.0, %v4295
        %v4297 = vpop.f32.mrb[0].mxu0
        %v4298 = vpop.f32.mrb[0].mxu0
        %v4299 = vadd.f32 0.0, %v4298
        %v4300 = vpop.f32.mrb[0].mxu0
        %4301 = vmatprep.mubr.bf16.mxu0 0
        %4302 = vmatmul.mubr.bf16.gmra.mrb[0].mxu0 %v3913
        %v4303 = vpop.f32.mrb[0].mxu0
        %v4304 = vadd.f32 0.0, %v4303
        %v4305 = vpop.f32.mrb[0].mxu0
        %v4306 = vpop.f32.mrb[0].mxu0
        %v4307 = vadd.f32 0.0, %v4306
        %v4308 = vpop.f32.mrb[0].mxu0
        %4309 = vmatprep.mubr.bf16.mxu0 0
        %4310 = vmatmul.mubr.bf16.gmra.mrb[0].mxu0 %v3916
        %v4311 = vpop.f32.mrb[0].mxu0
        %v4312 = vadd.f32 0.0, %v4311
        %v4313 = vpop.f32.mrb[0].mxu0
        %v4314 = vpop.f32.mrb[0].mxu0
        %v4315 = vadd.f32 0.0, %v4314
        %v4316 = vpop.f32.mrb[0].mxu0
        %4317 = vmatprep.mubr.bf16.mxu0 0
        %4318 = vmatmul.mubr.bf16.gmra.mrb[0].mxu0 %v3919
        %v4319 = vpop.f32.mrb[0].mxu0
        %v4320 = vadd.f32 0.0, %v4319
        %v4321 = vpop.f32.mrb[0].mxu0
        %v4322 = vpop.f32.mrb[0].mxu0
        %v4323 = vadd.f32 0.0, %v4322
        %v4324 = vpop.f32.mrb[0].mxu0
        %4325 = vmatprep.mubr.bf16.mxu0 0
        %4326 = vmatmul.mubr.bf16.gmra.mrb[0].mxu0 %v3922
        %v4327 = vpop.f32.mrb[0].mxu0
        %v4328 = vadd.f32 0.0, %v4327
        %v4329 = vpop.f32.mrb[0].mxu0
        %v4330 = vpop.f32.mrb[0].mxu0
        %v4331 = vadd.f32 0.0, %v4330
        %v4332 = vpop.f32.mrb[0].mxu0
        %4333 = vmatprep.mubr.bf16.mxu0 0
        %4334 = vmatmul.mubr.bf16.gmra.mrb[0].mxu0 %v3925
        %v4335 = vpop.f32.mrb[0].mxu0
        %v4336 = vadd.f32 0.0, %v4335
        %v4337 = vpop.f32.mrb[0].mxu0
        %v4338 = vpop.f32.mrb[0].mxu0
        %v4339 = vadd.f32 0.0, %v4338
        %v4340 = vpop.f32.mrb[0].mxu0
        %4341 = vmatprep.mubr.bf16.mxu0 0
        %4342 = vmatmul.mubr.bf16.gmra.mrb[0].mxu0 %v3928
        %v4343 = vpop.f32.mrb[0].mxu0
        %v4344 = vadd.f32 0.0, %v4343
        %v4345 = vpop.f32.mrb[0].mxu0
        %v4346 = vpop.f32.mrb[0].mxu0
        %v4347 = vadd.f32 0.0, %v4346
        %v4348 = vpop.f32.mrb[0].mxu0
        %4349 = vmatprep.mubr.bf16.mxu0 0
        %4350 = vmatmul.mubr.bf16.gmra.mrb[0].mxu0 %v3931
        %v4351 = vpop.f32.mrb[0].mxu0
        %v4352 = vadd.f32 0.0, %v4351
        %v4353 = vpop.f32.mrb[0].mxu0
        %v4354 = vpop.f32.mrb[0].mxu0
        %v4355 = vadd.f32 0.0, %v4354
        %v4356 = vpop.f32.mrb[0].mxu0
        %4357 = vmatprep.mubr.bf16.mxu0 0
        %4358 = vmatmul.mubr.bf16.gmra.mrb[0].mxu0 %v3934
        %v4359 = vpop.f32.mrb[0].mxu0
        %v4360 = vadd.f32 0.0, %v4359
        %v4361 = vpop.f32.mrb[0].mxu0
        %v4362 = vpop.f32.mrb[0].mxu0
        %v4363 = vadd.f32 0.0, %v4362
        %v4364 = vpop.f32.mrb[0].mxu0
        %4365 = vmatprep.mubr.bf16.mxu0 0
        %4366 = vmatmul.mubr.bf16.gmra.mrb[0].mxu0 %v3937
        %v4367 = vpop.f32.mrb[0].mxu0
        %v4368 = vadd.f32 0.0, %v4367
        %v4369 = vpop.f32.mrb[0].mxu0
        %v4370 = vpop.f32.mrb[0].mxu0
        %v4371 = vadd.f32 0.0, %v4370
        %v4372 = vpop.f32.mrb[0].mxu0
        %4373 = vmatprep.mubr.bf16.mxu0 0
        %4374 = vmatmul.mubr.bf16.gmra.mrb[0].mxu0 %v3940
        %v4375 = vpop.f32.mrb[0].mxu0
        %v4376 = vadd.f32 0.0, %v4375
        %v4377 = vpop.f32.mrb[0].mxu0
        %v4378 = vpop.f32.mrb[0].mxu0
        %v4379 = vadd.f32 0.0, %v4378
        %v4380 = vpop.f32.mrb[0].mxu0
        %4381 = vmatprep.mubr.bf16.mxu0 0
        %4382 = vmatmul.mubr.bf16.gmra.mrb[0].mxu0 %v3943
        %v4383 = vpop.f32.mrb[0].mxu0
        %v4384 = vadd.f32 0.0, %v4383
        %v4385 = vpop.f32.mrb[0].mxu0
        %v4386 = vpop.f32.mrb[0].mxu0
        %v4387 = vadd.f32 0.0, %v4386
        %v4388 = vpop.f32.mrb[0].mxu0
        %4389 = vmatprep.mubr.bf16.mxu0 0
        %4390 = vmatmul.mubr.bf16.gmra.mrb[0].mxu0 %v3946
        %v4391 = vpop.f32.mrb[0].mxu0
        %v4392 = vadd.f32 0.0, %v4391
        %v4393 = vpop.f32.mrb[0].mxu0
        %v4394 = vpop.f32.mrb[0].mxu0
        %v4395 = vadd.f32 0.0, %v4394
        %v4396 = vpop.f32.mrb[0].mxu0
        %4397 = vmatprep.mubr.bf16.mxu0 0
        %4398 = vmatmul.mubr.bf16.gmra.mrb[0].mxu0 %v3949
        %v4399 = vpop.f32.mrb[0].mxu0
        %v4400 = vadd.f32 0.0, %v4399
        %v4401 = vpop.f32.mrb[0].mxu0
        %v4402 = vpop.f32.mrb[0].mxu0
        %v4403 = vadd.f32 0.0, %v4402
        %v4404 = vpop.f32.mrb[0].mxu0
        %4405 = vmatprep.mubr.bf16.mxu0 0
        %4406 = vmatmul.mubr.bf16.gmra.mrb[0].mxu0 %v3952
        %v4407 = vpop.f32.mrb[0].mxu0
        %v4408 = vadd.f32 0.0, %v4407
        %v4409 = vpop.f32.mrb[0].mxu0
        %v4410 = vpop.f32.mrb[0].mxu0
        %v4411 = vadd.f32 0.0, %v4410
        %v4412 = vpop.f32.mrb[0].mxu0
        %4413 = vmatprep.mubr.bf16.mxu0 0
        %4414 = vmatmul.mubr.bf16.gmra.mrb[0].mxu0 %v3955
        %v4415 = vpop.f32.mrb[0].mxu0
        %v4416 = vadd.f32 0.0, %v4415
        %v4417 = vpop.f32.mrb[0].mxu0
        %v4418 = vpop.f32.mrb[0].mxu0
        %v4419 = vadd.f32 0.0, %v4418
        %v4420 = vpop.f32.mrb[0].mxu0
        %4421 = vmatprep.mubr.bf16.mxu0 0
        %4422 = vmatmul.mubr.bf16.gmra.mrb[0].mxu0 %v3958
        %v4423 = vpop.f32.mrb[0].mxu0
        %v4424 = vadd.f32 0.0, %v4423
        %v4425 = vpop.f32.mrb[0].mxu0
        %v4426 = vpop.f32.mrb[0].mxu0
        %v4427 = vadd.f32 0.0, %v4426
        %v4428 = vpop.f32.mrb[0].mxu0
        %4429 = vmatprep.mubr.bf16.mxu0 0
        %4430 = vmatmul.mubr.bf16.gmra.mrb[0].mxu0 %v3961
        %v4431 = vpop.f32.mrb[0].mxu0
        %v4432 = vadd.f32 0.0, %v4431
        %v4433 = vpop.f32.mrb[0].mxu0
        %v4434 = vpop.f32.mrb[0].mxu0
        %v4435 = vadd.f32 0.0, %v4434
        %v4436 = vpop.f32.mrb[0].mxu0
        %4437 = vmatprep.mubr.bf16.mxu0 0
        %4438 = vmatmul.mubr.bf16.gmra.mrb[0].mxu0 %v3964
        %v4439 = vpop.f32.mrb[0].mxu0
        %v4440 = vadd.f32 0.0, %v4439
        %v4441 = vpop.f32.mrb[0].mxu0
        %v4442 = vpop.f32.mrb[0].mxu0
        %v4443 = vadd.f32 0.0, %v4442
        %v4444 = vpop.f32.mrb[0].mxu0
        %4445 = vmatprep.mubr.bf16.mxu0 0
        %4446 = vmatmul.mubr.bf16.gmra.mrb[0].mxu0 %v3967
        %v4447 = vpop.f32.mrb[0].mxu0
        %v4448 = vadd.f32 0.0, %v4447
        %v4449 = vpop.f32.mrb[0].mxu0
        %v4450 = vpop.f32.mrb[0].mxu0
        %v4451 = vadd.f32 0.0, %v4450
        %v4452 = vpop.f32.mrb[0].mxu0
        %4453 = vmatprep.mubr.bf16.mxu0 0
        %4454 = vmatmul.mubr.bf16.gmra.mrb[0].mxu0 %v3970
        %v4455 = vpop.f32.mrb[0].mxu0
        %v4456 = vadd.f32 0.0, %v4455
        %v4457 = vpop.f32.mrb[0].mxu0
        %v4458 = vpop.f32.mrb[0].mxu0
        %v4459 = vadd.f32 0.0, %v4458
        %v4460 = vpop.f32.mrb[0].mxu0
        %4461 = vmatprep.mubr.bf16.mxu0 0
        %4462 = vmatmul.mubr.bf16.gmra.mrb[0].mxu0 %v3973
        %v4463 = vpop.f32.mrb[0].mxu0
        %v4464 = vadd.f32 0.0, %v4463
        %v4465 = vpop.f32.mrb[0].mxu0
        %v4466 = vpop.f32.mrb[0].mxu0
        %v4467 = vadd.f32 0.0, %v4466
        %v4468 = vpop.f32.mrb[0].mxu0
        %4469 = vmatprep.mubr.bf16.mxu0 0
        %4470 = vmatmul.mubr.bf16.gmra.mrb[0].mxu0 %v3976
        %v4471 = vpop.f32.mrb[0].mxu0
        %v4472 = vadd.f32 0.0, %v4471
        %v4473 = vpop.f32.mrb[0].mxu0
        %v4474 = vpop.f32.mrb[0].mxu0
        %v4475 = vadd.f32 0.0, %v4474
        %v4476 = vpop.f32.mrb[0].mxu0
        %4477 = vmatprep.mubr.bf16.mxu0 0
        %4478 = vmatmul.mubr.bf16.gmra.mrb[0].mxu0 %v3979
        %v4479 = vpop.f32.mrb[0].mxu0
        %v4480 = vadd.f32 0.0, %v4479
        %v4481 = vpop.f32.mrb[0].mxu0
        %v4482 = vpop.f32.mrb[0].mxu0
        %v4483 = vadd.f32 0.0, %v4482
        %v4484 = vpop.f32.mrb[0].mxu0
        %4485 = vmatprep.mubr.bf16.mxu0 0
        %4486 = vmatmul.mubr.bf16.gmra.mrb[0].mxu0 %v3982
        %v4487 = vpop.f32.mrb[0].mxu0
        %v4488 = vadd.f32 0.0, %v4487
        %v4489 = vpop.f32.mrb[0].mxu0
        %v4490 = vpop.f32.mrb[0].mxu0
        %v4491 = vadd.f32 0.0, %v4490
        %v4492 = vpop.f32.mrb[0].mxu0
        %4493 = vmatprep.mubr.bf16.mxu0 0
        %4494 = vmatmul.mubr.bf16.gmra.mrb[0].mxu0 %v3985
        %v4495 = vpop.f32.mrb[0].mxu0
        %v4496 = vadd.f32 0.0, %v4495
        %v4497 = vpop.f32.mrb[0].mxu0
        %v4498 = vpop.f32.mrb[0].mxu0
        %v4499 = vadd.f32 0.0, %v4498
        %v4500 = vpop.f32.mrb[0].mxu0
        %4501 = vmatprep.mubr.bf16.mxu0 0
        %4502 = vmatmul.mubr.bf16.gmra.mrb[0].mxu0 %v3988
        %v4503 = vpop.f32.mrb[0].mxu0
        %v4504 = vadd.f32 0.0, %v4503
        %v4505 = vpop.f32.mrb[0].mxu0
        %v4506 = vpop.f32.mrb[0].mxu0
        %v4507 = vadd.f32 0.0, %v4506
        %v4508 = vpop.f32.mrb[0].mxu0
        %4509 = vmatprep.mubr.bf16.mxu0 0
        %4510 = vmatmul.mubr.bf16.gmra.mrb[0].mxu0 %v3991
        %v4511 = vpop.f32.mrb[0].mxu0
        %v4512 = vadd.f32 0.0, %v4511
        %v4513 = vpop.f32.mrb[0].mxu0
        %v4514 = vpop.f32.mrb[0].mxu0
        %v4515 = vadd.f32 0.0, %v4514
        %v4516 = vpop.f32.mrb[0].mxu0
        %4517 = vmatprep.mubr.bf16.mxu0 0
        %4518 = vmatmul.mubr.bf16.gmra.mrb[0].mxu0 %v3994
        %v4519 = vpop.f32.mrb[0].mxu0
        %v4520 = vadd.f32 0.0, %v4519
        %v4521 = vpop.f32.mrb[0].mxu0
        %v4522 = vpop.f32.mrb[0].mxu0
        %v4523 = vadd.f32 0.0, %v4522
        %v4524 = vpop.f32.mrb[0].mxu0
        %4525 = vmatprep.mubr.bf16.mxu0 0
        %4526 = vmatmul.mubr.bf16.gmra.mrb[0].mxu0 %v3997
        %v4527 = vpop.f32.mrb[0].mxu0
        %v4528 = vadd.f32 0.0, %v4527
        %v4529 = vpop.f32.mrb[0].mxu0
        %v4530 = vpop.f32.mrb[0].mxu0
        %v4531 = vadd.f32 0.0, %v4530
        %v4532 = vpop.f32.mrb[0].mxu0
        %4533 = vmatprep.mubr.bf16.mxu0 0
        %4534 = vmatmul.mubr.bf16.gmra.mrb[0].mxu0 %v4000
        %v4535 = vpop.f32.mrb[0].mxu0
        %v4536 = vadd.f32 0.0, %v4535
        %v4537 = vpop.f32.mrb[0].mxu0
        %v4538 = vpop.f32.mrb[0].mxu0
        %v4539 = vadd.f32 0.0, %v4538
        %v4540 = vpop.f32.mrb[0].mxu0
        %4541 = vmatprep.mubr.bf16.mxu0 0
        %4542 = vmatmul.mubr.bf16.gmra.mrb[0].mxu0 %v4003
        %v4543 = vpop.f32.mrb[0].mxu0
        %v4544 = vadd.f32 0.0, %v4543
        %v4545 = vpop.f32.mrb[0].mxu0
        %v4546 = vpop.f32.mrb[0].mxu0
        %v4547 = vadd.f32 0.0, %v4546
        %v4548 = vpop.f32.mrb[0].mxu0
        %4549 = vdwg.mxu0
        %v4550 = vpack.c.bf16 %v4043, %v4040
        %v4551 = vpack.c.bf16 %v4051, %v4048
        %v4552 = vpack.c.bf16 %v4059, %v4056
        %v4553 = vpack.c.bf16 %v4067, %v4064
        %v4554 = vpack.c.bf16 %v4075, %v4072
        %v4555 = vpack.c.bf16 %v4083, %v4080
        %v4556 = vpack.c.bf16 %v4091, %v4088
        %v4557 = vpack.c.bf16 %v4099, %v4096
        %v4558 = vpack.c.bf16 %v4107, %v4104
        %v4559 = vpack.c.bf16 %v4115, %v4112
        %v4560 = vpack.c.bf16 %v4123, %v4120
        %v4561 = vpack.c.bf16 %v4131, %v4128
        %v4562 = vpack.c.bf16 %v4139, %v4136
        %v4563 = vpack.c.bf16 %v4147, %v4144
        %v4564 = vpack.c.bf16 %v4155, %v4152
        %v4565 = vpack.c.bf16 %v4163, %v4160
        %v4566 = vpack.c.bf16 %v4171, %v4168
        %v4567 = vpack.c.bf16 %v4179, %v4176
        %v4568 = vpack.c.bf16 %v4187, %v4184
        %v4569 = vpack.c.bf16 %v4195, %v4192
        %v4570 = vpack.c.bf16 %v4203, %v4200
        %v4571 = vpack.c.bf16 %v4211, %v4208
        %v4572 = vpack.c.bf16 %v4219, %v4216
        %v4573 = vpack.c.bf16 %v4227, %v4224
        %v4574 = vpack.c.bf16 %v4235, %v4232
        %v4575 = vpack.c.bf16 %v4243, %v4240
        %v4576 = vpack.c.bf16 %v4251, %v4248
        %v4577 = vpack.c.bf16 %v4259, %v4256
        %v4578 = vpack.c.bf16 %v4267, %v4264
        %v4579 = vpack.c.bf16 %v4275, %v4272
        %v4580 = vpack.c.bf16 %v4283, %v4280
        %v4581 = vpack.c.bf16 %v4291, %v4288
        %v4582 = vpack.c.bf16 %v4299, %v4296
        %v4583 = vpack.c.bf16 %v4307, %v4304
        %v4584 = vpack.c.bf16 %v4315, %v4312
        %v4585 = vpack.c.bf16 %v4323, %v4320
        %v4586 = vpack.c.bf16 %v4331, %v4328
        %v4587 = vpack.c.bf16 %v4339, %v4336
        %v4588 = vpack.c.bf16 %v4347, %v4344
        %v4589 = vpack.c.bf16 %v4355, %v4352
        %v4590 = vpack.c.bf16 %v4363, %v4360
        %v4591 = vpack.c.bf16 %v4371, %v4368
        %v4592 = vpack.c.bf16 %v4379, %v4376
        %v4593 = vpack.c.bf16 %v4387, %v4384
        %v4594 = vpack.c.bf16 %v4395, %v4392
        %v4595 = vpack.c.bf16 %v4403, %v4400
        %v4596 = vpack.c.bf16 %v4411, %v4408
        %v4597 = vpack.c.bf16 %v4419, %v4416
        %v4598 = vpack.c.bf16 %v4427, %v4424
        %v4599 = vpack.c.bf16 %v4435, %v4432
        %v4600 = vpack.c.bf16 %v4443, %v4440
        %v4601 = vpack.c.bf16 %v4451, %v4448
        %v4602 = vpack.c.bf16 %v4459, %v4456
        %v4603 = vpack.c.bf16 %v4467, %v4464
        %v4604 = vpack.c.bf16 %v4475, %v4472
        %v4605 = vpack.c.bf16 %v4483, %v4480
        %v4606 = vpack.c.bf16 %v4491, %v4488
        %v4607 = vpack.c.bf16 %v4499, %v4496
        %v4608 = vpack.c.bf16 %v4507, %v4504
        %v4609 = vpack.c.bf16 %v4515, %v4512
        %v4610 = vpack.c.bf16 %v4523, %v4520
        %v4611 = vpack.c.bf16 %v4531, %v4528
        %v4612 = vpack.c.bf16 %v4539, %v4536
        %v4613 = vpack.c.bf16 %v4547, %v4544
        %v4614 = vld [vmem:[%s4] sm:$0x1]
        %v4615 = vpack.c.bf16 %v4614, %v4614
        %v4617 = vpack.i.b16 %v4615, %v4615
        %v4619 = vlaneseq
        %v4620 = vshrl.u32 %v4619, 7
        %v4621 = vsub.s32 0, %v4620
        %v4622 = vrot.slane %v4617, %v4621
        %v4623 = vadd.bf16 %v4550, %v4622
        %v4624 = vadd.bf16 %v4551, %v4622
        %v4625 = vadd.bf16 %v4552, %v4622
        %v4626 = vadd.bf16 %v4553, %v4622
        %v4627 = vadd.bf16 %v4554, %v4622
        %v4628 = vadd.bf16 %v4555, %v4622
        %v4629 = vadd.bf16 %v4556, %v4622
        %v4630 = vadd.bf16 %v4557, %v4622
        %v4631 = vadd.bf16 %v4558, %v4622
        %v4632 = vadd.bf16 %v4559, %v4622
        %v4633 = vadd.bf16 %v4560, %v4622
        %v4634 = vadd.bf16 %v4561, %v4622
        %v4635 = vadd.bf16 %v4562, %v4622
        %v4636 = vadd.bf16 %v4563, %v4622
        %v4637 = vadd.bf16 %v4564, %v4622
        %v4638 = vadd.bf16 %v4565, %v4622
        %v4639 = vadd.bf16 %v4566, %v4622
        %v4640 = vadd.bf16 %v4567, %v4622
        %v4641 = vadd.bf16 %v4568, %v4622
        %v4642 = vadd.bf16 %v4569, %v4622
        %v4643 = vadd.bf16 %v4570, %v4622
        %v4644 = vadd.bf16 %v4571, %v4622
        %v4645 = vadd.bf16 %v4572, %v4622
        %v4646 = vadd.bf16 %v4573, %v4622
        %v4647 = vadd.bf16 %v4574, %v4622
        %v4648 = vadd.bf16 %v4575, %v4622
        %v4649 = vadd.bf16 %v4576, %v4622
        %v4650 = vadd.bf16 %v4577, %v4622
        %v4651 = vadd.bf16 %v4578, %v4622
        %v4652 = vadd.bf16 %v4579, %v4622
        %v4653 = vadd.bf16 %v4580, %v4622
        %v4654 = vadd.bf16 %v4581, %v4622
        %v4655 = vadd.bf16 %v4582, %v4622
        %v4656 = vadd.bf16 %v4583, %v4622
        %v4657 = vadd.bf16 %v4584, %v4622
        %v4658 = vadd.bf16 %v4585, %v4622
        %v4659 = vadd.bf16 %v4586, %v4622
        %v4660 = vadd.bf16 %v4587, %v4622
        %v4661 = vadd.bf16 %v4588, %v4622
        %v4662 = vadd.bf16 %v4589, %v4622
        %v4663 = vadd.bf16 %v4590, %v4622
        %v4664 = vadd.bf16 %v4591, %v4622
        %v4665 = vadd.bf16 %v4592, %v4622
        %v4666 = vadd.bf16 %v4593, %v4622
        %v4667 = vadd.bf16 %v4594, %v4622
        %v4668 = vadd.bf16 %v4595, %v4622
        %v4669 = vadd.bf16 %v4596, %v4622
        %v4670 = vadd.bf16 %v4597, %v4622
        %v4671 = vadd.bf16 %v4598, %v4622
        %v4672 = vadd.bf16 %v4599, %v4622
        %v4673 = vadd.bf16 %v4600, %v4622
        %v4674 = vadd.bf16 %v4601, %v4622
        %v4675 = vadd.bf16 %v4602, %v4622
        %v4676 = vadd.bf16 %v4603, %v4622
        %v4677 = vadd.bf16 %v4604, %v4622
        %v4678 = vadd.bf16 %v4605, %v4622
        %v4679 = vadd.bf16 %v4606, %v4622
        %v4680 = vadd.bf16 %v4607, %v4622
        %v4681 = vadd.bf16 %v4608, %v4622
        %v4682 = vadd.bf16 %v4609, %v4622
        %v4683 = vadd.bf16 %v4610, %v4622
        %v4684 = vadd.bf16 %v4611, %v4622
        %v4685 = vadd.bf16 %v4612, %v4622
        %v4686 = vadd.bf16 %v4613, %v4622
        %v4687 = vmax.bf16 %v4623, 0
        %v4688 = vmax.bf16 %v4624, 0
        %v4689 = vmax.bf16 %v4625, 0
        %v4690 = vmax.bf16 %v4626, 0
        %v4691 = vmax.bf16 %v4627, 0
        %v4692 = vmax.bf16 %v4628, 0
        %v4693 = vmax.bf16 %v4629, 0
        %v4694 = vmax.bf16 %v4630, 0
        %v4695 = vmax.bf16 %v4631, 0
        %v4696 = vmax.bf16 %v4632, 0
        %v4697 = vmax.bf16 %v4633, 0
        %v4698 = vmax.bf16 %v4634, 0
        %v4699 = vmax.bf16 %v4635, 0
        %v4700 = vmax.bf16 %v4636, 0
        %v4701 = vmax.bf16 %v4637, 0
        %v4702 = vmax.bf16 %v4638, 0
        %v4703 = vmax.bf16 %v4639, 0
        %v4704 = vmax.bf16 %v4640, 0
        %v4705 = vmax.bf16 %v4641, 0
        %v4706 = vmax.bf16 %v4642, 0
        %v4707 = vmax.bf16 %v4643, 0
        %v4708 = vmax.bf16 %v4644, 0
        %v4709 = vmax.bf16 %v4645, 0
        %v4710 = vmax.bf16 %v4646, 0
        %v4711 = vmax.bf16 %v4647, 0
        %v4712 = vmax.bf16 %v4648, 0
        %v4713 = vmax.bf16 %v4649, 0
        %v4714 = vmax.bf16 %v4650, 0
        %v4715 = vmax.bf16 %v4651, 0
        %v4716 = vmax.bf16 %v4652, 0
        %v4717 = vmax.bf16 %v4653, 0
        %v4718 = vmax.bf16 %v4654, 0
        %v4719 = vmax.bf16 %v4655, 0
        %v4720 = vmax.bf16 %v4656, 0
        %v4721 = vmax.bf16 %v4657, 0
        %v4722 = vmax.bf16 %v4658, 0
        %v4723 = vmax.bf16 %v4659, 0
        %v4724 = vmax.bf16 %v4660, 0
        %v4725 = vmax.bf16 %v4661, 0
        %v4726 = vmax.bf16 %v4662, 0
        %v4727 = vmax.bf16 %v4663, 0
        %v4728 = vmax.bf16 %v4664, 0
        %v4729 = vmax.bf16 %v4665, 0
        %v4730 = vmax.bf16 %v4666, 0
        %v4731 = vmax.bf16 %v4667, 0
        %v4732 = vmax.bf16 %v4668, 0
        %v4733 = vmax.bf16 %v4669, 0
        %v4734 = vmax.bf16 %v4670, 0
        %v4735 = vmax.bf16 %v4671, 0
        %v4736 = vmax.bf16 %v4672, 0
        %v4737 = vmax.bf16 %v4673, 0
        %v4738 = vmax.bf16 %v4674, 0
        %v4739 = vmax.bf16 %v4675, 0
        %v4740 = vmax.bf16 %v4676, 0
        %v4741 = vmax.bf16 %v4677, 0
        %v4742 = vmax.bf16 %v4678, 0
        %v4743 = vmax.bf16 %v4679, 0
        %v4744 = vmax.bf16 %v4680, 0
        %v4745 = vmax.bf16 %v4681, 0
        %v4746 = vmax.bf16 %v4682, 0
        %v4747 = vmax.bf16 %v4683, 0
        %v4748 = vmax.bf16 %v4684, 0
        %v4749 = vmax.bf16 %v4685, 0
        %v4750 = vmax.bf16 %v4686, 0
        %v4751 = vld [vmem:[%s5] sm:$0xff]
        %v4752 = vld [vmem:[%s5 + $0x8] sm:$0xff]
        %v4753 = vld [vmem:[%s5 + $0x10] sm:$0xff]
        %v4754 = vld [vmem:[%s5 + $0x18] sm:$0xff]
        %v4755 = vld [vmem:[%s5 + $0x20] sm:$0xff]
        %v4756 = vld [vmem:[%s5 + $0x28] sm:$0xff]
        %v4757 = vld [vmem:[%s5 + $0x30] sm:$0xff]
        %v4758 = vld [vmem:[%s5 + $0x38] sm:$0xff]
        %v4759 = vld [vmem:[%s5 + $0x40] sm:$0xff]
        %v4760 = vld [vmem:[%s5 + $0x48] sm:$0xff]
        %v4761 = vld [vmem:[%s5 + $0x50] sm:$0xff]
        %v4762 = vld [vmem:[%s5 + $0x58] sm:$0xff]
        %v4763 = vld [vmem:[%s5 + $0x60] sm:$0xff]
        %v4764 = vld [vmem:[%s5 + $0x68] sm:$0xff]
        %v4765 = vld [vmem:[%s5 + $0x70] sm:$0xff]
        %v4766 = vld [vmem:[%s5 + $0x78] sm:$0xff]
        %v4783 = vunpack.c.l.b16 %v4751
        %v4784 = vunpack.c.h.b16 %v4751
        %v4785 = vunpack.c.l.b16 %v4752
        %v4786 = vunpack.c.h.b16 %v4752
        %v4787 = vunpack.c.l.b16 %v4753
        %v4788 = vunpack.c.h.b16 %v4753
        %v4789 = vunpack.c.l.b16 %v4754
        %v4790 = vunpack.c.h.b16 %v4754
        %v4791 = vunpack.c.l.b16 %v4755
        %v4792 = vunpack.c.h.b16 %v4755
        %v4793 = vunpack.c.l.b16 %v4756
        %v4794 = vunpack.c.h.b16 %v4756
        %v4795 = vunpack.c.l.b16 %v4757
        %v4796 = vunpack.c.h.b16 %v4757
        %v4797 = vunpack.c.l.b16 %v4758
        %v4798 = vunpack.c.h.b16 %v4758
        %v4799 = vunpack.c.l.b16 %v4759
        %v4800 = vunpack.c.h.b16 %v4759
        %v4801 = vunpack.c.l.b16 %v4760
        %v4802 = vunpack.c.h.b16 %v4760
        %v4803 = vunpack.c.l.b16 %v4761
        %v4804 = vunpack.c.h.b16 %v4761
        %v4805 = vunpack.c.l.b16 %v4762
        %v4806 = vunpack.c.h.b16 %v4762
        %v4807 = vunpack.c.l.b16 %v4763
        %v4808 = vunpack.c.h.b16 %v4763
        %v4809 = vunpack.c.l.b16 %v4764
        %v4810 = vunpack.c.h.b16 %v4764
        %v4811 = vunpack.c.l.b16 %v4765
        %v4812 = vunpack.c.h.b16 %v4765
        %v4813 = vunpack.c.l.b16 %v4766
        %v4814 = vunpack.c.h.b16 %v4766
        %v4815 = vpack.c.b16 %v4785, %v4783
        %v4816 = vpack.c.b16 %v4786, %v4784
        %v4817 = vpack.c.b16 %v4789, %v4787
        %v4818 = vpack.c.b16 %v4790, %v4788
        %v4819 = vpack.c.b16 %v4793, %v4791
        %v4820 = vpack.c.b16 %v4794, %v4792
        %v4821 = vpack.c.b16 %v4797, %v4795
        %v4822 = vpack.c.b16 %v4798, %v4796
        %v4823 = vpack.c.b16 %v4801, %v4799
        %v4824 = vpack.c.b16 %v4802, %v4800
        %v4825 = vpack.c.b16 %v4805, %v4803
        %v4826 = vpack.c.b16 %v4806, %v4804
        %v4827 = vpack.c.b16 %v4809, %v4807
        %v4828 = vpack.c.b16 %v4810, %v4808
        %v4829 = vpack.c.b16 %v4813, %v4811
        %v4830 = vpack.c.b16 %v4814, %v4812
        %4847 = vmatprep.subr.bf16.mxu0 %v4816
        %4848 = vmatpush1.bf16.msra.mxu0 %v4815
        %4849 = vmatprep.subr.bf16.mxu0 %v4818
        %4850 = vmatpush1.bf16.msra.mxu0 %v4817
        %4851 = vmatprep.subr.bf16.mxu0 %v4820
        %4852 = vmatpush1.bf16.msra.mxu0 %v4819
        %4853 = vmatprep.subr.bf16.mxu0 %v4822
        %4854 = vmatpush1.bf16.msra.mxu0 %v4821
        %4855 = vmatprep.subr.bf16.mxu0 %v4824
        %4856 = vmatpush1.bf16.msra.mxu0 %v4823
        %4857 = vmatprep.subr.bf16.mxu0 %v4826
        %4858 = vmatpush1.bf16.msra.mxu0 %v4825
        %4859 = vmatprep.subr.bf16.mxu0 %v4828
        %4860 = vmatpush1.bf16.msra.mxu0 %v4827
        %4861 = vmatprep.subr.bf16.mxu0 %v4830
        %4862 = vmatpush1.bf16.msra.mxu0 %v4829
        %4863 = vmatprep.subr.bf16.mxu0 0
        %4864 = vmatpush1.bf16.msra.mxu0 0
        %4865 = vmatprep.subr.bf16.mxu0 0
        %4866 = vmatpush1.bf16.msra.mxu0 0
        %4867 = vmatprep.subr.bf16.mxu0 0
        %4868 = vmatpush1.bf16.msra.mxu0 0
        %4869 = vmatprep.subr.bf16.mxu0 0
        %4870 = vmatpush1.bf16.msra.mxu0 0
        %4871 = vmatprep.subr.bf16.mxu0 0
        %4872 = vmatpush1.bf16.msra.mxu0 0
        %4873 = vmatprep.subr.bf16.mxu0 0
        %4874 = vmatpush1.bf16.msra.mxu0 0
        %4875 = vmatprep.subr.bf16.mxu0 0
        %4876 = vmatpush1.bf16.msra.mxu0 0
        %4877 = vmatprep.subr.bf16.mxu0 0
        %4878 = vmatpush1.bf16.msra.mxu0 0
        %4879 = vmatprep.mubr.bf16.mxu0 0
        %4880 = vmatmul.mubr.bf16.gmra.mrb[0].mxu0 %v4687
        %v4881 = vpop.f32.mrb[0].mxu0
        %v4882 = vadd.f32 0.0, %v4881
        %v4883 = vpop.f32.mrb[0].mxu0
        %v4884 = vadd.f32 0.0, %v4883
        %v4885 = vpop.f32.mrb[0].mxu0
        %v4886 = vadd.f32 0.0, %v4885
        %v4887 = vpop.f32.mrb[0].mxu0
        %v4888 = vadd.f32 0.0, %v4887
        %4889 = vmatprep.mubr.bf16.mxu0 0
        %4890 = vmatmul.mubr.bf16.gmra.mrb[0].mxu0 %v4688
        %v4891 = vpop.f32.mrb[0].mxu0
        %v4892 = vadd.f32 0.0, %v4891
        %v4893 = vpop.f32.mrb[0].mxu0
        %v4894 = vadd.f32 0.0, %v4893
        %v4895 = vpop.f32.mrb[0].mxu0
        %v4896 = vadd.f32 0.0, %v4895
        %v4897 = vpop.f32.mrb[0].mxu0
        %v4898 = vadd.f32 0.0, %v4897
        %4899 = vmatprep.mubr.bf16.mxu0 0
        %4900 = vmatmul.mubr.bf16.gmra.mrb[0].mxu0 %v4689
        %v4901 = vpop.f32.mrb[0].mxu0
        %v4902 = vadd.f32 0.0, %v4901
        %v4903 = vpop.f32.mrb[0].mxu0
        %v4904 = vadd.f32 0.0, %v4903
        %v4905 = vpop.f32.mrb[0].mxu0
        %v4906 = vadd.f32 0.0, %v4905
        %v4907 = vpop.f32.mrb[0].mxu0
        %v4908 = vadd.f32 0.0, %v4907
        %4909 = vmatprep.mubr.bf16.mxu0 0
        %4910 = vmatmul.mubr.bf16.gmra.mrb[0].mxu0 %v4690
        %v4911 = vpop.f32.mrb[0].mxu0
        %v4912 = vadd.f32 0.0, %v4911
        %v4913 = vpop.f32.mrb[0].mxu0
        %v4914 = vadd.f32 0.0, %v4913
        %v4915 = vpop.f32.mrb[0].mxu0
        %v4916 = vadd.f32 0.0, %v4915
        %v4917 = vpop.f32.mrb[0].mxu0
        %v4918 = vadd.f32 0.0, %v4917
        %4919 = vmatprep.mubr.bf16.mxu0 0
        %4920 = vmatmul.mubr.bf16.gmra.mrb[0].mxu0 %v4691
        %v4921 = vpop.f32.mrb[0].mxu0
        %v4922 = vadd.f32 0.0, %v4921
        %v4923 = vpop.f32.mrb[0].mxu0
        %v4924 = vadd.f32 0.0, %v4923
        %v4925 = vpop.f32.mrb[0].mxu0
        %v4926 = vadd.f32 0.0, %v4925
        %v4927 = vpop.f32.mrb[0].mxu0
        %v4928 = vadd.f32 0.0, %v4927
        %4929 = vmatprep.mubr.bf16.mxu0 0
        %4930 = vmatmul.mubr.bf16.gmra.mrb[0].mxu0 %v4692
        %v4931 = vpop.f32.mrb[0].mxu0
        %v4932 = vadd.f32 0.0, %v4931
        %v4933 = vpop.f32.mrb[0].mxu0
        %v4934 = vadd.f32 0.0, %v4933
        %v4935 = vpop.f32.mrb[0].mxu0
        %v4936 = vadd.f32 0.0, %v4935
        %v4937 = vpop.f32.mrb[0].mxu0
        %v4938 = vadd.f32 0.0, %v4937
        %4939 = vmatprep.mubr.bf16.mxu0 0
        %4940 = vmatmul.mubr.bf16.gmra.mrb[0].mxu0 %v4693
        %v4941 = vpop.f32.mrb[0].mxu0
        %v4942 = vadd.f32 0.0, %v4941
        %v4943 = vpop.f32.mrb[0].mxu0
        %v4944 = vadd.f32 0.0, %v4943
        %v4945 = vpop.f32.mrb[0].mxu0
        %v4946 = vadd.f32 0.0, %v4945
        %v4947 = vpop.f32.mrb[0].mxu0
        %v4948 = vadd.f32 0.0, %v4947
        %4949 = vmatprep.mubr.bf16.mxu0 0
        %4950 = vmatmul.mubr.bf16.gmra.mrb[0].mxu0 %v4694
        %v4951 = vpop.f32.mrb[0].mxu0
        %v4952 = vadd.f32 0.0, %v4951
        %v4953 = vpop.f32.mrb[0].mxu0
        %v4954 = vadd.f32 0.0, %v4953
        %v4955 = vpop.f32.mrb[0].mxu0
        %v4956 = vadd.f32 0.0, %v4955
        %v4957 = vpop.f32.mrb[0].mxu0
        %v4958 = vadd.f32 0.0, %v4957
        %4959 = vmatprep.mubr.bf16.mxu0 0
        %4960 = vmatmul.mubr.bf16.gmra.mrb[0].mxu0 %v4695
        %v4961 = vpop.f32.mrb[0].mxu0
        %v4962 = vadd.f32 0.0, %v4961
        %v4963 = vpop.f32.mrb[0].mxu0
        %v4964 = vadd.f32 0.0, %v4963
        %v4965 = vpop.f32.mrb[0].mxu0
        %v4966 = vadd.f32 0.0, %v4965
        %v4967 = vpop.f32.mrb[0].mxu0
        %v4968 = vadd.f32 0.0, %v4967
        %4969 = vmatprep.mubr.bf16.mxu0 0
        %4970 = vmatmul.mubr.bf16.gmra.mrb[0].mxu0 %v4696
        %v4971 = vpop.f32.mrb[0].mxu0
        %v4972 = vadd.f32 0.0, %v4971
        %v4973 = vpop.f32.mrb[0].mxu0
        %v4974 = vadd.f32 0.0, %v4973
        %v4975 = vpop.f32.mrb[0].mxu0
        %v4976 = vadd.f32 0.0, %v4975
        %v4977 = vpop.f32.mrb[0].mxu0
        %v4978 = vadd.f32 0.0, %v4977
        %4979 = vmatprep.mubr.bf16.mxu0 0
        %4980 = vmatmul.mubr.bf16.gmra.mrb[0].mxu0 %v4697
        %v4981 = vpop.f32.mrb[0].mxu0
        %v4982 = vadd.f32 0.0, %v4981
        %v4983 = vpop.f32.mrb[0].mxu0
        %v4984 = vadd.f32 0.0, %v4983
        %v4985 = vpop.f32.mrb[0].mxu0
        %v4986 = vadd.f32 0.0, %v4985
        %v4987 = vpop.f32.mrb[0].mxu0
        %v4988 = vadd.f32 0.0, %v4987
        %4989 = vmatprep.mubr.bf16.mxu0 0
        %4990 = vmatmul.mubr.bf16.gmra.mrb[0].mxu0 %v4698
        %v4991 = vpop.f32.mrb[0].mxu0
        %v4992 = vadd.f32 0.0, %v4991
        %v4993 = vpop.f32.mrb[0].mxu0
        %v4994 = vadd.f32 0.0, %v4993
        %v4995 = vpop.f32.mrb[0].mxu0
        %v4996 = vadd.f32 0.0, %v4995
        %v4997 = vpop.f32.mrb[0].mxu0
        %v4998 = vadd.f32 0.0, %v4997
        %4999 = vmatprep.mubr.bf16.mxu0 0
        %5000 = vmatmul.mubr.bf16.gmra.mrb[0].mxu0 %v4699
        %v5001 = vpop.f32.mrb[0].mxu0
        %v5002 = vadd.f32 0.0, %v5001
        %v5003 = vpop.f32.mrb[0].mxu0
        %v5004 = vadd.f32 0.0, %v5003
        %v5005 = vpop.f32.mrb[0].mxu0
        %v5006 = vadd.f32 0.0, %v5005
        %v5007 = vpop.f32.mrb[0].mxu0
        %v5008 = vadd.f32 0.0, %v5007
        %5009 = vmatprep.mubr.bf16.mxu0 0
        %5010 = vmatmul.mubr.bf16.gmra.mrb[0].mxu0 %v4700
        %v5011 = vpop.f32.mrb[0].mxu0
        %v5012 = vadd.f32 0.0, %v5011
        %v5013 = vpop.f32.mrb[0].mxu0
        %v5014 = vadd.f32 0.0, %v5013
        %v5015 = vpop.f32.mrb[0].mxu0
        %v5016 = vadd.f32 0.0, %v5015
        %v5017 = vpop.f32.mrb[0].mxu0
        %v5018 = vadd.f32 0.0, %v5017
        %5019 = vmatprep.mubr.bf16.mxu0 0
        %5020 = vmatmul.mubr.bf16.gmra.mrb[0].mxu0 %v4701
        %v5021 = vpop.f32.mrb[0].mxu0
        %v5022 = vadd.f32 0.0, %v5021
        %v5023 = vpop.f32.mrb[0].mxu0
        %v5024 = vadd.f32 0.0, %v5023
        %v5025 = vpop.f32.mrb[0].mxu0
        %v5026 = vadd.f32 0.0, %v5025
        %v5027 = vpop.f32.mrb[0].mxu0
        %v5028 = vadd.f32 0.0, %v5027
        %5029 = vmatprep.mubr.bf16.mxu0 0
        %5030 = vmatmul.mubr.bf16.gmra.mrb[0].mxu0 %v4702
        %v5031 = vpop.f32.mrb[0].mxu0
        %v5032 = vadd.f32 0.0, %v5031
        %v5033 = vpop.f32.mrb[0].mxu0
        %v5034 = vadd.f32 0.0, %v5033
        %v5035 = vpop.f32.mrb[0].mxu0
        %v5036 = vadd.f32 0.0, %v5035
        %v5037 = vpop.f32.mrb[0].mxu0
        %v5038 = vadd.f32 0.0, %v5037
        %5039 = vmatprep.mubr.bf16.mxu0 0
        %5040 = vmatmul.mubr.bf16.gmra.mrb[0].mxu0 %v4703
        %v5041 = vpop.f32.mrb[0].mxu0
        %v5042 = vadd.f32 0.0, %v5041
        %v5043 = vpop.f32.mrb[0].mxu0
        %v5044 = vadd.f32 0.0, %v5043
        %v5045 = vpop.f32.mrb[0].mxu0
        %v5046 = vadd.f32 0.0, %v5045
        %v5047 = vpop.f32.mrb[0].mxu0
        %v5048 = vadd.f32 0.0, %v5047
        %5049 = vmatprep.mubr.bf16.mxu0 0
        %5050 = vmatmul.mubr.bf16.gmra.mrb[0].mxu0 %v4704
        %v5051 = vpop.f32.mrb[0].mxu0
        %v5052 = vadd.f32 0.0, %v5051
        %v5053 = vpop.f32.mrb[0].mxu0
        %v5054 = vadd.f32 0.0, %v5053
        %v5055 = vpop.f32.mrb[0].mxu0
        %v5056 = vadd.f32 0.0, %v5055
        %v5057 = vpop.f32.mrb[0].mxu0
        %v5058 = vadd.f32 0.0, %v5057
        %5059 = vmatprep.mubr.bf16.mxu0 0
        %5060 = vmatmul.mubr.bf16.gmra.mrb[0].mxu0 %v4705
        %v5061 = vpop.f32.mrb[0].mxu0
        %v5062 = vadd.f32 0.0, %v5061
        %v5063 = vpop.f32.mrb[0].mxu0
        %v5064 = vadd.f32 0.0, %v5063
        %v5065 = vpop.f32.mrb[0].mxu0
        %v5066 = vadd.f32 0.0, %v5065
        %v5067 = vpop.f32.mrb[0].mxu0
        %v5068 = vadd.f32 0.0, %v5067
        %5069 = vmatprep.mubr.bf16.mxu0 0
        %5070 = vmatmul.mubr.bf16.gmra.mrb[0].mxu0 %v4706
        %v5071 = vpop.f32.mrb[0].mxu0
        %v5072 = vadd.f32 0.0, %v5071
        %v5073 = vpop.f32.mrb[0].mxu0
        %v5074 = vadd.f32 0.0, %v5073
        %v5075 = vpop.f32.mrb[0].mxu0
        %v5076 = vadd.f32 0.0, %v5075
        %v5077 = vpop.f32.mrb[0].mxu0
        %v5078 = vadd.f32 0.0, %v5077
        %5079 = vmatprep.mubr.bf16.mxu0 0
        %5080 = vmatmul.mubr.bf16.gmra.mrb[0].mxu0 %v4707
        %v5081 = vpop.f32.mrb[0].mxu0
        %v5082 = vadd.f32 0.0, %v5081
        %v5083 = vpop.f32.mrb[0].mxu0
        %v5084 = vadd.f32 0.0, %v5083
        %v5085 = vpop.f32.mrb[0].mxu0
        %v5086 = vadd.f32 0.0, %v5085
        %v5087 = vpop.f32.mrb[0].mxu0
        %v5088 = vadd.f32 0.0, %v5087
        %5089 = vmatprep.mubr.bf16.mxu0 0
        %5090 = vmatmul.mubr.bf16.gmra.mrb[0].mxu0 %v4708
        %v5091 = vpop.f32.mrb[0].mxu0
        %v5092 = vadd.f32 0.0, %v5091
        %v5093 = vpop.f32.mrb[0].mxu0
        %v5094 = vadd.f32 0.0, %v5093
        %v5095 = vpop.f32.mrb[0].mxu0
        %v5096 = vadd.f32 0.0, %v5095
        %v5097 = vpop.f32.mrb[0].mxu0
        %v5098 = vadd.f32 0.0, %v5097
        %5099 = vmatprep.mubr.bf16.mxu0 0
        %5100 = vmatmul.mubr.bf16.gmra.mrb[0].mxu0 %v4709
        %v5101 = vpop.f32.mrb[0].mxu0
        %v5102 = vadd.f32 0.0, %v5101
        %v5103 = vpop.f32.mrb[0].mxu0
        %v5104 = vadd.f32 0.0, %v5103
        %v5105 = vpop.f32.mrb[0].mxu0
        %v5106 = vadd.f32 0.0, %v5105
        %v5107 = vpop.f32.mrb[0].mxu0
        %v5108 = vadd.f32 0.0, %v5107
        %5109 = vmatprep.mubr.bf16.mxu0 0
        %5110 = vmatmul.mubr.bf16.gmra.mrb[0].mxu0 %v4710
        %v5111 = vpop.f32.mrb[0].mxu0
        %v5112 = vadd.f32 0.0, %v5111
        %v5113 = vpop.f32.mrb[0].mxu0
        %v5114 = vadd.f32 0.0, %v5113
        %v5115 = vpop.f32.mrb[0].mxu0
        %v5116 = vadd.f32 0.0, %v5115
        %v5117 = vpop.f32.mrb[0].mxu0
        %v5118 = vadd.f32 0.0, %v5117
        %5119 = vmatprep.mubr.bf16.mxu0 0
        %5120 = vmatmul.mubr.bf16.gmra.mrb[0].mxu0 %v4711
        %v5121 = vpop.f32.mrb[0].mxu0
        %v5122 = vadd.f32 0.0, %v5121
        %v5123 = vpop.f32.mrb[0].mxu0
        %v5124 = vadd.f32 0.0, %v5123
        %v5125 = vpop.f32.mrb[0].mxu0
        %v5126 = vadd.f32 0.0, %v5125
        %v5127 = vpop.f32.mrb[0].mxu0
        %v5128 = vadd.f32 0.0, %v5127
        %5129 = vmatprep.mubr.bf16.mxu0 0
        %5130 = vmatmul.mubr.bf16.gmra.mrb[0].mxu0 %v4712
        %v5131 = vpop.f32.mrb[0].mxu0
        %v5132 = vadd.f32 0.0, %v5131
        %v5133 = vpop.f32.mrb[0].mxu0
        %v5134 = vadd.f32 0.0, %v5133
        %v5135 = vpop.f32.mrb[0].mxu0
        %v5136 = vadd.f32 0.0, %v5135
        %v5137 = vpop.f32.mrb[0].mxu0
        %v5138 = vadd.f32 0.0, %v5137
        %5139 = vmatprep.mubr.bf16.mxu0 0
        %5140 = vmatmul.mubr.bf16.gmra.mrb[0].mxu0 %v4713
        %v5141 = vpop.f32.mrb[0].mxu0
        %v5142 = vadd.f32 0.0, %v5141
        %v5143 = vpop.f32.mrb[0].mxu0
        %v5144 = vadd.f32 0.0, %v5143
        %v5145 = vpop.f32.mrb[0].mxu0
        %v5146 = vadd.f32 0.0, %v5145
        %v5147 = vpop.f32.mrb[0].mxu0
        %v5148 = vadd.f32 0.0, %v5147
        %5149 = vmatprep.mubr.bf16.mxu0 0
        %5150 = vmatmul.mubr.bf16.gmra.mrb[0].mxu0 %v4714
        %v5151 = vpop.f32.mrb[0].mxu0
        %v5152 = vadd.f32 0.0, %v5151
        %v5153 = vpop.f32.mrb[0].mxu0
        %v5154 = vadd.f32 0.0, %v5153
        %v5155 = vpop.f32.mrb[0].mxu0
        %v5156 = vadd.f32 0.0, %v5155
        %v5157 = vpop.f32.mrb[0].mxu0
        %v5158 = vadd.f32 0.0, %v5157
        %5159 = vmatprep.mubr.bf16.mxu0 0
        %5160 = vmatmul.mubr.bf16.gmra.mrb[0].mxu0 %v4715
        %v5161 = vpop.f32.mrb[0].mxu0
        %v5162 = vadd.f32 0.0, %v5161
        %v5163 = vpop.f32.mrb[0].mxu0
        %v5164 = vadd.f32 0.0, %v5163
        %v5165 = vpop.f32.mrb[0].mxu0
        %v5166 = vadd.f32 0.0, %v5165
        %v5167 = vpop.f32.mrb[0].mxu0
        %v5168 = vadd.f32 0.0, %v5167
        %5169 = vmatprep.mubr.bf16.mxu0 0
        %5170 = vmatmul.mubr.bf16.gmra.mrb[0].mxu0 %v4716
        %v5171 = vpop.f32.mrb[0].mxu0
        %v5172 = vadd.f32 0.0, %v5171
        %v5173 = vpop.f32.mrb[0].mxu0
        %v5174 = vadd.f32 0.0, %v5173
        %v5175 = vpop.f32.mrb[0].mxu0
        %v5176 = vadd.f32 0.0, %v5175
        %v5177 = vpop.f32.mrb[0].mxu0
        %v5178 = vadd.f32 0.0, %v5177
        %5179 = vmatprep.mubr.bf16.mxu0 0
        %5180 = vmatmul.mubr.bf16.gmra.mrb[0].mxu0 %v4717
        %v5181 = vpop.f32.mrb[0].mxu0
        %v5182 = vadd.f32 0.0, %v5181
        %v5183 = vpop.f32.mrb[0].mxu0
        %v5184 = vadd.f32 0.0, %v5183
        %v5185 = vpop.f32.mrb[0].mxu0
        %v5186 = vadd.f32 0.0, %v5185
        %v5187 = vpop.f32.mrb[0].mxu0
        %v5188 = vadd.f32 0.0, %v5187
        %5189 = vmatprep.mubr.bf16.mxu0 0
        %5190 = vmatmul.mubr.bf16.gmra.mrb[0].mxu0 %v4718
        %v5191 = vpop.f32.mrb[0].mxu0
        %v5192 = vadd.f32 0.0, %v5191
        %v5193 = vpop.f32.mrb[0].mxu0
        %v5194 = vadd.f32 0.0, %v5193
        %v5195 = vpop.f32.mrb[0].mxu0
        %v5196 = vadd.f32 0.0, %v5195
        %v5197 = vpop.f32.mrb[0].mxu0
        %v5198 = vadd.f32 0.0, %v5197
        %5199 = vmatprep.mubr.bf16.mxu0 0
        %5200 = vmatmul.mubr.bf16.gmra.mrb[0].mxu0 %v4719
        %v5201 = vpop.f32.mrb[0].mxu0
        %v5202 = vadd.f32 0.0, %v5201
        %v5203 = vpop.f32.mrb[0].mxu0
        %v5204 = vadd.f32 0.0, %v5203
        %v5205 = vpop.f32.mrb[0].mxu0
        %v5206 = vadd.f32 0.0, %v5205
        %v5207 = vpop.f32.mrb[0].mxu0
        %v5208 = vadd.f32 0.0, %v5207
        %5209 = vmatprep.mubr.bf16.mxu0 0
        %5210 = vmatmul.mubr.bf16.gmra.mrb[0].mxu0 %v4720
        %v5211 = vpop.f32.mrb[0].mxu0
        %v5212 = vadd.f32 0.0, %v5211
        %v5213 = vpop.f32.mrb[0].mxu0
        %v5214 = vadd.f32 0.0, %v5213
        %v5215 = vpop.f32.mrb[0].mxu0
        %v5216 = vadd.f32 0.0, %v5215
        %v5217 = vpop.f32.mrb[0].mxu0
        %v5218 = vadd.f32 0.0, %v5217
        %5219 = vmatprep.mubr.bf16.mxu0 0
        %5220 = vmatmul.mubr.bf16.gmra.mrb[0].mxu0 %v4721
        %v5221 = vpop.f32.mrb[0].mxu0
        %v5222 = vadd.f32 0.0, %v5221
        %v5223 = vpop.f32.mrb[0].mxu0
        %v5224 = vadd.f32 0.0, %v5223
        %v5225 = vpop.f32.mrb[0].mxu0
        %v5226 = vadd.f32 0.0, %v5225
        %v5227 = vpop.f32.mrb[0].mxu0
        %v5228 = vadd.f32 0.0, %v5227
        %5229 = vmatprep.mubr.bf16.mxu0 0
        %5230 = vmatmul.mubr.bf16.gmra.mrb[0].mxu0 %v4722
        %v5231 = vpop.f32.mrb[0].mxu0
        %v5232 = vadd.f32 0.0, %v5231
        %v5233 = vpop.f32.mrb[0].mxu0
        %v5234 = vadd.f32 0.0, %v5233
        %v5235 = vpop.f32.mrb[0].mxu0
        %v5236 = vadd.f32 0.0, %v5235
        %v5237 = vpop.f32.mrb[0].mxu0
        %v5238 = vadd.f32 0.0, %v5237
        %5239 = vmatprep.mubr.bf16.mxu0 0
        %5240 = vmatmul.mubr.bf16.gmra.mrb[0].mxu0 %v4723
        %v5241 = vpop.f32.mrb[0].mxu0
        %v5242 = vadd.f32 0.0, %v5241
        %v5243 = vpop.f32.mrb[0].mxu0
        %v5244 = vadd.f32 0.0, %v5243
        %v5245 = vpop.f32.mrb[0].mxu0
        %v5246 = vadd.f32 0.0, %v5245
        %v5247 = vpop.f32.mrb[0].mxu0
        %v5248 = vadd.f32 0.0, %v5247
        %5249 = vmatprep.mubr.bf16.mxu0 0
        %5250 = vmatmul.mubr.bf16.gmra.mrb[0].mxu0 %v4724
        %v5251 = vpop.f32.mrb[0].mxu0
        %v5252 = vadd.f32 0.0, %v5251
        %v5253 = vpop.f32.mrb[0].mxu0
        %v5254 = vadd.f32 0.0, %v5253
        %v5255 = vpop.f32.mrb[0].mxu0
        %v5256 = vadd.f32 0.0, %v5255
        %v5257 = vpop.f32.mrb[0].mxu0
        %v5258 = vadd.f32 0.0, %v5257
        %5259 = vmatprep.mubr.bf16.mxu0 0
        %5260 = vmatmul.mubr.bf16.gmra.mrb[0].mxu0 %v4725
        %v5261 = vpop.f32.mrb[0].mxu0
        %v5262 = vadd.f32 0.0, %v5261
        %v5263 = vpop.f32.mrb[0].mxu0
        %v5264 = vadd.f32 0.0, %v5263
        %v5265 = vpop.f32.mrb[0].mxu0
        %v5266 = vadd.f32 0.0, %v5265
        %v5267 = vpop.f32.mrb[0].mxu0
        %v5268 = vadd.f32 0.0, %v5267
        %5269 = vmatprep.mubr.bf16.mxu0 0
        %5270 = vmatmul.mubr.bf16.gmra.mrb[0].mxu0 %v4726
        %v5271 = vpop.f32.mrb[0].mxu0
        %v5272 = vadd.f32 0.0, %v5271
        %v5273 = vpop.f32.mrb[0].mxu0
        %v5274 = vadd.f32 0.0, %v5273
        %v5275 = vpop.f32.mrb[0].mxu0
        %v5276 = vadd.f32 0.0, %v5275
        %v5277 = vpop.f32.mrb[0].mxu0
        %v5278 = vadd.f32 0.0, %v5277
        %5279 = vmatprep.mubr.bf16.mxu0 0
        %5280 = vmatmul.mubr.bf16.gmra.mrb[0].mxu0 %v4727
        %v5281 = vpop.f32.mrb[0].mxu0
        %v5282 = vadd.f32 0.0, %v5281
        %v5283 = vpop.f32.mrb[0].mxu0
        %v5284 = vadd.f32 0.0, %v5283
        %v5285 = vpop.f32.mrb[0].mxu0
        %v5286 = vadd.f32 0.0, %v5285
        %v5287 = vpop.f32.mrb[0].mxu0
        %v5288 = vadd.f32 0.0, %v5287
        %5289 = vmatprep.mubr.bf16.mxu0 0
        %5290 = vmatmul.mubr.bf16.gmra.mrb[0].mxu0 %v4728
        %v5291 = vpop.f32.mrb[0].mxu0
        %v5292 = vadd.f32 0.0, %v5291
        %v5293 = vpop.f32.mrb[0].mxu0
        %v5294 = vadd.f32 0.0, %v5293
        %v5295 = vpop.f32.mrb[0].mxu0
        %v5296 = vadd.f32 0.0, %v5295
        %v5297 = vpop.f32.mrb[0].mxu0
        %v5298 = vadd.f32 0.0, %v5297
        %5299 = vmatprep.mubr.bf16.mxu0 0
        %5300 = vmatmul.mubr.bf16.gmra.mrb[0].mxu0 %v4729
        %v5301 = vpop.f32.mrb[0].mxu0
        %v5302 = vadd.f32 0.0, %v5301
        %v5303 = vpop.f32.mrb[0].mxu0
        %v5304 = vadd.f32 0.0, %v5303
        %v5305 = vpop.f32.mrb[0].mxu0
        %v5306 = vadd.f32 0.0, %v5305
        %v5307 = vpop.f32.mrb[0].mxu0
        %v5308 = vadd.f32 0.0, %v5307
        %5309 = vmatprep.mubr.bf16.mxu0 0
        %5310 = vmatmul.mubr.bf16.gmra.mrb[0].mxu0 %v4730
        %v5311 = vpop.f32.mrb[0].mxu0
        %v5312 = vadd.f32 0.0, %v5311
        %v5313 = vpop.f32.mrb[0].mxu0
        %v5314 = vadd.f32 0.0, %v5313
        %v5315 = vpop.f32.mrb[0].mxu0
        %v5316 = vadd.f32 0.0, %v5315
        %v5317 = vpop.f32.mrb[0].mxu0
        %v5318 = vadd.f32 0.0, %v5317
        %5319 = vmatprep.mubr.bf16.mxu0 0
        %5320 = vmatmul.mubr.bf16.gmra.mrb[0].mxu0 %v4731
        %v5321 = vpop.f32.mrb[0].mxu0
        %v5322 = vadd.f32 0.0, %v5321
        %v5323 = vpop.f32.mrb[0].mxu0
        %v5324 = vadd.f32 0.0, %v5323
        %v5325 = vpop.f32.mrb[0].mxu0
        %v5326 = vadd.f32 0.0, %v5325
        %v5327 = vpop.f32.mrb[0].mxu0
        %v5328 = vadd.f32 0.0, %v5327
        %5329 = vmatprep.mubr.bf16.mxu0 0
        %5330 = vmatmul.mubr.bf16.gmra.mrb[0].mxu0 %v4732
        %v5331 = vpop.f32.mrb[0].mxu0
        %v5332 = vadd.f32 0.0, %v5331
        %v5333 = vpop.f32.mrb[0].mxu0
        %v5334 = vadd.f32 0.0, %v5333
        %v5335 = vpop.f32.mrb[0].mxu0
        %v5336 = vadd.f32 0.0, %v5335
        %v5337 = vpop.f32.mrb[0].mxu0
        %v5338 = vadd.f32 0.0, %v5337
        %5339 = vmatprep.mubr.bf16.mxu0 0
        %5340 = vmatmul.mubr.bf16.gmra.mrb[0].mxu0 %v4733
        %v5341 = vpop.f32.mrb[0].mxu0
        %v5342 = vadd.f32 0.0, %v5341
        %v5343 = vpop.f32.mrb[0].mxu0
        %v5344 = vadd.f32 0.0, %v5343
        %v5345 = vpop.f32.mrb[0].mxu0
        %v5346 = vadd.f32 0.0, %v5345
        %v5347 = vpop.f32.mrb[0].mxu0
        %v5348 = vadd.f32 0.0, %v5347
        %5349 = vmatprep.mubr.bf16.mxu0 0
        %5350 = vmatmul.mubr.bf16.gmra.mrb[0].mxu0 %v4734
        %v5351 = vpop.f32.mrb[0].mxu0
        %v5352 = vadd.f32 0.0, %v5351
        %v5353 = vpop.f32.mrb[0].mxu0
        %v5354 = vadd.f32 0.0, %v5353
        %v5355 = vpop.f32.mrb[0].mxu0
        %v5356 = vadd.f32 0.0, %v5355
        %v5357 = vpop.f32.mrb[0].mxu0
        %v5358 = vadd.f32 0.0, %v5357
        %5359 = vmatprep.mubr.bf16.mxu0 0
        %5360 = vmatmul.mubr.bf16.gmra.mrb[0].mxu0 %v4735
        %v5361 = vpop.f32.mrb[0].mxu0
        %v5362 = vadd.f32 0.0, %v5361
        %v5363 = vpop.f32.mrb[0].mxu0
        %v5364 = vadd.f32 0.0, %v5363
        %v5365 = vpop.f32.mrb[0].mxu0
        %v5366 = vadd.f32 0.0, %v5365
        %v5367 = vpop.f32.mrb[0].mxu0
        %v5368 = vadd.f32 0.0, %v5367
        %5369 = vmatprep.mubr.bf16.mxu0 0
        %5370 = vmatmul.mubr.bf16.gmra.mrb[0].mxu0 %v4736
        %v5371 = vpop.f32.mrb[0].mxu0
        %v5372 = vadd.f32 0.0, %v5371
        %v5373 = vpop.f32.mrb[0].mxu0
        %v5374 = vadd.f32 0.0, %v5373
        %v5375 = vpop.f32.mrb[0].mxu0
        %v5376 = vadd.f32 0.0, %v5375
        %v5377 = vpop.f32.mrb[0].mxu0
        %v5378 = vadd.f32 0.0, %v5377
        %5379 = vmatprep.mubr.bf16.mxu0 0
        %5380 = vmatmul.mubr.bf16.gmra.mrb[0].mxu0 %v4737
        %v5381 = vpop.f32.mrb[0].mxu0
        %v5382 = vadd.f32 0.0, %v5381
        %v5383 = vpop.f32.mrb[0].mxu0
        %v5384 = vadd.f32 0.0, %v5383
        %v5385 = vpop.f32.mrb[0].mxu0
        %v5386 = vadd.f32 0.0, %v5385
        %v5387 = vpop.f32.mrb[0].mxu0
        %v5388 = vadd.f32 0.0, %v5387
        %5389 = vmatprep.mubr.bf16.mxu0 0
        %5390 = vmatmul.mubr.bf16.gmra.mrb[0].mxu0 %v4738
        %v5391 = vpop.f32.mrb[0].mxu0
        %v5392 = vadd.f32 0.0, %v5391
        %v5393 = vpop.f32.mrb[0].mxu0
        %v5394 = vadd.f32 0.0, %v5393
        %v5395 = vpop.f32.mrb[0].mxu0
        %v5396 = vadd.f32 0.0, %v5395
        %v5397 = vpop.f32.mrb[0].mxu0
        %v5398 = vadd.f32 0.0, %v5397
        %5399 = vmatprep.mubr.bf16.mxu0 0
        %5400 = vmatmul.mubr.bf16.gmra.mrb[0].mxu0 %v4739
        %v5401 = vpop.f32.mrb[0].mxu0
        %v5402 = vadd.f32 0.0, %v5401
        %v5403 = vpop.f32.mrb[0].mxu0
        %v5404 = vadd.f32 0.0, %v5403
        %v5405 = vpop.f32.mrb[0].mxu0
        %v5406 = vadd.f32 0.0, %v5405
        %v5407 = vpop.f32.mrb[0].mxu0
        %v5408 = vadd.f32 0.0, %v5407
        %5409 = vmatprep.mubr.bf16.mxu0 0
        %5410 = vmatmul.mubr.bf16.gmra.mrb[0].mxu0 %v4740
        %v5411 = vpop.f32.mrb[0].mxu0
        %v5412 = vadd.f32 0.0, %v5411
        %v5413 = vpop.f32.mrb[0].mxu0
        %v5414 = vadd.f32 0.0, %v5413
        %v5415 = vpop.f32.mrb[0].mxu0
        %v5416 = vadd.f32 0.0, %v5415
        %v5417 = vpop.f32.mrb[0].mxu0
        %v5418 = vadd.f32 0.0, %v5417
        %5419 = vmatprep.mubr.bf16.mxu0 0
        %5420 = vmatmul.mubr.bf16.gmra.mrb[0].mxu0 %v4741
        %v5421 = vpop.f32.mrb[0].mxu0
        %v5422 = vadd.f32 0.0, %v5421
        %v5423 = vpop.f32.mrb[0].mxu0
        %v5424 = vadd.f32 0.0, %v5423
        %v5425 = vpop.f32.mrb[0].mxu0
        %v5426 = vadd.f32 0.0, %v5425
        %v5427 = vpop.f32.mrb[0].mxu0
        %v5428 = vadd.f32 0.0, %v5427
        %5429 = vmatprep.mubr.bf16.mxu0 0
        %5430 = vmatmul.mubr.bf16.gmra.mrb[0].mxu0 %v4742
        %v5431 = vpop.f32.mrb[0].mxu0
        %v5432 = vadd.f32 0.0, %v5431
        %v5433 = vpop.f32.mrb[0].mxu0
        %v5434 = vadd.f32 0.0, %v5433
        %v5435 = vpop.f32.mrb[0].mxu0
        %v5436 = vadd.f32 0.0, %v5435
        %v5437 = vpop.f32.mrb[0].mxu0
        %v5438 = vadd.f32 0.0, %v5437
        %5439 = vmatprep.mubr.bf16.mxu0 0
        %5440 = vmatmul.mubr.bf16.gmra.mrb[0].mxu0 %v4743
        %v5441 = vpop.f32.mrb[0].mxu0
        %v5442 = vadd.f32 0.0, %v5441
        %v5443 = vpop.f32.mrb[0].mxu0
        %v5444 = vadd.f32 0.0, %v5443
        %v5445 = vpop.f32.mrb[0].mxu0
        %v5446 = vadd.f32 0.0, %v5445
        %v5447 = vpop.f32.mrb[0].mxu0
        %v5448 = vadd.f32 0.0, %v5447
        %5449 = vmatprep.mubr.bf16.mxu0 0
        %5450 = vmatmul.mubr.bf16.gmra.mrb[0].mxu0 %v4744
        %v5451 = vpop.f32.mrb[0].mxu0
        %v5452 = vadd.f32 0.0, %v5451
        %v5453 = vpop.f32.mrb[0].mxu0
        %v5454 = vadd.f32 0.0, %v5453
        %v5455 = vpop.f32.mrb[0].mxu0
        %v5456 = vadd.f32 0.0, %v5455
        %v5457 = vpop.f32.mrb[0].mxu0
        %v5458 = vadd.f32 0.0, %v5457
        %5459 = vmatprep.mubr.bf16.mxu0 0
        %5460 = vmatmul.mubr.bf16.gmra.mrb[0].mxu0 %v4745
        %v5461 = vpop.f32.mrb[0].mxu0
        %v5462 = vadd.f32 0.0, %v5461
        %v5463 = vpop.f32.mrb[0].mxu0
        %v5464 = vadd.f32 0.0, %v5463
        %v5465 = vpop.f32.mrb[0].mxu0
        %v5466 = vadd.f32 0.0, %v5465
        %v5467 = vpop.f32.mrb[0].mxu0
        %v5468 = vadd.f32 0.0, %v5467
        %5469 = vmatprep.mubr.bf16.mxu0 0
        %5470 = vmatmul.mubr.bf16.gmra.mrb[0].mxu0 %v4746
        %v5471 = vpop.f32.mrb[0].mxu0
        %v5472 = vadd.f32 0.0, %v5471
        %v5473 = vpop.f32.mrb[0].mxu0
        %v5474 = vadd.f32 0.0, %v5473
        %v5475 = vpop.f32.mrb[0].mxu0
        %v5476 = vadd.f32 0.0, %v5475
        %v5477 = vpop.f32.mrb[0].mxu0
        %v5478 = vadd.f32 0.0, %v5477
        %5479 = vmatprep.mubr.bf16.mxu0 0
        %5480 = vmatmul.mubr.bf16.gmra.mrb[0].mxu0 %v4747
        %v5481 = vpop.f32.mrb[0].mxu0
        %v5482 = vadd.f32 0.0, %v5481
        %v5483 = vpop.f32.mrb[0].mxu0
        %v5484 = vadd.f32 0.0, %v5483
        %v5485 = vpop.f32.mrb[0].mxu0
        %v5486 = vadd.f32 0.0, %v5485
        %v5487 = vpop.f32.mrb[0].mxu0
        %v5488 = vadd.f32 0.0, %v5487
        %5489 = vmatprep.mubr.bf16.mxu0 0
        %5490 = vmatmul.mubr.bf16.gmra.mrb[0].mxu0 %v4748
        %v5491 = vpop.f32.mrb[0].mxu0
        %v5492 = vadd.f32 0.0, %v5491
        %v5493 = vpop.f32.mrb[0].mxu0
        %v5494 = vadd.f32 0.0, %v5493
        %v5495 = vpop.f32.mrb[0].mxu0
        %v5496 = vadd.f32 0.0, %v5495
        %v5497 = vpop.f32.mrb[0].mxu0
        %v5498 = vadd.f32 0.0, %v5497
        %5499 = vmatprep.mubr.bf16.mxu0 0
        %5500 = vmatmul.mubr.bf16.gmra.mrb[0].mxu0 %v4749
        %v5501 = vpop.f32.mrb[0].mxu0
        %v5502 = vadd.f32 0.0, %v5501
        %v5503 = vpop.f32.mrb[0].mxu0
        %v5504 = vadd.f32 0.0, %v5503
        %v5505 = vpop.f32.mrb[0].mxu0
        %v5506 = vadd.f32 0.0, %v5505
        %v5507 = vpop.f32.mrb[0].mxu0
        %v5508 = vadd.f32 0.0, %v5507
        %5509 = vmatprep.mubr.bf16.mxu0 0
        %5510 = vmatmul.mubr.bf16.gmra.mrb[0].mxu0 %v4750
        %v5511 = vpop.f32.mrb[0].mxu0
        %v5512 = vadd.f32 0.0, %v5511
        %v5513 = vpop.f32.mrb[0].mxu0
        %v5514 = vadd.f32 0.0, %v5513
        %v5515 = vpop.f32.mrb[0].mxu0
        %v5516 = vadd.f32 0.0, %v5515
        %v5517 = vpop.f32.mrb[0].mxu0
        %v5518 = vadd.f32 0.0, %v5517
        %5519 = vdwg.mxu0
        %v5520 = vld [vmem:[#allocation2] sm:$0xff]
        %v5521 = vld [vmem:[#allocation2 + $0x8] sm:$0xff]
        %v5522 = vmax.f32 %v4882, %v4886
        %v5523 = vmax.f32 %v5522, %v4892
        %v5524 = vmax.f32 %v5523, %v4896
        %v5525 = vmax.f32 %v5524, %v4902
        %v5526 = vmax.f32 %v5525, %v4906
        %v5527 = vmax.f32 %v5526, %v4912
        %v5528 = vmax.f32 %v5527, %v4916
        %v5529 = vmax.f32 %v5528, %v4922
        %v5530 = vmax.f32 %v5529, %v4926
        %v5531 = vmax.f32 %v5530, %v4932
        %v5532 = vmax.f32 %v5531, %v4936
        %v5533 = vmax.f32 %v5532, %v4942
        %v5534 = vmax.f32 %v5533, %v4946
        %v5535 = vmax.f32 %v5534, %v4952
        %v5536 = vmax.f32 %v5535, %v4956
        %v5537 = vrot.slane %v5536, 4
        %v5538 = vmax.f32 %v5536, %v5537
        %v5539 = vrot.slane %v5538, 2
        %v5540 = vmax.f32 %v5538, %v5539
        %v5541 = vrot.slane %v5540, 1
        %v5542 = vmax.f32 %v5540, %v5541
        %v5543 = vmax.f32 %v4884, %v4888
        %v5544 = vmax.f32 %v5543, %v4894
        %v5545 = vmax.f32 %v5544, %v4898
        %v5546 = vmax.f32 %v5545, %v4904
        %v5547 = vmax.f32 %v5546, %v4908
        %v5548 = vmax.f32 %v5547, %v4914
        %v5549 = vmax.f32 %v5548, %v4918
        %v5550 = vmax.f32 %v5549, %v4924
        %v5551 = vmax.f32 %v5550, %v4928
        %v5552 = vmax.f32 %v5551, %v4934
        %v5553 = vmax.f32 %v5552, %v4938
        %v5554 = vmax.f32 %v5553, %v4944
        %v5555 = vmax.f32 %v5554, %v4948
        %v5556 = vmax.f32 %v5555, %v4954
        %v5557 = vmax.f32 %v5556, %v4958
        %v5558 = vrot.slane %v5557, 4
        %v5559 = vmax.f32 %v5557, %v5558
        %v5560 = vrot.slane %v5559, 2
        %v5561 = vmax.f32 %v5559, %v5560
        %v5562 = vrot.slane %v5561, 1
        %v5563 = vmax.f32 %v5561, %v5562
        %v5564 = vmax.f32 %v4962, %v4966
        %v5565 = vmax.f32 %v5564, %v4972
        %v5566 = vmax.f32 %v5565, %v4976
        %v5567 = vmax.f32 %v5566, %v4982
        %v5568 = vmax.f32 %v5567, %v4986
        %v5569 = vmax.f32 %v5568, %v4992
        %v5570 = vmax.f32 %v5569, %v4996
        %v5571 = vmax.f32 %v5570, %v5002
        %v5572 = vmax.f32 %v5571, %v5006
        %v5573 = vmax.f32 %v5572, %v5012
        %v5574 = vmax.f32 %v5573, %v5016
        %v5575 = vmax.f32 %v5574, %v5022
        %v5576 = vmax.f32 %v5575, %v5026
        %v5577 = vmax.f32 %v5576, %v5032
        %v5578 = vmax.f32 %v5577, %v5036
        %v5579 = vrot.slane %v5578, 4
        %v5580 = vmax.f32 %v5578, %v5579
        %v5581 = vrot.slane %v5580, 2
        %v5582 = vmax.f32 %v5580, %v5581
        %v5583 = vrot.slane %v5582, 1
        %v5584 = vmax.f32 %v5582, %v5583
        %v5585 = vmax.f32 %v4964, %v4968
        %v5586 = vmax.f32 %v5585, %v4974
        %v5587 = vmax.f32 %v5586, %v4978
        %v5588 = vmax.f32 %v5587, %v4984
        %v5589 = vmax.f32 %v5588, %v4988
        %v5590 = vmax.f32 %v5589, %v4994
        %v5591 = vmax.f32 %v5590, %v4998
        %v5592 = vmax.f32 %v5591, %v5004
        %v5593 = vmax.f32 %v5592, %v5008
        %v5594 = vmax.f32 %v5593, %v5014
        %v5595 = vmax.f32 %v5594, %v5018
        %v5596 = vmax.f32 %v5595, %v5024
        %v5597 = vmax.f32 %v5596, %v5028
        %v5598 = vmax.f32 %v5597, %v5034
        %v5599 = vmax.f32 %v5598, %v5038
        %v5600 = vrot.slane %v5599, 4
        %v5601 = vmax.f32 %v5599, %v5600
        %v5602 = vrot.slane %v5601, 2
        %v5603 = vmax.f32 %v5601, %v5602
        %v5604 = vrot.slane %v5603, 1
        %v5605 = vmax.f32 %v5603, %v5604
        %v5606 = vmax.f32 %v5042, %v5046
        %v5607 = vmax.f32 %v5606, %v5052
        %v5608 = vmax.f32 %v5607, %v5056
        %v5609 = vmax.f32 %v5608, %v5062
        %v5610 = vmax.f32 %v5609, %v5066
        %v5611 = vmax.f32 %v5610, %v5072
        %v5612 = vmax.f32 %v5611, %v5076
        %v5613 = vmax.f32 %v5612, %v5082
        %v5614 = vmax.f32 %v5613, %v5086
        %v5615 = vmax.f32 %v5614, %v5092
        %v5616 = vmax.f32 %v5615, %v5096
        %v5617 = vmax.f32 %v5616, %v5102
        %v5618 = vmax.f32 %v5617, %v5106
        %v5619 = vmax.f32 %v5618, %v5112
        %v5620 = vmax.f32 %v5619, %v5116
        %v5621 = vrot.slane %v5620, 4
        %v5622 = vmax.f32 %v5620, %v5621
        %v5623 = vrot.slane %v5622, 2
        %v5624 = vmax.f32 %v5622, %v5623
        %v5625 = vrot.slane %v5624, 1
        %v5626 = vmax.f32 %v5624, %v5625
        %v5627 = vmax.f32 %v5044, %v5048
        %v5628 = vmax.f32 %v5627, %v5054
        %v5629 = vmax.f32 %v5628, %v5058
        %v5630 = vmax.f32 %v5629, %v5064
        %v5631 = vmax.f32 %v5630, %v5068
        %v5632 = vmax.f32 %v5631, %v5074
        %v5633 = vmax.f32 %v5632, %v5078
        %v5634 = vmax.f32 %v5633, %v5084
        %v5635 = vmax.f32 %v5634, %v5088
        %v5636 = vmax.f32 %v5635, %v5094
        %v5637 = vmax.f32 %v5636, %v5098
        %v5638 = vmax.f32 %v5637, %v5104
        %v5639 = vmax.f32 %v5638, %v5108
        %v5640 = vmax.f32 %v5639, %v5114
        %v5641 = vmax.f32 %v5640, %v5118
        %v5642 = vrot.slane %v5641, 4
        %v5643 = vmax.f32 %v5641, %v5642
        %v5644 = vrot.slane %v5643, 2
        %v5645 = vmax.f32 %v5643, %v5644
        %v5646 = vrot.slane %v5645, 1
        %v5647 = vmax.f32 %v5645, %v5646
        %v5648 = vmax.f32 %v5122, %v5126
        %v5649 = vmax.f32 %v5648, %v5132
        %v5650 = vmax.f32 %v5649, %v5136
        %v5651 = vmax.f32 %v5650, %v5142
        %v5652 = vmax.f32 %v5651, %v5146
        %v5653 = vmax.f32 %v5652, %v5152
        %v5654 = vmax.f32 %v5653, %v5156
        %v5655 = vmax.f32 %v5654, %v5162
        %v5656 = vmax.f32 %v5655, %v5166
        %v5657 = vmax.f32 %v5656, %v5172
        %v5658 = vmax.f32 %v5657, %v5176
        %v5659 = vmax.f32 %v5658, %v5182
        %v5660 = vmax.f32 %v5659, %v5186
        %v5661 = vmax.f32 %v5660, %v5192
        %v5662 = vmax.f32 %v5661, %v5196
        %v5663 = vrot.slane %v5662, 4
        %v5664 = vmax.f32 %v5662, %v5663
        %v5665 = vrot.slane %v5664, 2
        %v5666 = vmax.f32 %v5664, %v5665
        %v5667 = vrot.slane %v5666, 1
        %v5668 = vmax.f32 %v5666, %v5667
        %v5669 = vmax.f32 %v5124, %v5128
        %v5670 = vmax.f32 %v5669, %v5134
        %v5671 = vmax.f32 %v5670, %v5138
        %v5672 = vmax.f32 %v5671, %v5144
        %v5673 = vmax.f32 %v5672, %v5148
        %v5674 = vmax.f32 %v5673, %v5154
        %v5675 = vmax.f32 %v5674, %v5158
        %v5676 = vmax.f32 %v5675, %v5164
        %v5677 = vmax.f32 %v5676, %v5168
        %v5678 = vmax.f32 %v5677, %v5174
        %v5679 = vmax.f32 %v5678, %v5178
        %v5680 = vmax.f32 %v5679, %v5184
        %v5681 = vmax.f32 %v5680, %v5188
        %v5682 = vmax.f32 %v5681, %v5194
        %v5683 = vmax.f32 %v5682, %v5198
        %v5684 = vrot.slane %v5683, 4
        %v5685 = vmax.f32 %v5683, %v5684
        %v5686 = vrot.slane %v5685, 2
        %v5687 = vmax.f32 %v5685, %v5686
        %v5688 = vrot.slane %v5687, 1
        %v5689 = vmax.f32 %v5687, %v5688
        %v5690 = vmax.f32 %v5202, %v5206
        %v5691 = vmax.f32 %v5690, %v5212
        %v5692 = vmax.f32 %v5691, %v5216
        %v5693 = vmax.f32 %v5692, %v5222
        %v5694 = vmax.f32 %v5693, %v5226
        %v5695 = vmax.f32 %v5694, %v5232
        %v5696 = vmax.f32 %v5695, %v5236
        %v5697 = vmax.f32 %v5696, %v5242
        %v5698 = vmax.f32 %v5697, %v5246
        %v5699 = vmax.f32 %v5698, %v5252
        %v5700 = vmax.f32 %v5699, %v5256
        %v5701 = vmax.f32 %v5700, %v5262
        %v5702 = vmax.f32 %v5701, %v5266
        %v5703 = vmax.f32 %v5702, %v5272
        %v5704 = vmax.f32 %v5703, %v5276
        %v5705 = vrot.slane %v5704, 4
        %v5706 = vmax.f32 %v5704, %v5705
        %v5707 = vrot.slane %v5706, 2
        %v5708 = vmax.f32 %v5706, %v5707
        %v5709 = vrot.slane %v5708, 1
        %v5710 = vmax.f32 %v5708, %v5709
        %v5711 = vmax.f32 %v5204, %v5208
        %v5712 = vmax.f32 %v5711, %v5214
        %v5713 = vmax.f32 %v5712, %v5218
        %v5714 = vmax.f32 %v5713, %v5224
        %v5715 = vmax.f32 %v5714, %v5228
        %v5716 = vmax.f32 %v5715, %v5234
        %v5717 = vmax.f32 %v5716, %v5238
        %v5718 = vmax.f32 %v5717, %v5244
        %v5719 = vmax.f32 %v5718, %v5248
        %v5720 = vmax.f32 %v5719, %v5254
        %v5721 = vmax.f32 %v5720, %v5258
        %v5722 = vmax.f32 %v5721, %v5264
        %v5723 = vmax.f32 %v5722, %v5268
        %v5724 = vmax.f32 %v5723, %v5274
        %v5725 = vmax.f32 %v5724, %v5278
        %v5726 = vrot.slane %v5725, 4
        %v5727 = vmax.f32 %v5725, %v5726
        %v5728 = vrot.slane %v5727, 2
        %v5729 = vmax.f32 %v5727, %v5728
        %v5730 = vrot.slane %v5729, 1
        %v5731 = vmax.f32 %v5729, %v5730
        %v5732 = vmax.f32 %v5282, %v5286
        %v5733 = vmax.f32 %v5732, %v5292
        %v5734 = vmax.f32 %v5733, %v5296
        %v5735 = vmax.f32 %v5734, %v5302
        %v5736 = vmax.f32 %v5735, %v5306
        %v5737 = vmax.f32 %v5736, %v5312
        %v5738 = vmax.f32 %v5737, %v5316
        %v5739 = vmax.f32 %v5738, %v5322
        %v5740 = vmax.f32 %v5739, %v5326
        %v5741 = vmax.f32 %v5740, %v5332
        %v5742 = vmax.f32 %v5741, %v5336
        %v5743 = vmax.f32 %v5742, %v5342
        %v5744 = vmax.f32 %v5743, %v5346
        %v5745 = vmax.f32 %v5744, %v5352
        %v5746 = vmax.f32 %v5745, %v5356
        %v5747 = vrot.slane %v5746, 4
        %v5748 = vmax.f32 %v5746, %v5747
        %v5749 = vrot.slane %v5748, 2
        %v5750 = vmax.f32 %v5748, %v5749
        %v5751 = vrot.slane %v5750, 1
        %v5752 = vmax.f32 %v5750, %v5751
        %v5753 = vmax.f32 %v5284, %v5288
        %v5754 = vmax.f32 %v5753, %v5294
        %v5755 = vmax.f32 %v5754, %v5298
        %v5756 = vmax.f32 %v5755, %v5304
        %v5757 = vmax.f32 %v5756, %v5308
        %v5758 = vmax.f32 %v5757, %v5314
        %v5759 = vmax.f32 %v5758, %v5318
        %v5760 = vmax.f32 %v5759, %v5324
        %v5761 = vmax.f32 %v5760, %v5328
        %v5762 = vmax.f32 %v5761, %v5334
        %v5763 = vmax.f32 %v5762, %v5338
        %v5764 = vmax.f32 %v5763, %v5344
        %v5765 = vmax.f32 %v5764, %v5348
        %v5766 = vmax.f32 %v5765, %v5354
        %v5767 = vmax.f32 %v5766, %v5358
        %v5768 = vrot.slane %v5767, 4
        %v5769 = vmax.f32 %v5767, %v5768
        %v5770 = vrot.slane %v5769, 2
        %v5771 = vmax.f32 %v5769, %v5770
        %v5772 = vrot.slane %v5771, 1
        %v5773 = vmax.f32 %v5771, %v5772
        %v5774 = vmax.f32 %v5362, %v5366
        %v5775 = vmax.f32 %v5774, %v5372
        %v5776 = vmax.f32 %v5775, %v5376
        %v5777 = vmax.f32 %v5776, %v5382
        %v5778 = vmax.f32 %v5777, %v5386
        %v5779 = vmax.f32 %v5778, %v5392
        %v5780 = vmax.f32 %v5779, %v5396
        %v5781 = vmax.f32 %v5780, %v5402
        %v5782 = vmax.f32 %v5781, %v5406
        %v5783 = vmax.f32 %v5782, %v5412
        %v5784 = vmax.f32 %v5783, %v5416
        %v5785 = vmax.f32 %v5784, %v5422
        %v5786 = vmax.f32 %v5785, %v5426
        %v5787 = vmax.f32 %v5786, %v5432
        %v5788 = vmax.f32 %v5787, %v5436
        %v5789 = vrot.slane %v5788, 4
        %v5790 = vmax.f32 %v5788, %v5789
        %v5791 = vrot.slane %v5790, 2
        %v5792 = vmax.f32 %v5790, %v5791
        %v5793 = vrot.slane %v5792, 1
        %v5794 = vmax.f32 %v5792, %v5793
        %v5795 = vmax.f32 %v5364, %v5368
        %v5796 = vmax.f32 %v5795, %v5374
        %v5797 = vmax.f32 %v5796, %v5378
        %v5798 = vmax.f32 %v5797, %v5384
        %v5799 = vmax.f32 %v5798, %v5388
        %v5800 = vmax.f32 %v5799, %v5394
        %v5801 = vmax.f32 %v5800, %v5398
        %v5802 = vmax.f32 %v5801, %v5404
        %v5803 = vmax.f32 %v5802, %v5408
        %v5804 = vmax.f32 %v5803, %v5414
        %v5805 = vmax.f32 %v5804, %v5418
        %v5806 = vmax.f32 %v5805, %v5424
        %v5807 = vmax.f32 %v5806, %v5428
        %v5808 = vmax.f32 %v5807, %v5434
        %v5809 = vmax.f32 %v5808, %v5438
        %v5810 = vrot.slane %v5809, 4
        %v5811 = vmax.f32 %v5809, %v5810
        %v5812 = vrot.slane %v5811, 2
        %v5813 = vmax.f32 %v5811, %v5812
        %v5814 = vrot.slane %v5813, 1
        %v5815 = vmax.f32 %v5813, %v5814
        %v5816 = vmax.f32 %v5442, %v5446
        %v5817 = vmax.f32 %v5816, %v5452
        %v5818 = vmax.f32 %v5817, %v5456
        %v5819 = vmax.f32 %v5818, %v5462
        %v5820 = vmax.f32 %v5819, %v5466
        %v5821 = vmax.f32 %v5820, %v5472
        %v5822 = vmax.f32 %v5821, %v5476
        %v5823 = vmax.f32 %v5822, %v5482
        %v5824 = vmax.f32 %v5823, %v5486
        %v5825 = vmax.f32 %v5824, %v5492
        %v5826 = vmax.f32 %v5825, %v5496
        %v5827 = vmax.f32 %v5826, %v5502
        %v5828 = vmax.f32 %v5827, %v5506
        %v5829 = vmax.f32 %v5828, %v5512
        %v5830 = vmax.f32 %v5829, %v5516
        %v5831 = vrot.slane %v5830, 4
        %v5832 = vmax.f32 %v5830, %v5831
        %v5833 = vrot.slane %v5832, 2
        %v5834 = vmax.f32 %v5832, %v5833
        %v5835 = vrot.slane %v5834, 1
        %v5836 = vmax.f32 %v5834, %v5835
        %v5837 = vmax.f32 %v5444, %v5448
        %v5838 = vmax.f32 %v5837, %v5454
        %v5839 = vmax.f32 %v5838, %v5458
        %v5840 = vmax.f32 %v5839, %v5464
        %v5841 = vmax.f32 %v5840, %v5468
        %v5842 = vmax.f32 %v5841, %v5474
        %v5843 = vmax.f32 %v5842, %v5478
        %v5844 = vmax.f32 %v5843, %v5484
        %v5845 = vmax.f32 %v5844, %v5488
        %v5846 = vmax.f32 %v5845, %v5494
        %v5847 = vmax.f32 %v5846, %v5498
        %v5848 = vmax.f32 %v5847, %v5504
        %v5849 = vmax.f32 %v5848, %v5508
        %v5850 = vmax.f32 %v5849, %v5514
        %v5851 = vmax.f32 %v5850, %v5518
        %v5852 = vrot.slane %v5851, 4
        %v5853 = vmax.f32 %v5851, %v5852
        %v5854 = vrot.slane %v5853, 2
        %v5855 = vmax.f32 %v5853, %v5854
        %v5856 = vrot.slane %v5855, 1
        %v5857 = vmax.f32 %v5855, %v5856
        %vm5874 = vcmask 1041409
        %v5875 = vsel %vm5874, %v5584, %v5542
        %vm5876 = vcmask 1042434
        %v5877 = vsel %vm5876, %v5626, %v5875
        %vm5878 = vcmask 1043459
        %v5879 = vsel %vm5878, %v5668, %v5877
        %vm5880 = vcmask 1044484
        %v5881 = vsel %vm5880, %v5710, %v5879
        %vm5882 = vcmask 1045509
        %v5883 = vsel %vm5882, %v5752, %v5881
        %vm5884 = vcmask 1046534
        %v5885 = vsel %vm5884, %v5794, %v5883
        %vm5886 = vcmask 1047559
        %v5887 = vsel %vm5886, %v5836, %v5885
        %v5888 = vsel %vm5874, %v5605, %v5563
        %v5889 = vsel %vm5876, %v5647, %v5888
        %v5890 = vsel %vm5878, %v5689, %v5889
        %v5891 = vsel %vm5880, %v5731, %v5890
        %v5892 = vsel %vm5882, %v5773, %v5891
        %v5893 = vsel %vm5884, %v5815, %v5892
        %v5894 = vsel %vm5886, %v5857, %v5893
        %v5897 = vmax.f32 %v5520, %v5887
        %v5898 = vmax.f32 %v5521, %v5894
        %5899 = vst [vmem:[#allocation2] sm:$0xff] %v5897
        %5900 = vst [vmem:[#allocation2 + $0x8] sm:$0xff] %v5898
        %p5901 = scmp.eq.s32.totalorder %s32, 1
        // Predicated region
        $region115: #{tpu_custom_call.1} parent=105 // pred_check
          %p5902 = pneg %p5901
        $region116: #{tpu_custom_call.1} parent=105 // pred_check_branch
          %5904 = sbr.rel (%p5902) target = $region118
        $region117: #{tpu_custom_call.1} parent=105 // pred_region
          %v5905 = vld [vmem:[#allocation2] sm:$0xff]
          %v5906 = vld [vmem:[#allocation2 + $0x8] sm:$0xff]
          %v5907 = vld [vmem:[%s6] sm:$0x3]
          %v5909 = vlaneseq
          %v5910 = vshrl.u32 %v5909, 7
          %v5911 = vsub.s32 0, %v5910
          %v5912 = vrot.slane %v5907, %v5911
          %v5913 = vlaneseq
          %v5914 = vshrl.u32 %v5913, 7
          %v5915 = vsub.s32 1, %v5914
          %v5916 = vrot.slane %v5907, %v5915
          %v5919 = vadd.f32 %v5905, %v5912
          %v5920 = vadd.f32 %v5906, %v5916
          %v5921 = vmax.f32 %v5919, 0.0
          %v5922 = vmax.f32 %v5920, 0.0
          %v5923 = vpack.c.bf16 %v5921, %v5921
          %v5924 = vpack.c.bf16 %v5922, %v5922
          %v5925 = vld [vmem:[%s7] sm:$0xf]
          %v5926 = vld [vmem:[%s7 + $0x4] sm:$0xf]
          %v5927 = vld [vmem:[%s7 + $0x8] sm:$0xf]
          %v5928 = vld [vmem:[%s7 + $0xc] sm:$0xf]
          %v5929 = vld [vmem:[%s7 + $0x10] sm:$0xf]
          %v5930 = vld [vmem:[%s7 + $0x14] sm:$0xf]
          %v5931 = vld [vmem:[%s7 + $0x18] sm:$0xf]
          %v5932 = vld [vmem:[%s7 + $0x1c] sm:$0xf]
          %v5933 = vld [vmem:[%s7 + $0x20] sm:$0xf]
          %v5934 = vld [vmem:[%s7 + $0x24] sm:$0xf]
          %v5935 = vld [vmem:[%s7 + $0x28] sm:$0xf]
          %v5936 = vld [vmem:[%s7 + $0x2c] sm:$0xf]
          %v5937 = vld [vmem:[%s7 + $0x30] sm:$0xf]
          %v5938 = vld [vmem:[%s7 + $0x34] sm:$0xf]
          %v5939 = vld [vmem:[%s7 + $0x38] sm:$0xf]
          %v5940 = vld [vmem:[%s7 + $0x3c] sm:$0xf]
          %v5941 = vld [vmem:[%s7 + $0x40] sm:$0xf]
          %v5942 = vld [vmem:[%s7 + $0x44] sm:$0xf]
          %v5943 = vld [vmem:[%s7 + $0x48] sm:$0xf]
          %v5944 = vld [vmem:[%s7 + $0x4c] sm:$0xf]
          %v5945 = vld [vmem:[%s7 + $0x50] sm:$0xf]
          %v5946 = vld [vmem:[%s7 + $0x54] sm:$0xf]
          %v5947 = vld [vmem:[%s7 + $0x58] sm:$0xf]
          %v5948 = vld [vmem:[%s7 + $0x5c] sm:$0xf]
          %v5949 = vld [vmem:[%s7 + $0x60] sm:$0xf]
          %v5950 = vld [vmem:[%s7 + $0x64] sm:$0xf]
          %v5951 = vld [vmem:[%s7 + $0x68] sm:$0xf]
          %v5952 = vld [vmem:[%s7 + $0x6c] sm:$0xf]
          %v5953 = vld [vmem:[%s7 + $0x70] sm:$0xf]
          %v5954 = vld [vmem:[%s7 + $0x74] sm:$0xf]
          %v5955 = vld [vmem:[%s7 + $0x78] sm:$0xf]
          %v5956 = vld [vmem:[%s7 + $0x7c] sm:$0xf]
          %v5957 = vld [vmem:[%s8] sm:$0x1]
          %v5959 = vlaneseq
          %v5960 = vshrl.u32 %v5959, 7
          %v5961 = vsub.s32 0, %v5960
          %v5962 = vrot.slane %v5957, %v5961
          %v5996 = vunpack.c.l.b16 %v5925
          %v5997 = vunpack.c.l.b16 %v5926
          %v5998 = vunpack.c.l.b16 %v5927
          %v5999 = vunpack.c.l.b16 %v5928
          %v6000 = vunpack.c.l.b16 %v5929
          %v6001 = vunpack.c.l.b16 %v5930
          %v6002 = vunpack.c.l.b16 %v5931
          %v6003 = vunpack.c.l.b16 %v5932
          %v6004 = vunpack.c.l.b16 %v5933
          %v6005 = vunpack.c.l.b16 %v5934
          %v6006 = vunpack.c.l.b16 %v5935
          %v6007 = vunpack.c.l.b16 %v5936
          %v6008 = vunpack.c.l.b16 %v5937
          %v6009 = vunpack.c.l.b16 %v5938
          %v6010 = vunpack.c.l.b16 %v5939
          %v6011 = vunpack.c.l.b16 %v5940
          %v6012 = vunpack.c.l.b16 %v5941
          %v6013 = vunpack.c.l.b16 %v5942
          %v6014 = vunpack.c.l.b16 %v5943
          %v6015 = vunpack.c.l.b16 %v5944
          %v6016 = vunpack.c.l.b16 %v5945
          %v6017 = vunpack.c.l.b16 %v5946
          %v6018 = vunpack.c.l.b16 %v5947
          %v6019 = vunpack.c.l.b16 %v5948
          %v6020 = vunpack.c.l.b16 %v5949
          %v6021 = vunpack.c.l.b16 %v5950
          %v6022 = vunpack.c.l.b16 %v5951
          %v6023 = vunpack.c.l.b16 %v5952
          %v6024 = vunpack.c.l.b16 %v5953
          %v6025 = vunpack.c.l.b16 %v5954
          %v6026 = vunpack.c.l.b16 %v5955
          %v6027 = vunpack.c.l.b16 %v5956
          %v6028 = vpack.c.b16 %v5997, %v5996
          %v6029 = vpack.c.b16 %v5999, %v5998
          %v6030 = vpack.c.b16 %v6001, %v6000
          %v6031 = vpack.c.b16 %v6003, %v6002
          %v6032 = vpack.c.b16 %v6005, %v6004
          %v6033 = vpack.c.b16 %v6007, %v6006
          %v6034 = vpack.c.b16 %v6009, %v6008
          %v6035 = vpack.c.b16 %v6011, %v6010
          %v6036 = vpack.c.b16 %v6013, %v6012
          %v6037 = vpack.c.b16 %v6015, %v6014
          %v6038 = vpack.c.b16 %v6017, %v6016
          %v6039 = vpack.c.b16 %v6019, %v6018
          %v6040 = vpack.c.b16 %v6021, %v6020
          %v6041 = vpack.c.b16 %v6023, %v6022
          %v6042 = vpack.c.b16 %v6025, %v6024
          %v6043 = vpack.c.b16 %v6027, %v6026
          %6060 = vmatprep.subr.bf16.mxu0 0
          %6061 = vmatpush1.bf16.msra.mxu0 %v6028
          %6062 = vmatprep.subr.bf16.mxu0 0
          %6063 = vmatpush1.bf16.msra.mxu0 %v6029
          %6064 = vmatprep.subr.bf16.mxu0 0
          %6065 = vmatpush1.bf16.msra.mxu0 %v6030
          %6066 = vmatprep.subr.bf16.mxu0 0
          %6067 = vmatpush1.bf16.msra.mxu0 %v6031
          %6068 = vmatprep.subr.bf16.mxu0 0
          %6069 = vmatpush1.bf16.msra.mxu0 %v6032
          %6070 = vmatprep.subr.bf16.mxu0 0
          %6071 = vmatpush1.bf16.msra.mxu0 %v6033
          %6072 = vmatprep.subr.bf16.mxu0 0
          %6073 = vmatpush1.bf16.msra.mxu0 %v6034
          %6074 = vmatprep.subr.bf16.mxu0 0
          %6075 = vmatpush1.bf16.msra.mxu0 %v6035
          %6076 = vmatprep.subr.bf16.mxu0 0
          %6077 = vmatpush1.bf16.msra.mxu0 %v6036
          %6078 = vmatprep.subr.bf16.mxu0 0
          %6079 = vmatpush1.bf16.msra.mxu0 %v6037
          %6080 = vmatprep.subr.bf16.mxu0 0
          %6081 = vmatpush1.bf16.msra.mxu0 %v6038
          %6082 = vmatprep.subr.bf16.mxu0 0
          %6083 = vmatpush1.bf16.msra.mxu0 %v6039
          %6084 = vmatprep.subr.bf16.mxu0 0
          %6085 = vmatpush1.bf16.msra.mxu0 %v6040
          %6086 = vmatprep.subr.bf16.mxu0 0
          %6087 = vmatpush1.bf16.msra.mxu0 %v6041
          %6088 = vmatprep.subr.bf16.mxu0 0
          %6089 = vmatpush1.bf16.msra.mxu0 %v6042
          %6090 = vmatprep.subr.bf16.mxu0 0
          %6091 = vmatpush1.bf16.msra.mxu0 %v6043
          %6092 = vmatprep.mubr.bf16.mxu0 %v5924
          %6093 = vmatmul.mubr.bf16.gmra.mrb[0].mxu0 %v5923
          %v6094 = vpop.f32.mrb[0].mxu0
          %v6095 = vadd.f32 %v5962, %v6094
          %v6096 = vpop.f32.mrb[0].mxu0
          %v6097 = vpop.f32.mrb[0].mxu0
          %v6098 = vpop.f32.mrb[0].mxu0
          %6099 = vdwg.mxu0
          %v6100 = vmax.f32 %v6095, 0.0
          %v6101 = vpack.c.bf16 %v6100, %v6100
          %v6102 = vld [vmem:[%s9] sm:$0xf]
          %v6103 = vld [vmem:[%s9 + $0x4] sm:$0xf]
          %v6104 = vld [vmem:[%s9 + $0x8] sm:$0xf]
          %v6105 = vld [vmem:[%s9 + $0xc] sm:$0xf]
          %v6106 = vld [vmem:[%s9 + $0x10] sm:$0xf]
          %v6107 = vld [vmem:[%s9 + $0x14] sm:$0xf]
          %v6108 = vld [vmem:[%s9 + $0x18] sm:$0xf]
          %v6109 = vld [vmem:[%s9 + $0x1c] sm:$0xf]
          %v6110 = vld [vmem:[%s9 + $0x20] sm:$0xf]
          %v6111 = vld [vmem:[%s9 + $0x24] sm:$0xf]
          %v6112 = vld [vmem:[%s9 + $0x28] sm:$0xf]
          %v6113 = vld [vmem:[%s9 + $0x2c] sm:$0xf]
          %v6114 = vld [vmem:[%s9 + $0x30] sm:$0xf]
          %v6115 = vld [vmem:[%s9 + $0x34] sm:$0xf]
          %v6116 = vld [vmem:[%s9 + $0x38] sm:$0xf]
          %v6117 = vld [vmem:[%s9 + $0x3c] sm:$0xf]
          %v6118 = vld [vmem:[%s10] sm:$0x1]
          %v6120 = vlaneseq
          %v6121 = vshrl.u32 %v6120, 7
          %v6122 = vsub.s32 0, %v6121
          %v6123 = vrot.slane %v6118, %v6122
          %v6141 = vunpack.c.l.b16 %v6102
          %v6142 = vunpack.c.l.b16 %v6103
          %v6143 = vunpack.c.l.b16 %v6104
          %v6144 = vunpack.c.l.b16 %v6105
          %v6145 = vunpack.c.l.b16 %v6106
          %v6146 = vunpack.c.l.b16 %v6107
          %v6147 = vunpack.c.l.b16 %v6108
          %v6148 = vunpack.c.l.b16 %v6109
          %v6149 = vunpack.c.l.b16 %v6110
          %v6150 = vunpack.c.l.b16 %v6111
          %v6151 = vunpack.c.l.b16 %v6112
          %v6152 = vunpack.c.l.b16 %v6113
          %v6153 = vunpack.c.l.b16 %v6114
          %v6154 = vunpack.c.l.b16 %v6115
          %v6155 = vunpack.c.l.b16 %v6116
          %v6156 = vunpack.c.l.b16 %v6117
          %v6157 = vpack.c.b16 %v6142, %v6141
          %v6158 = vpack.c.b16 %v6144, %v6143
          %v6159 = vpack.c.b16 %v6146, %v6145
          %v6160 = vpack.c.b16 %v6148, %v6147
          %v6161 = vpack.c.b16 %v6150, %v6149
          %v6162 = vpack.c.b16 %v6152, %v6151
          %v6163 = vpack.c.b16 %v6154, %v6153
          %v6164 = vpack.c.b16 %v6156, %v6155
          %6173 = vmatprep.subr.bf16.mxu0 0
          %6174 = vmatpush1.bf16.msra.mxu0 %v6157
          %6175 = vmatprep.subr.bf16.mxu0 0
          %6176 = vmatpush1.bf16.msra.mxu0 %v6158
          %6177 = vmatprep.subr.bf16.mxu0 0
          %6178 = vmatpush1.bf16.msra.mxu0 %v6159
          %6179 = vmatprep.subr.bf16.mxu0 0
          %6180 = vmatpush1.bf16.msra.mxu0 %v6160
          %6181 = vmatprep.subr.bf16.mxu0 0
          %6182 = vmatpush1.bf16.msra.mxu0 %v6161
          %6183 = vmatprep.subr.bf16.mxu0 0
          %6184 = vmatpush1.bf16.msra.mxu0 %v6162
          %6185 = vmatprep.subr.bf16.mxu0 0
          %6186 = vmatpush1.bf16.msra.mxu0 %v6163
          %6187 = vmatprep.subr.bf16.mxu0 0
          %6188 = vmatpush1.bf16.msra.mxu0 %v6164
          %6189 = vmatprep.subr.bf16.mxu0 0
          %6190 = vmatpush1.bf16.msra.mxu0 0
          %6191 = vmatprep.subr.bf16.mxu0 0
          %6192 = vmatpush1.bf16.msra.mxu0 0
          %6193 = vmatprep.subr.bf16.mxu0 0
          %6194 = vmatpush1.bf16.msra.mxu0 0
          %6195 = vmatprep.subr.bf16.mxu0 0
          %6196 = vmatpush1.bf16.msra.mxu0 0
          %6197 = vmatprep.subr.bf16.mxu0 0
          %6198 = vmatpush1.bf16.msra.mxu0 0
          %6199 = vmatprep.subr.bf16.mxu0 0
          %6200 = vmatpush1.bf16.msra.mxu0 0
          %6201 = vmatprep.subr.bf16.mxu0 0
          %6202 = vmatpush1.bf16.msra.mxu0 0
          %6203 = vmatprep.subr.bf16.mxu0 0
          %6204 = vmatpush1.bf16.msra.mxu0 0
          %6205 = vmatprep.mubr.bf16.mxu0 0
          %6206 = vmatmul.mubr.bf16.gmra.mrb[0].mxu0 %v6101
          %v6207 = vpop.f32.mrb[0].mxu0
          %v6208 = vadd.f32 %v6123, %v6207
          %v6209 = vpop.f32.mrb[0].mxu0
          %v6210 = vpop.f32.mrb[0].mxu0
          %v6211 = vpop.f32.mrb[0].mxu0
          %6212 = vdwg.mxu0
          %v6213 = vmax.f32 %v6208, 0.0
          %v6214 = vpack.c.bf16 %v6213, %v6213
          %v6215 = vld [vmem:[%s11] sm:$0xf]
          %v6216 = vld [vmem:[%s11 + $0x4] sm:$0xf]
          %v6217 = vld [vmem:[%s11 + $0x8] sm:$0xf]
          %v6218 = vld [vmem:[%s11 + $0xc] sm:$0xf]
          %v6219 = vld [vmem:[%s11 + $0x10] sm:$0xf]
          %v6220 = vld [vmem:[%s11 + $0x14] sm:$0xf]
          %v6221 = vld [vmem:[%s11 + $0x18] sm:$0xf]
          %v6222 = vld [vmem:[%s11 + $0x1c] sm:$0xf]
          %v6223 = vld [vmem:[%s12] sm:$0x1]
          %v6225 = vlaneseq
          %v6226 = vshrl.u32 %v6225, 7
          %v6227 = vsub.s32 0, %v6226
          %v6228 = vrot.slane %v6223, %v6227
          %v6238 = vunpack.c.l.b16 %v6215
          %v6239 = vunpack.c.l.b16 %v6216
          %v6240 = vunpack.c.l.b16 %v6217
          %v6241 = vunpack.c.l.b16 %v6218
          %v6242 = vunpack.c.l.b16 %v6219
          %v6243 = vunpack.c.l.b16 %v6220
          %v6244 = vunpack.c.l.b16 %v6221
          %v6245 = vunpack.c.l.b16 %v6222
          %v6246 = vpack.c.b16 %v6239, %v6238
          %v6247 = vpack.c.b16 %v6241, %v6240
          %v6248 = vpack.c.b16 %v6243, %v6242
          %v6249 = vpack.c.b16 %v6245, %v6244
          %v6255 = vsel %vm3812, %v6214, 0
          %6257 = vmatprep.subr.bf16.mxu0 0
          %6258 = vmatpush1.bf16.msra.mxu0 %v6246
          %6259 = vmatprep.subr.bf16.mxu0 0
          %6260 = vmatpush1.bf16.msra.mxu0 %v6247
          %6261 = vmatprep.subr.bf16.mxu0 0
          %6262 = vmatpush1.bf16.msra.mxu0 %v6248
          %6263 = vmatprep.subr.bf16.mxu0 0
          %6264 = vmatpush1.bf16.msra.mxu0 %v6249
          %6265 = vmatprep.subr.bf16.mxu0 0
          %6266 = vmatpush1.bf16.msra.mxu0 0
          %6267 = vmatprep.subr.bf16.mxu0 0
          %6268 = vmatpush1.bf16.msra.mxu0 0
          %6269 = vmatprep.subr.bf16.mxu0 0
          %6270 = vmatpush1.bf16.msra.mxu0 0
          %6271 = vmatprep.subr.bf16.mxu0 0
          %6272 = vmatpush1.bf16.msra.mxu0 0
          %6273 = vmatprep.subr.bf16.mxu0 0
          %6274 = vmatpush1.bf16.msra.mxu0 0
          %6275 = vmatprep.subr.bf16.mxu0 0
          %6276 = vmatpush1.bf16.msra.mxu0 0
          %6277 = vmatprep.subr.bf16.mxu0 0
          %6278 = vmatpush1.bf16.msra.mxu0 0
          %6279 = vmatprep.subr.bf16.mxu0 0
          %6280 = vmatpush1.bf16.msra.mxu0 0
          %6281 = vmatprep.subr.bf16.mxu0 0
          %6282 = vmatpush1.bf16.msra.mxu0 0
          %6283 = vmatprep.subr.bf16.mxu0 0
          %6284 = vmatpush1.bf16.msra.mxu0 0
          %6285 = vmatprep.subr.bf16.mxu0 0
          %6286 = vmatpush1.bf16.msra.mxu0 0
          %6287 = vmatprep.subr.bf16.mxu0 0
          %6288 = vmatpush1.bf16.msra.mxu0 0
          %6289 = vmatprep.mubr.bf16.mxu0 0
          %6290 = vmatmul.mubr.bf16.gmra.mrb[0].mxu0 %v6255
          %v6291 = vpop.f32.mrb[0].mxu0
          %v6292 = vadd.f32 %v6228, %v6291
          %v6293 = vpop.f32.mrb[0].mxu0
          %v6294 = vpop.f32.mrb[0].mxu0
          %v6295 = vpop.f32.mrb[0].mxu0
          %6296 = vdwg.mxu0
          %6297 = vst [vmem:[%s998] sm:$0xff] %v6292
        $region118: #{tpu_custom_call.1} parent=105 // pred_fallthru
          _
        %s6298 = sand.u32 %s327, 1
        %s6299 = scalar_lea.sflag [#allocation5], %s6298
        %s6300 = sand.u32 %s327, 1
        %s6301 = smul.addr %s6300, 8
        %s6302 = scalar_lea.vmem [#allocation4], %s6301
        // Predicated region
        $region119: #{tpu_custom_call.1} parent=105 // pred_check
          %p6303 = pneg %p337
        $region120: #{tpu_custom_call.1} parent=105 // pred_check_branch
          %6305 = sbr.rel (%p6303) target = $region122
        $region121: #{tpu_custom_call.1} parent=105 // pred_region
          %s6307 = ssub.s32 128, 128
          %6308 = vsyncadd %s6299, %s6307
          %s6309 = smul.addr %s31, 128
          %s6310 = scalar_lea.hbm %s13, %s6309
          %s6312 = sshll.u32 %s6302, 4
          %s6313 = int_to_ptr.vmem [resolvable:$true] %s6312
          %6315 = dma.vmem_to_hbm [thread:$0]  %s6313, 128, %s6310, %s6299
        $region122: #{tpu_custom_call.1} parent=105 // pred_fallthru
          _
      $region106: #{tpu_custom_call.1} parent=5 // pred_fallthru
        _
      %p6316 = scmp.le.s32.totalorder 2, %s22
      // Predicated region
      $region123: #{tpu_custom_call.1} parent=5 // pred_check
        %p6317 = pneg %p6316
      $region124: #{tpu_custom_call.1} parent=5 // pred_check_branch
        %6319 = sbr.rel (%p6317) target = $region126
      $region125: #{tpu_custom_call.1} parent=5 // pred_region
        %s6320 = ssub.s32 %s22, 2
        // Predicated region
        $region127: #{tpu_custom_call.1} parent=125 // pred_check
          %p6321 = pneg %p343
        $region128: #{tpu_custom_call.1} parent=125 // pred_check_branch
          %6323 = sbr.rel (%p6321) target = $region130
        $region129: #{tpu_custom_call.1} parent=125 // pred_region
          %s6324 = sand.u32 %s328, 1
          %s6325 = scalar_lea.sflag [#allocation5], %s6324
          %s6326 = sand.u32 %s328, 1
          %s6327 = smul.addr %s6326, 8
          %s6328 = scalar_lea.vmem [#allocation4], %s6327
          %6329 = dma.done %s6325, 128
        $region130: #{tpu_custom_call.1} parent=125 // pred_fallthru
          _
      $region126: #{tpu_custom_call.1} parent=5 // pred_fallthru
        _
    $region6: #{tpu_custom_call.1} parent=1 // loop_footer
      %s26 = sadd.s32 1, %s22
    $region7: #{tpu_custom_call.1} parent=1 // loop_footer_branch
      %21 = sbr.rel target = $region3
    $region8: #{tpu_custom_call.1} parent=1 // loop_exit
      _
    %6330 = vsyncpa [#allocation5], 1
    %s6331 = scalar_lea.sflag [#allocation5], 1
    %6332 = vsyncpa %s6331, 1

</llo_original>
